<compile_context>
chip_gen: v7x
topology: tpu7x:2x2x1
jax: 0.10.0
libtpu: 0.0.40
codegen_flags: <defaults>
</compile_context>

<pallas_src>
import math

import jax
import jax.numpy as jnp
import numpy as np
from jax.experimental import pallas as pl
from jax.experimental.pallas import tpu as pltpu

# ---------------- small config (consistent with the module's forward) ----------------
B = 2            # batch
N = 16           # input sequence length
E = 32           # embedding_dim
D = 64           # dim
HEADS = 4
DIM_HEAD = 16
INNER = HEADS * DIM_HEAD          # 64
L = 8            # num_queries
OUT = 64         # output_dim
FF_MULT = 2
FF_INNER = D * FF_MULT            # 128
DEPTH = 2
EPS = 1e-5
KV = N + L                        # 24

# Row layout of the packed (VEC_ROWS, D) "vecs" operand.
ROW_PIN_B = 0
ROW_POUT_B = 1
ROW_NOUT_W = 2
ROW_NOUT_B = 3
ROW_LAYER0 = 4                    # then 6 rows per layer: n1w,n1b,n2w,n2b,ff_lnw,ff_lnb
VEC_ROWS = ROW_LAYER0 + 6 * DEPTH  # 16


# ---------------------------------- kernel helpers ----------------------------------
def _layernorm(x, w, b):
    mu = jnp.mean(x, axis=-1, keepdims=True)
    var = jnp.mean((x - mu) ** 2, axis=-1, keepdims=True)
    return (x - mu) * jax.lax.rsqrt(var + EPS) * w + b


def _gelu_exact(x):
    # PyTorch nn.GELU() default = exact erf formulation.
    return 0.5 * x * (1.0 + jax.lax.erf(x / jnp.sqrt(2.0).astype(x.dtype)))


def _softmax(s):
    m = jnp.max(s, axis=-1, keepdims=True)
    e = jnp.exp(s - m)
    return e * pl.reciprocal(jnp.sum(e, axis=-1, keepdims=True), approx=True)


# ----------------------------------- fused kernel ------------------------------------
def _resampler_kernel(
    x_ref, lat_ref,
    pin_w_ref, vecs_ref,
    wq_ref, wkv_ref, wo_ref,
    ffw1_ref, ffw2_ref,
    pout_w_ref,
    o_ref,
):
    x = x_ref[0]            # (N, E)
    lat = lat_ref[0]        # (L, D)  -- same initial latents for every batch element

    # proj_in
    pin_b = vecs_ref[ROW_PIN_B:ROW_PIN_B + 1, :]
    h = jnp.dot(x, pin_w_ref[...], preferred_element_type=jnp.float32) + pin_b   # (N, D)

    for d in range(DEPTH):                                   # static unroll (DEPTH=2)
        base = ROW_LAYER0 + 6 * d
        n1w = vecs_ref[base + 0:base + 1, :]
        n1b = vecs_ref[base + 1:base + 2, :]
        n2w = vecs_ref[base + 2:base + 3, :]
        n2b = vecs_ref[base + 3:base + 4, :]
        fflnw = vecs_ref[base + 4:base + 5, :]
        fflnb = vecs_ref[base + 5:base + 6, :]

        # ---------------- PerceiverAttention (pre-norm) + residual ----------------
        xn = _layernorm(h, n1w, n1b)                         # (N, D)
        ln = _layernorm(lat, n2w, n2b)                       # (L, D)
        # 8-aligned sublane concat: pure vreg placement, no scratch round trip.
        kv = jnp.concatenate([xn, ln], axis=0)               # (KV, D)

        # Lane-dense fused projections (scale 1/sqrt(dh) pre-folded into Wq).
        q = jnp.dot(ln, wq_ref[d], preferred_element_type=jnp.float32)      # (L, INNER)
        kvp = jnp.dot(kv, wkv_ref[d], preferred_element_type=jnp.float32)   # (KV, 2*INNER)
        k = kvp[:, :INNER]                                   # (KV, INNER)
        v = kvp[:, INNER:]                                   # (KV, INNER)

        o_heads = []
        for hd in range(HEADS):                              # static unroll over heads
            lo = hd * DIM_HEAD
            hi = lo + DIM_HEAD
            qh = q[:, lo:hi]                                 # (L, dh)
            kh = k[:, lo:hi]                                 # (KV, dh)
            vh = v[:, lo:hi]                                 # (KV, dh)
            # q @ k^T via dot_general contracting dh (no explicit transpose).
            s = jax.lax.dot_general(
                qh, kh, (((1,), (1,)), ((), ())),
                preferred_element_type=jnp.float32)          # (L, KV)
            p = _softmax(s)
            o_heads.append(jnp.dot(p, vh, preferred_element_type=jnp.float32))  # (L, dh)

        o_all = jnp.concatenate(o_heads, axis=-1)            # (L, INNER)
        lat = jnp.dot(o_all, wo_ref[d], preferred_element_type=jnp.float32) + lat

        # ---------------------- FeedForward (pre-norm) + residual ------------------
        f = _layernorm(lat, fflnw, fflnb)
        f = jnp.dot(f, ffw1_ref[d], preferred_element_type=jnp.float32)     # (L, FF_INNER)
        f = _gelu_exact(f)
        lat = jnp.dot(f, ffw2_ref[d], preferred_element_type=jnp.float32) + lat

    # proj_out + norm_out
    pout_b = vecs_ref[ROW_POUT_B:ROW_POUT_B + 1, :]
    nout_w = vecs_ref[ROW_NOUT_W:ROW_NOUT_W + 1, :]
    nout_b = vecs_ref[ROW_NOUT_B:ROW_NOUT_B + 1, :]
    out = jnp.dot(lat, pout_w_ref[...], preferred_element_type=jnp.float32) + pout_b
    o_ref[0] = _layernorm(out, nout_w, nout_b)


# ------------------------------------ wrapper -----------------------------------------
def _const_spec(shape):
    nd = len(shape)
    return pl.BlockSpec(shape, lambda i, _nd=nd: (0,) * _nd)


def resampler_forward(x, params):
    # TODO(synk): pos_emb and to_latents_from_mean_pooled_seq branches are disabled by
    # the default config (apply_pos_emb=False, num_latents_mean_pooled=0) and omitted.
    Bb, T, _ = x.shape
    layers = params["layers"]

    # ---- one-time layout plumbing in plain JAX (lane-dense weights, scale folded) ----
    net_scale = 1.0 / math.sqrt(DIM_HEAD)   # (q*s) @ (k*s).T == (q @ k.T) / sqrt(dh)

    wq = jnp.stack([lyr["wq"] * net_scale for lyr in layers], axis=0)        # (DEPTH, D, INNER)
    wkv = jnp.stack(
        [jnp.concatenate([lyr["wk"], lyr["wv"]], axis=-1) for lyr in layers],
        axis=0)                                                              # (DEPTH, D, 2*INNER)
    wo = jnp.stack([lyr["wo"] for lyr in layers], axis=0)                    # (DEPTH, INNER, D)
    ff_w1 = jnp.stack([lyr["ff_w1"] for lyr in layers], axis=0)              # (DEPTH, D, FF_INNER)
    ff_w2 = jnp.stack([lyr["ff_w2"] for lyr in layers], axis=0)              # (DEPTH, FF_INNER, D)

    # Pack all tiny row-vector parameters into a single (VEC_ROWS, D) operand.
    rows = [params["proj_in_b"], params["proj_out_b"],
            params["norm_out_w"], params["norm_out_b"]]
    for lyr in layers:
        rows += [lyr["n1w"], lyr["n1b"], lyr["n2w"], lyr["n2b"],
                 lyr["ff_lnw"], lyr["ff_lnb"]]
    vecs = jnp.concatenate(rows, axis=0)                                     # (VEC_ROWS, D)

    cost = pl.CostEstimate(flops=3_600_000, transcendentals=8_000,
                           bytes_accessed=300_000)

    return pl.pallas_call(
        _resampler_kernel,
        out_shape=jax.ShapeDtypeStruct((Bb, L, OUT), jnp.float32),
        grid=(Bb,),
        in_specs=[
            pl.BlockSpec((1, T, E), lambda i: (i, 0, 0)),    # x (per-batch block)
            _const_spec((1, L, D)),                          # latents parameter
            _const_spec((E, D)),                             # proj_in weight
            _const_spec((VEC_ROWS, D)),                      # packed LN/bias rows
            _const_spec((DEPTH, D, INNER)),                  # Wq (scaled)
            _const_spec((DEPTH, D, 2 * INNER)),              # [Wk | Wv]
            _const_spec((DEPTH, INNER, D)),                  # Wout
            _const_spec((DEPTH, D, FF_INNER)),               # FF W1
            _const_spec((DEPTH, FF_INNER, D)),               # FF W2
            _const_spec((D, OUT)),                           # proj_out weight
        ],
        out_specs=pl.BlockSpec((1, L, OUT), lambda i: (i, 0, 0)),
        compiler_params=pltpu.CompilerParams(
            dimension_semantics=("parallel",),
            vmem_limit_bytes=8 * 1024 * 1024,
        ),
        cost_estimate=cost,
    )(
        x, params["latents"],
        params["proj_in_w"], vecs,
        wq, wkv, wo,
        ff_w1, ff_w2,
        params["proj_out_w"],
    )


# ----------------------------- pure-JAX reference (check) ----------------------------
def _ref_ln(t, w, b):
    mu = jnp.mean(t, axis=-1, keepdims=True)
    var = jnp.mean((t - mu) ** 2, axis=-1, keepdims=True)
    return (t - mu) * jax.lax.rsqrt(var + EPS) * w + b


def ref_forward(x, params):
    Bb = x.shape[0]
    latents = jnp.tile(params["latents"], (Bb, 1, 1))
    h = x @ params["proj_in_w"] + params["proj_in_b"]
    for layer in params["layers"]:
        xn = _ref_ln(h, layer["n1w"], layer["n1b"])
        ln = _ref_ln(latents, layer["n2w"], layer["n2b"])
        q = ln @ layer["wq"]
        kv_in = jnp.concatenate([xn, ln], axis=1)
        k = kv_in @ layer["wk"]
        v = kv_in @ layer["wv"]

        def split_heads(t):
            b_, t_, _ = t.shape
            return t.reshape(b_, t_, HEADS, DIM_HEAD).transpose(0, 2, 1, 3)

        qh, kh, vh = split_heads(q), split_heads(k), split_heads(v)
        scale = 1.0 / math.sqrt(math.sqrt(DIM_HEAD))
        w = jnp.einsum("bhld,bhkd->bhlk", qh * scale, kh * scale)
        w = jax.nn.softmax(w.astype(jnp.float32), axis=-1)
        o = jnp.einsum("bhlk,bhkd->bhld", w, vh)
        o = o.transpose(0, 2, 1, 3).reshape(Bb, latents.shape[1], INNER)
        latents = o @ layer["wo"] + latents

        f = _ref_ln(latents, layer["ff_lnw"], layer["ff_lnb"])
        f = f @ layer["ff_w1"]
        f = 0.5 * f * (1.0 + jax.lax.erf(f / jnp.sqrt(2.0)))
        latents = f @ layer["ff_w2"] + latents

    out = latents @ params["proj_out_w"] + params["proj_out_b"]
    return _ref_ln(out, params["norm_out_w"], params["norm_out_b"])


# ------------------------------------ param init --------------------------------------
def init_params(key):
    keys = iter(jax.random.split(key, 64))

    def nrm(shape, scale=0.05):
        return scale * jax.random.normal(next(keys), shape, dtype=jnp.float32)

    params = {
        "latents": jax.random.normal(next(keys), (1, L, D), dtype=jnp.float32)
        / math.sqrt(D),
        "proj_in_w": nrm((E, D)),
        "proj_in_b": nrm((1, D)),
        "proj_out_w": nrm((D, OUT)),
        "proj_out_b": nrm((1, OUT)),
        "norm_out_w": 1.0 + nrm((1, OUT)),
        "norm_out_b": nrm((1, OUT)),
        "layers": [],
    }
    for _ in range(DEPTH):
        params["layers"].append(
            {
                "n1w": 1.0 + nrm((1, D)), "n1b": nrm((1, D)),
                "n2w": 1.0 + nrm((1, D)), "n2b": nrm((1, D)),
                "wq": nrm((D, INNER)),
                "wk": nrm((D, INNER)),
                "wv": nrm((D, INNER)),
                "wo": nrm((INNER, D)),
                "ff_lnw": 1.0 + nrm((1, D)), "ff_lnb": nrm((1, D)),
                "ff_w1": nrm((D, FF_INNER)),
                "ff_w2": nrm((FF_INNER, D)),
            }
        )
    return params


# ---------------------------------------- main ----------------------------------------
if __name__ == "__main__":
    key = jax.random.PRNGKey(0)
    pkey, xkey = jax.random.split(key)
    params = init_params(pkey)
    x = jax.random.normal(xkey, (B, N, E), dtype=jnp.float32)

    out = resampler_forward(x, params)
    out = jax.block_until_ready(out)

    ref = jax.block_until_ready(ref_forward(x, params))
    np.testing.assert_allclose(np.asarray(out), np.asarray(ref), rtol=2e-3, atol=2e-3)

    assert out.shape == (B, L, OUT)
    print("KERNEL_OK")
</pallas_src>

<mosaic_0001>
module attributes {stable_mosaic.version = 11 : i64} {
  func.func @_resampler_kernel(%arg0: i32, %arg1: memref<1x16x32xf32, #tpu.memory_space<vmem>>, %arg2: memref<1x8x64xf32, #tpu.memory_space<vmem>>, %arg3: memref<32x64xf32, #tpu.memory_space<vmem>>, %arg4: memref<16x64xf32, #tpu.memory_space<vmem>>, %arg5: memref<2x64x64xf32, #tpu.memory_space<vmem>>, %arg6: memref<2x64x128xf32, #tpu.memory_space<vmem>>, %arg7: memref<2x64x64xf32, #tpu.memory_space<vmem>>, %arg8: memref<2x64x128xf32, #tpu.memory_space<vmem>>, %arg9: memref<2x128x64xf32, #tpu.memory_space<vmem>>, %arg10: memref<64x64xf32, #tpu.memory_space<vmem>>, %arg11: memref<1x8x64xf32, #tpu.memory_space<vmem>>) attributes {dimension_semantics = [#tpu.dimension_semantics<parallel>], iteration_bounds = array<i64: 2>, scalar_prefetch = 0 : i64, scratch_operands = 0 : i64, tpu.core_type = #tpu.core_type<tc>, window_params = [{transform_indices = @transform_0, window_bounds = array<i64: 1, 16, 32>}, {pipeline_mode = #tpu.pipeline_mode<synchronous>, transform_indices = @transform_1, window_bounds = array<i64: 1, 8, 64>}, {pipeline_mode = #tpu.pipeline_mode<synchronous>, transform_indices = @transform_2, window_bounds = array<i64: 32, 64>}, {pipeline_mode = #tpu.pipeline_mode<synchronous>, transform_indices = @transform_3, window_bounds = array<i64: 16, 64>}, {pipeline_mode = #tpu.pipeline_mode<synchronous>, transform_indices = @transform_4, window_bounds = array<i64: 2, 64, 64>}, {pipeline_mode = #tpu.pipeline_mode<synchronous>, transform_indices = @transform_5, window_bounds = array<i64: 2, 64, 128>}, {pipeline_mode = #tpu.pipeline_mode<synchronous>, transform_indices = @transform_6, window_bounds = array<i64: 2, 64, 64>}, {pipeline_mode = #tpu.pipeline_mode<synchronous>, transform_indices = @transform_7, window_bounds = array<i64: 2, 64, 128>}, {pipeline_mode = #tpu.pipeline_mode<synchronous>, transform_indices = @transform_8, window_bounds = array<i64: 2, 128, 64>}, {pipeline_mode = #tpu.pipeline_mode<synchronous>, transform_indices = @transform_9, window_bounds = array<i64: 64, 64>}, {transform_indices = @transform_10, window_bounds = array<i64: 1, 8, 64>}]} {
    %c0 = arith.constant 0 : index
    %c0_0 = arith.constant 0 : index
    %c0_1 = arith.constant 0 : index
    %0 = vector.load %arg1[%c0, %c0_0, %c0_1] : memref<1x16x32xf32, #tpu.memory_space<vmem>>, vector<1x16x32xf32>
    %1 = vector.shape_cast %0 : vector<1x16x32xf32> to vector<16x32xf32>
    %c0_2 = arith.constant 0 : index
    %c0_3 = arith.constant 0 : index
    %c0_4 = arith.constant 0 : index
    %2 = vector.load %arg2[%c0_2, %c0_3, %c0_4] : memref<1x8x64xf32, #tpu.memory_space<vmem>>, vector<1x8x64xf32>
    %3 = vector.shape_cast %2 : vector<1x8x64xf32> to vector<8x64xf32>
    %c0_5 = arith.constant 0 : index
    %c0_6 = arith.constant 0 : index
    %4 = vector.load %arg4[%c0_5, %c0_6] : memref<16x64xf32, #tpu.memory_space<vmem>>, vector<1x64xf32>
    %c0_7 = arith.constant 0 : index
    %c0_8 = arith.constant 0 : index
    %5 = vector.load %arg3[%c0_7, %c0_8] : memref<32x64xf32, #tpu.memory_space<vmem>>, vector<32x64xf32>
    %cst = arith.constant dense<0.000000e+00> : vector<16x64xf32>
    %6 = tpu.matmul %1, %5, %cst {dimension_numbers = #tpu.dot_dimension_numbers<[1], [0], [0], [1], [0, 0, 1, 1], [], []>} : vector<16x32xf32>, vector<32x64xf32>, vector<16x64xf32> -> vector<16x64xf32>
    %7 = vector.broadcast %4 : vector<1x64xf32> to vector<16x64xf32>
    %8 = arith.addf %6, %7 : vector<16x64xf32>
    %c4 = arith.constant 4 : index
    %c0_9 = arith.constant 0 : index
    %9 = vector.load %arg4[%c4, %c0_9] : memref<16x64xf32, #tpu.memory_space<vmem>>, vector<1x64xf32>
    %c5 = arith.constant 5 : index
    %c0_10 = arith.constant 0 : index
    %10 = vector.load %arg4[%c5, %c0_10] : memref<16x64xf32, #tpu.memory_space<vmem>>, vector<1x64xf32>
    %c6 = arith.constant 6 : index
    %c0_11 = arith.constant 0 : index
    %11 = vector.load %arg4[%c6, %c0_11] : memref<16x64xf32, #tpu.memory_space<vmem>>, vector<1x64xf32>
    %c7 = arith.constant 7 : index
    %c0_12 = arith.constant 0 : index
    %12 = vector.load %arg4[%c7, %c0_12] : memref<16x64xf32, #tpu.memory_space<vmem>>, vector<1x64xf32>
    %c8 = arith.constant 8 : index
    %c0_13 = arith.constant 0 : index
    %13 = vector.load %arg4[%c8, %c0_13] : memref<16x64xf32, #tpu.memory_space<vmem>>, vector<1x64xf32>
    %c9 = arith.constant 9 : index
    %c0_14 = arith.constant 0 : index
    %14 = vector.load %arg4[%c9, %c0_14] : memref<16x64xf32, #tpu.memory_space<vmem>>, vector<1x64xf32>
    %cst_15 = arith.constant dense<0.000000e+00> : vector<16xf32>
    %15 = vector.multi_reduction <add>, %8, %cst_15 [1] : vector<16x64xf32> to vector<16xf32>
    %16 = vector.shape_cast %15 : vector<16xf32> to vector<16x1xf32>
    %cst_16 = arith.constant 6.400000e+01 : f32
    %17 = vector.broadcast %cst_16 : f32 to vector<16x1xf32>
    %18 = arith.divf %16, %17 : vector<16x1xf32>
    %19 = vector.broadcast %18 : vector<16x1xf32> to vector<16x64xf32>
    %20 = arith.subf %8, %19 : vector<16x64xf32>
    %21 = arith.mulf %20, %20 : vector<16x64xf32>
    %cst_17 = arith.constant dense<0.000000e+00> : vector<16xf32>
    %22 = vector.multi_reduction <add>, %21, %cst_17 [1] : vector<16x64xf32> to vector<16xf32>
    %23 = vector.shape_cast %22 : vector<16xf32> to vector<16x1xf32>
    %cst_18 = arith.constant 6.400000e+01 : f32
    %24 = vector.broadcast %cst_18 : f32 to vector<16x1xf32>
    %25 = arith.divf %23, %24 : vector<16x1xf32>
    %26 = vector.broadcast %18 : vector<16x1xf32> to vector<16x64xf32>
    %27 = arith.subf %8, %26 : vector<16x64xf32>
    %cst_19 = arith.constant 9.99999974E-6 : f32
    %28 = vector.broadcast %cst_19 : f32 to vector<16x1xf32>
    %29 = arith.addf %25, %28 : vector<16x1xf32>
    %30 = math.rsqrt %29 : vector<16x1xf32>
    %31 = vector.broadcast %30 : vector<16x1xf32> to vector<16x64xf32>
    %32 = arith.mulf %27, %31 : vector<16x64xf32>
    %33 = vector.broadcast %9 : vector<1x64xf32> to vector<16x64xf32>
    %34 = arith.mulf %32, %33 : vector<16x64xf32>
    %35 = vector.broadcast %10 : vector<1x64xf32> to vector<16x64xf32>
    %36 = arith.addf %34, %35 : vector<16x64xf32>
    %cst_20 = arith.constant dense<0.000000e+00> : vector<8xf32>
    %37 = vector.multi_reduction <add>, %3, %cst_20 [1] : vector<8x64xf32> to vector<8xf32>
    %38 = vector.shape_cast %37 : vector<8xf32> to vector<8x1xf32>
    %cst_21 = arith.constant 6.400000e+01 : f32
    %39 = vector.broadcast %cst_21 : f32 to vector<8x1xf32>
    %40 = arith.divf %38, %39 : vector<8x1xf32>
    %41 = vector.broadcast %40 : vector<8x1xf32> to vector<8x64xf32>
    %42 = arith.subf %3, %41 : vector<8x64xf32>
    %43 = arith.mulf %42, %42 : vector<8x64xf32>
    %cst_22 = arith.constant dense<0.000000e+00> : vector<8xf32>
    %44 = vector.multi_reduction <add>, %43, %cst_22 [1] : vector<8x64xf32> to vector<8xf32>
    %45 = vector.shape_cast %44 : vector<8xf32> to vector<8x1xf32>
    %cst_23 = arith.constant 6.400000e+01 : f32
    %46 = vector.broadcast %cst_23 : f32 to vector<8x1xf32>
    %47 = arith.divf %45, %46 : vector<8x1xf32>
    %48 = vector.broadcast %40 : vector<8x1xf32> to vector<8x64xf32>
    %49 = arith.subf %3, %48 : vector<8x64xf32>
    %cst_24 = arith.constant 9.99999974E-6 : f32
    %50 = vector.broadcast %cst_24 : f32 to vector<8x1xf32>
    %51 = arith.addf %47, %50 : vector<8x1xf32>
    %52 = math.rsqrt %51 : vector<8x1xf32>
    %53 = vector.broadcast %52 : vector<8x1xf32> to vector<8x64xf32>
    %54 = arith.mulf %49, %53 : vector<8x64xf32>
    %55 = vector.broadcast %11 : vector<1x64xf32> to vector<8x64xf32>
    %56 = arith.mulf %54, %55 : vector<8x64xf32>
    %57 = vector.broadcast %12 : vector<1x64xf32> to vector<8x64xf32>
    %58 = arith.addf %56, %57 : vector<8x64xf32>
    %59 = tpu.concatenate %36, %58 in 0 : vector<16x64xf32>, vector<8x64xf32> -> vector<24x64xf32>
    %c0_25 = arith.constant 0 : index
    %c0_26 = arith.constant 0 : index
    %c0_27 = arith.constant 0 : index
    %60 = vector.load %arg5[%c0_25, %c0_26, %c0_27] : memref<2x64x64xf32, #tpu.memory_space<vmem>>, vector<1x64x64xf32>
    %61 = vector.shape_cast %60 : vector<1x64x64xf32> to vector<64x64xf32>
    %cst_28 = arith.constant dense<0.000000e+00> : vector<8x64xf32>
    %62 = tpu.matmul %58, %61, %cst_28 {dimension_numbers = #tpu.dot_dimension_numbers<[1], [0], [0], [1], [0, 0, 1, 1], [], []>} : vector<8x64xf32>, vector<64x64xf32>, vector<8x64xf32> -> vector<8x64xf32>
    %c0_29 = arith.constant 0 : index
    %c0_30 = arith.constant 0 : index
    %c0_31 = arith.constant 0 : index
    %63 = vector.load %arg6[%c0_29, %c0_30, %c0_31] : memref<2x64x128xf32, #tpu.memory_space<vmem>>, vector<1x64x128xf32>
    %64 = vector.shape_cast %63 : vector<1x64x128xf32> to vector<64x128xf32>
    %cst_32 = arith.constant dense<0.000000e+00> : vector<24x128xf32>
    %65 = tpu.matmul %59, %64, %cst_32 {dimension_numbers = #tpu.dot_dimension_numbers<[1], [0], [0], [1], [0, 0, 1, 1], [], []>} : vector<24x64xf32>, vector<64x128xf32>, vector<24x128xf32> -> vector<24x128xf32>
    %66 = vector.extract_strided_slice %65 {offsets = [0, 0], sizes = [24, 64], strides = [1, 1]} : vector<24x128xf32> to vector<24x64xf32>
    %67 = vector.extract_strided_slice %65 {offsets = [0, 64], sizes = [24, 64], strides = [1, 1]} : vector<24x128xf32> to vector<24x64xf32>
    %68 = vector.extract_strided_slice %62 {offsets = [0, 0], sizes = [8, 16], strides = [1, 1]} : vector<8x64xf32> to vector<8x16xf32>
    %69 = vector.extract_strided_slice %66 {offsets = [0, 0], sizes = [24, 16], strides = [1, 1]} : vector<24x64xf32> to vector<24x16xf32>
    %70 = vector.extract_strided_slice %67 {offsets = [0, 0], sizes = [24, 16], strides = [1, 1]} : vector<24x64xf32> to vector<24x16xf32>
    %cst_33 = arith.constant dense<0.000000e+00> : vector<8x24xf32>
    %71 = tpu.matmul %68, %69, %cst_33 {dimension_numbers = #tpu.dot_dimension_numbers<[1], [1], [0], [0], [0, 0, 1, 0], [], []>} : vector<8x16xf32>, vector<24x16xf32>, vector<8x24xf32> -> vector<8x24xf32>
    %cst_34 = arith.constant dense<0xFF800000> : vector<8xf32>
    %72 = vector.multi_reduction <maximumf>, %71, %cst_34 [1] : vector<8x24xf32> to vector<8xf32>
    %73 = vector.shape_cast %72 : vector<8xf32> to vector<8x1xf32>
    %74 = vector.broadcast %73 : vector<8x1xf32> to vector<8x24xf32>
    %75 = arith.subf %71, %74 : vector<8x24xf32>
    %76 = math.exp %75 : vector<8x24xf32>
    %cst_35 = arith.constant dense<0.000000e+00> : vector<8xf32>
    %77 = vector.multi_reduction <add>, %76, %cst_35 [1] : vector<8x24xf32> to vector<8xf32>
    %78 = vector.shape_cast %77 : vector<8xf32> to vector<8x1xf32>
    %79 = tpu.reciprocal %78 {approx = true} : vector<8x1xf32> -> vector<8x1xf32>
    %80 = vector.broadcast %79 : vector<8x1xf32> to vector<8x24xf32>
    %81 = arith.mulf %76, %80 : vector<8x24xf32>
    %cst_36 = arith.constant dense<0.000000e+00> : vector<8x16xf32>
    %82 = tpu.matmul %81, %70, %cst_36 {dimension_numbers = #tpu.dot_dimension_numbers<[1], [0], [0], [1], [0, 0, 1, 1], [], []>} : vector<8x24xf32>, vector<24x16xf32>, vector<8x16xf32> -> vector<8x16xf32>
    %83 = vector.extract_strided_slice %62 {offsets = [0, 16], sizes = [8, 16], strides = [1, 1]} : vector<8x64xf32> to vector<8x16xf32>
    %84 = vector.extract_strided_slice %66 {offsets = [0, 16], sizes = [24, 16], strides = [1, 1]} : vector<24x64xf32> to vector<24x16xf32>
    %85 = vector.extract_strided_slice %67 {offsets = [0, 16], sizes = [24, 16], strides = [1, 1]} : vector<24x64xf32> to vector<24x16xf32>
    %cst_37 = arith.constant dense<0.000000e+00> : vector<8x24xf32>
    %86 = tpu.matmul %83, %84, %cst_37 {dimension_numbers = #tpu.dot_dimension_numbers<[1], [1], [0], [0], [0, 0, 1, 0], [], []>} : vector<8x16xf32>, vector<24x16xf32>, vector<8x24xf32> -> vector<8x24xf32>
    %cst_38 = arith.constant dense<0xFF800000> : vector<8xf32>
    %87 = vector.multi_reduction <maximumf>, %86, %cst_38 [1] : vector<8x24xf32> to vector<8xf32>
    %88 = vector.shape_cast %87 : vector<8xf32> to vector<8x1xf32>
    %89 = vector.broadcast %88 : vector<8x1xf32> to vector<8x24xf32>
    %90 = arith.subf %86, %89 : vector<8x24xf32>
    %91 = math.exp %90 : vector<8x24xf32>
    %cst_39 = arith.constant dense<0.000000e+00> : vector<8xf32>
    %92 = vector.multi_reduction <add>, %91, %cst_39 [1] : vector<8x24xf32> to vector<8xf32>
    %93 = vector.shape_cast %92 : vector<8xf32> to vector<8x1xf32>
    %94 = tpu.reciprocal %93 {approx = true} : vector<8x1xf32> -> vector<8x1xf32>
    %95 = vector.broadcast %94 : vector<8x1xf32> to vector<8x24xf32>
    %96 = arith.mulf %91, %95 : vector<8x24xf32>
    %cst_40 = arith.constant dense<0.000000e+00> : vector<8x16xf32>
    %97 = tpu.matmul %96, %85, %cst_40 {dimension_numbers = #tpu.dot_dimension_numbers<[1], [0], [0], [1], [0, 0, 1, 1], [], []>} : vector<8x24xf32>, vector<24x16xf32>, vector<8x16xf32> -> vector<8x16xf32>
    %98 = vector.extract_strided_slice %62 {offsets = [0, 32], sizes = [8, 16], strides = [1, 1]} : vector<8x64xf32> to vector<8x16xf32>
    %99 = vector.extract_strided_slice %66 {offsets = [0, 32], sizes = [24, 16], strides = [1, 1]} : vector<24x64xf32> to vector<24x16xf32>
    %100 = vector.extract_strided_slice %67 {offsets = [0, 32], sizes = [24, 16], strides = [1, 1]} : vector<24x64xf32> to vector<24x16xf32>
    %cst_41 = arith.constant dense<0.000000e+00> : vector<8x24xf32>
    %101 = tpu.matmul %98, %99, %cst_41 {dimension_numbers = #tpu.dot_dimension_numbers<[1], [1], [0], [0], [0, 0, 1, 0], [], []>} : vector<8x16xf32>, vector<24x16xf32>, vector<8x24xf32> -> vector<8x24xf32>
    %cst_42 = arith.constant dense<0xFF800000> : vector<8xf32>
    %102 = vector.multi_reduction <maximumf>, %101, %cst_42 [1] : vector<8x24xf32> to vector<8xf32>
    %103 = vector.shape_cast %102 : vector<8xf32> to vector<8x1xf32>
    %104 = vector.broadcast %103 : vector<8x1xf32> to vector<8x24xf32>
    %105 = arith.subf %101, %104 : vector<8x24xf32>
    %106 = math.exp %105 : vector<8x24xf32>
    %cst_43 = arith.constant dense<0.000000e+00> : vector<8xf32>
    %107 = vector.multi_reduction <add>, %106, %cst_43 [1] : vector<8x24xf32> to vector<8xf32>
    %108 = vector.shape_cast %107 : vector<8xf32> to vector<8x1xf32>
    %109 = tpu.reciprocal %108 {approx = true} : vector<8x1xf32> -> vector<8x1xf32>
    %110 = vector.broadcast %109 : vector<8x1xf32> to vector<8x24xf32>
    %111 = arith.mulf %106, %110 : vector<8x24xf32>
    %cst_44 = arith.constant dense<0.000000e+00> : vector<8x16xf32>
    %112 = tpu.matmul %111, %100, %cst_44 {dimension_numbers = #tpu.dot_dimension_numbers<[1], [0], [0], [1], [0, 0, 1, 1], [], []>} : vector<8x24xf32>, vector<24x16xf32>, vector<8x16xf32> -> vector<8x16xf32>
    %113 = vector.extract_strided_slice %62 {offsets = [0, 48], sizes = [8, 16], strides = [1, 1]} : vector<8x64xf32> to vector<8x16xf32>
    %114 = vector.extract_strided_slice %66 {offsets = [0, 48], sizes = [24, 16], strides = [1, 1]} : vector<24x64xf32> to vector<24x16xf32>
    %115 = vector.extract_strided_slice %67 {offsets = [0, 48], sizes = [24, 16], strides = [1, 1]} : vector<24x64xf32> to vector<24x16xf32>
    %cst_45 = arith.constant dense<0.000000e+00> : vector<8x24xf32>
    %116 = tpu.matmul %113, %114, %cst_45 {dimension_numbers = #tpu.dot_dimension_numbers<[1], [1], [0], [0], [0, 0, 1, 0], [], []>} : vector<8x16xf32>, vector<24x16xf32>, vector<8x24xf32> -> vector<8x24xf32>
    %cst_46 = arith.constant dense<0xFF800000> : vector<8xf32>
    %117 = vector.multi_reduction <maximumf>, %116, %cst_46 [1] : vector<8x24xf32> to vector<8xf32>
    %118 = vector.shape_cast %117 : vector<8xf32> to vector<8x1xf32>
    %119 = vector.broadcast %118 : vector<8x1xf32> to vector<8x24xf32>
    %120 = arith.subf %116, %119 : vector<8x24xf32>
    %121 = math.exp %120 : vector<8x24xf32>
    %cst_47 = arith.constant dense<0.000000e+00> : vector<8xf32>
    %122 = vector.multi_reduction <add>, %121, %cst_47 [1] : vector<8x24xf32> to vector<8xf32>
    %123 = vector.shape_cast %122 : vector<8xf32> to vector<8x1xf32>
    %124 = tpu.reciprocal %123 {approx = true} : vector<8x1xf32> -> vector<8x1xf32>
    %125 = vector.broadcast %124 : vector<8x1xf32> to vector<8x24xf32>
    %126 = arith.mulf %121, %125 : vector<8x24xf32>
    %cst_48 = arith.constant dense<0.000000e+00> : vector<8x16xf32>
    %127 = tpu.matmul %126, %115, %cst_48 {dimension_numbers = #tpu.dot_dimension_numbers<[1], [0], [0], [1], [0, 0, 1, 1], [], []>} : vector<8x24xf32>, vector<24x16xf32>, vector<8x16xf32> -> vector<8x16xf32>
    %128 = tpu.concatenate %82, %97, %112, %127 in 1 : vector<8x16xf32>, vector<8x16xf32>, vector<8x16xf32>, vector<8x16xf32> -> vector<8x64xf32>
    %c0_49 = arith.constant 0 : index
    %c0_50 = arith.constant 0 : index
    %c0_51 = arith.constant 0 : index
    %129 = vector.load %arg7[%c0_49, %c0_50, %c0_51] : memref<2x64x64xf32, #tpu.memory_space<vmem>>, vector<1x64x64xf32>
    %130 = vector.shape_cast %129 : vector<1x64x64xf32> to vector<64x64xf32>
    %cst_52 = arith.constant dense<0.000000e+00> : vector<8x64xf32>
    %131 = tpu.matmul %128, %130, %cst_52 {dimension_numbers = #tpu.dot_dimension_numbers<[1], [0], [0], [1], [0, 0, 1, 1], [], []>} : vector<8x64xf32>, vector<64x64xf32>, vector<8x64xf32> -> vector<8x64xf32>
    %132 = arith.addf %131, %3 : vector<8x64xf32>
    %cst_53 = arith.constant dense<0.000000e+00> : vector<8xf32>
    %133 = vector.multi_reduction <add>, %132, %cst_53 [1] : vector<8x64xf32> to vector<8xf32>
    %134 = vector.shape_cast %133 : vector<8xf32> to vector<8x1xf32>
    %cst_54 = arith.constant 6.400000e+01 : f32
    %135 = vector.broadcast %cst_54 : f32 to vector<8x1xf32>
    %136 = arith.divf %134, %135 : vector<8x1xf32>
    %137 = vector.broadcast %136 : vector<8x1xf32> to vector<8x64xf32>
    %138 = arith.subf %132, %137 : vector<8x64xf32>
    %139 = arith.mulf %138, %138 : vector<8x64xf32>
    %cst_55 = arith.constant dense<0.000000e+00> : vector<8xf32>
    %140 = vector.multi_reduction <add>, %139, %cst_55 [1] : vector<8x64xf32> to vector<8xf32>
    %141 = vector.shape_cast %140 : vector<8xf32> to vector<8x1xf32>
    %cst_56 = arith.constant 6.400000e+01 : f32
    %142 = vector.broadcast %cst_56 : f32 to vector<8x1xf32>
    %143 = arith.divf %141, %142 : vector<8x1xf32>
    %144 = vector.broadcast %136 : vector<8x1xf32> to vector<8x64xf32>
    %145 = arith.subf %132, %144 : vector<8x64xf32>
    %cst_57 = arith.constant 9.99999974E-6 : f32
    %146 = vector.broadcast %cst_57 : f32 to vector<8x1xf32>
    %147 = arith.addf %143, %146 : vector<8x1xf32>
    %148 = math.rsqrt %147 : vector<8x1xf32>
    %149 = vector.broadcast %148 : vector<8x1xf32> to vector<8x64xf32>
    %150 = arith.mulf %145, %149 : vector<8x64xf32>
    %151 = vector.broadcast %13 : vector<1x64xf32> to vector<8x64xf32>
    %152 = arith.mulf %150, %151 : vector<8x64xf32>
    %153 = vector.broadcast %14 : vector<1x64xf32> to vector<8x64xf32>
    %154 = arith.addf %152, %153 : vector<8x64xf32>
    %c0_58 = arith.constant 0 : index
    %c0_59 = arith.constant 0 : index
    %c0_60 = arith.constant 0 : index
    %155 = vector.load %arg8[%c0_58, %c0_59, %c0_60] : memref<2x64x128xf32, #tpu.memory_space<vmem>>, vector<1x64x128xf32>
    %156 = vector.shape_cast %155 : vector<1x64x128xf32> to vector<64x128xf32>
    %cst_61 = arith.constant dense<0.000000e+00> : vector<8x128xf32>
    %157 = tpu.matmul %154, %156, %cst_61 {dimension_numbers = #tpu.dot_dimension_numbers<[1], [0], [0], [1], [0, 0, 1, 1], [], []>} : vector<8x64xf32>, vector<64x128xf32>, vector<8x128xf32> -> vector<8x128xf32>
    %cst_62 = arith.constant 5.000000e-01 : f32
    %158 = vector.broadcast %cst_62 : f32 to vector<8x128xf32>
    %159 = arith.mulf %158, %157 : vector<8x128xf32>
    %cst_63 = arith.constant 2.000000e+00 : f32
    %160 = math.sqrt %cst_63 : f32
    %161 = vector.broadcast %160 : f32 to vector<8x128xf32>
    %162 = arith.divf %157, %161 : vector<8x128xf32>
    %163 = math.erf %162 : vector<8x128xf32>
    %cst_64 = arith.constant 1.000000e+00 : f32
    %164 = vector.broadcast %cst_64 : f32 to vector<8x128xf32>
    %165 = arith.addf %164, %163 : vector<8x128xf32>
    %166 = arith.mulf %159, %165 : vector<8x128xf32>
    %c0_65 = arith.constant 0 : index
    %c0_66 = arith.constant 0 : index
    %c0_67 = arith.constant 0 : index
    %167 = vector.load %arg9[%c0_65, %c0_66, %c0_67] : memref<2x128x64xf32, #tpu.memory_space<vmem>>, vector<1x128x64xf32>
    %168 = vector.shape_cast %167 : vector<1x128x64xf32> to vector<128x64xf32>
    %cst_68 = arith.constant dense<0.000000e+00> : vector<8x64xf32>
    %169 = tpu.matmul %166, %168, %cst_68 {dimension_numbers = #tpu.dot_dimension_numbers<[1], [0], [0], [1], [0, 0, 1, 1], [], []>} : vector<8x128xf32>, vector<128x64xf32>, vector<8x64xf32> -> vector<8x64xf32>
    %170 = arith.addf %169, %132 : vector<8x64xf32>
    %c10 = arith.constant 10 : index
    %c0_69 = arith.constant 0 : index
    %171 = vector.load %arg4[%c10, %c0_69] : memref<16x64xf32, #tpu.memory_space<vmem>>, vector<1x64xf32>
    %c11 = arith.constant 11 : index
    %c0_70 = arith.constant 0 : index
    %172 = vector.load %arg4[%c11, %c0_70] : memref<16x64xf32, #tpu.memory_space<vmem>>, vector<1x64xf32>
    %c12 = arith.constant 12 : index
    %c0_71 = arith.constant 0 : index
    %173 = vector.load %arg4[%c12, %c0_71] : memref<16x64xf32, #tpu.memory_space<vmem>>, vector<1x64xf32>
    %c13 = arith.constant 13 : index
    %c0_72 = arith.constant 0 : index
    %174 = vector.load %arg4[%c13, %c0_72] : memref<16x64xf32, #tpu.memory_space<vmem>>, vector<1x64xf32>
    %c14 = arith.constant 14 : index
    %c0_73 = arith.constant 0 : index
    %175 = vector.load %arg4[%c14, %c0_73] : memref<16x64xf32, #tpu.memory_space<vmem>>, vector<1x64xf32>
    %c15 = arith.constant 15 : index
    %c0_74 = arith.constant 0 : index
    %176 = vector.load %arg4[%c15, %c0_74] : memref<16x64xf32, #tpu.memory_space<vmem>>, vector<1x64xf32>
    %cst_75 = arith.constant dense<0.000000e+00> : vector<16xf32>
    %177 = vector.multi_reduction <add>, %8, %cst_75 [1] : vector<16x64xf32> to vector<16xf32>
    %178 = vector.shape_cast %177 : vector<16xf32> to vector<16x1xf32>
    %cst_76 = arith.constant 6.400000e+01 : f32
    %179 = vector.broadcast %cst_76 : f32 to vector<16x1xf32>
    %180 = arith.divf %178, %179 : vector<16x1xf32>
    %181 = vector.broadcast %180 : vector<16x1xf32> to vector<16x64xf32>
    %182 = arith.subf %8, %181 : vector<16x64xf32>
    %183 = arith.mulf %182, %182 : vector<16x64xf32>
    %cst_77 = arith.constant dense<0.000000e+00> : vector<16xf32>
    %184 = vector.multi_reduction <add>, %183, %cst_77 [1] : vector<16x64xf32> to vector<16xf32>
    %185 = vector.shape_cast %184 : vector<16xf32> to vector<16x1xf32>
    %cst_78 = arith.constant 6.400000e+01 : f32
    %186 = vector.broadcast %cst_78 : f32 to vector<16x1xf32>
    %187 = arith.divf %185, %186 : vector<16x1xf32>
    %188 = vector.broadcast %180 : vector<16x1xf32> to vector<16x64xf32>
    %189 = arith.subf %8, %188 : vector<16x64xf32>
    %cst_79 = arith.constant 9.99999974E-6 : f32
    %190 = vector.broadcast %cst_79 : f32 to vector<16x1xf32>
    %191 = arith.addf %187, %190 : vector<16x1xf32>
    %192 = math.rsqrt %191 : vector<16x1xf32>
    %193 = vector.broadcast %192 : vector<16x1xf32> to vector<16x64xf32>
    %194 = arith.mulf %189, %193 : vector<16x64xf32>
    %195 = vector.broadcast %171 : vector<1x64xf32> to vector<16x64xf32>
    %196 = arith.mulf %194, %195 : vector<16x64xf32>
    %197 = vector.broadcast %172 : vector<1x64xf32> to vector<16x64xf32>
    %198 = arith.addf %196, %197 : vector<16x64xf32>
    %cst_80 = arith.constant dense<0.000000e+00> : vector<8xf32>
    %199 = vector.multi_reduction <add>, %170, %cst_80 [1] : vector<8x64xf32> to vector<8xf32>
    %200 = vector.shape_cast %199 : vector<8xf32> to vector<8x1xf32>
    %cst_81 = arith.constant 6.400000e+01 : f32
    %201 = vector.broadcast %cst_81 : f32 to vector<8x1xf32>
    %202 = arith.divf %200, %201 : vector<8x1xf32>
    %203 = vector.broadcast %202 : vector<8x1xf32> to vector<8x64xf32>
    %204 = arith.subf %170, %203 : vector<8x64xf32>
    %205 = arith.mulf %204, %204 : vector<8x64xf32>
    %cst_82 = arith.constant dense<0.000000e+00> : vector<8xf32>
    %206 = vector.multi_reduction <add>, %205, %cst_82 [1] : vector<8x64xf32> to vector<8xf32>
    %207 = vector.shape_cast %206 : vector<8xf32> to vector<8x1xf32>
    %cst_83 = arith.constant 6.400000e+01 : f32
    %208 = vector.broadcast %cst_83 : f32 to vector<8x1xf32>
    %209 = arith.divf %207, %208 : vector<8x1xf32>
    %210 = vector.broadcast %202 : vector<8x1xf32> to vector<8x64xf32>
    %211 = arith.subf %170, %210 : vector<8x64xf32>
    %cst_84 = arith.constant 9.99999974E-6 : f32
    %212 = vector.broadcast %cst_84 : f32 to vector<8x1xf32>
    %213 = arith.addf %209, %212 : vector<8x1xf32>
    %214 = math.rsqrt %213 : vector<8x1xf32>
    %215 = vector.broadcast %214 : vector<8x1xf32> to vector<8x64xf32>
    %216 = arith.mulf %211, %215 : vector<8x64xf32>
    %217 = vector.broadcast %173 : vector<1x64xf32> to vector<8x64xf32>
    %218 = arith.mulf %216, %217 : vector<8x64xf32>
    %219 = vector.broadcast %174 : vector<1x64xf32> to vector<8x64xf32>
    %220 = arith.addf %218, %219 : vector<8x64xf32>
    %221 = tpu.concatenate %198, %220 in 0 : vector<16x64xf32>, vector<8x64xf32> -> vector<24x64xf32>
    %c1 = arith.constant 1 : index
    %c0_85 = arith.constant 0 : index
    %c0_86 = arith.constant 0 : index
    %222 = vector.load %arg5[%c1, %c0_85, %c0_86] : memref<2x64x64xf32, #tpu.memory_space<vmem>>, vector<1x64x64xf32>
    %223 = vector.shape_cast %222 : vector<1x64x64xf32> to vector<64x64xf32>
    %cst_87 = arith.constant dense<0.000000e+00> : vector<8x64xf32>
    %224 = tpu.matmul %220, %223, %cst_87 {dimension_numbers = #tpu.dot_dimension_numbers<[1], [0], [0], [1], [0, 0, 1, 1], [], []>} : vector<8x64xf32>, vector<64x64xf32>, vector<8x64xf32> -> vector<8x64xf32>
    %c1_88 = arith.constant 1 : index
    %c0_89 = arith.constant 0 : index
    %c0_90 = arith.constant 0 : index
    %225 = vector.load %arg6[%c1_88, %c0_89, %c0_90] : memref<2x64x128xf32, #tpu.memory_space<vmem>>, vector<1x64x128xf32>
    %226 = vector.shape_cast %225 : vector<1x64x128xf32> to vector<64x128xf32>
    %cst_91 = arith.constant dense<0.000000e+00> : vector<24x128xf32>
    %227 = tpu.matmul %221, %226, %cst_91 {dimension_numbers = #tpu.dot_dimension_numbers<[1], [0], [0], [1], [0, 0, 1, 1], [], []>} : vector<24x64xf32>, vector<64x128xf32>, vector<24x128xf32> -> vector<24x128xf32>
    %228 = vector.extract_strided_slice %227 {offsets = [0, 0], sizes = [24, 64], strides = [1, 1]} : vector<24x128xf32> to vector<24x64xf32>
    %229 = vector.extract_strided_slice %227 {offsets = [0, 64], sizes = [24, 64], strides = [1, 1]} : vector<24x128xf32> to vector<24x64xf32>
    %230 = vector.extract_strided_slice %224 {offsets = [0, 0], sizes = [8, 16], strides = [1, 1]} : vector<8x64xf32> to vector<8x16xf32>
    %231 = vector.extract_strided_slice %228 {offsets = [0, 0], sizes = [24, 16], strides = [1, 1]} : vector<24x64xf32> to vector<24x16xf32>
    %232 = vector.extract_strided_slice %229 {offsets = [0, 0], sizes = [24, 16], strides = [1, 1]} : vector<24x64xf32> to vector<24x16xf32>
    %cst_92 = arith.constant dense<0.000000e+00> : vector<8x24xf32>
    %233 = tpu.matmul %230, %231, %cst_92 {dimension_numbers = #tpu.dot_dimension_numbers<[1], [1], [0], [0], [0, 0, 1, 0], [], []>} : vector<8x16xf32>, vector<24x16xf32>, vector<8x24xf32> -> vector<8x24xf32>
    %cst_93 = arith.constant dense<0xFF800000> : vector<8xf32>
    %234 = vector.multi_reduction <maximumf>, %233, %cst_93 [1] : vector<8x24xf32> to vector<8xf32>
    %235 = vector.shape_cast %234 : vector<8xf32> to vector<8x1xf32>
    %236 = vector.broadcast %235 : vector<8x1xf32> to vector<8x24xf32>
    %237 = arith.subf %233, %236 : vector<8x24xf32>
    %238 = math.exp %237 : vector<8x24xf32>
    %cst_94 = arith.constant dense<0.000000e+00> : vector<8xf32>
    %239 = vector.multi_reduction <add>, %238, %cst_94 [1] : vector<8x24xf32> to vector<8xf32>
    %240 = vector.shape_cast %239 : vector<8xf32> to vector<8x1xf32>
    %241 = tpu.reciprocal %240 {approx = true} : vector<8x1xf32> -> vector<8x1xf32>
    %242 = vector.broadcast %241 : vector<8x1xf32> to vector<8x24xf32>
    %243 = arith.mulf %238, %242 : vector<8x24xf32>
    %cst_95 = arith.constant dense<0.000000e+00> : vector<8x16xf32>
    %244 = tpu.matmul %243, %232, %cst_95 {dimension_numbers = #tpu.dot_dimension_numbers<[1], [0], [0], [1], [0, 0, 1, 1], [], []>} : vector<8x24xf32>, vector<24x16xf32>, vector<8x16xf32> -> vector<8x16xf32>
    %245 = vector.extract_strided_slice %224 {offsets = [0, 16], sizes = [8, 16], strides = [1, 1]} : vector<8x64xf32> to vector<8x16xf32>
    %246 = vector.extract_strided_slice %228 {offsets = [0, 16], sizes = [24, 16], strides = [1, 1]} : vector<24x64xf32> to vector<24x16xf32>
    %247 = vector.extract_strided_slice %229 {offsets = [0, 16], sizes = [24, 16], strides = [1, 1]} : vector<24x64xf32> to vector<24x16xf32>
    %cst_96 = arith.constant dense<0.000000e+00> : vector<8x24xf32>
    %248 = tpu.matmul %245, %246, %cst_96 {dimension_numbers = #tpu.dot_dimension_numbers<[1], [1], [0], [0], [0, 0, 1, 0], [], []>} : vector<8x16xf32>, vector<24x16xf32>, vector<8x24xf32> -> vector<8x24xf32>
    %cst_97 = arith.constant dense<0xFF800000> : vector<8xf32>
    %249 = vector.multi_reduction <maximumf>, %248, %cst_97 [1] : vector<8x24xf32> to vector<8xf32>
    %250 = vector.shape_cast %249 : vector<8xf32> to vector<8x1xf32>
    %251 = vector.broadcast %250 : vector<8x1xf32> to vector<8x24xf32>
    %252 = arith.subf %248, %251 : vector<8x24xf32>
    %253 = math.exp %252 : vector<8x24xf32>
    %cst_98 = arith.constant dense<0.000000e+00> : vector<8xf32>
    %254 = vector.multi_reduction <add>, %253, %cst_98 [1] : vector<8x24xf32> to vector<8xf32>
    %255 = vector.shape_cast %254 : vector<8xf32> to vector<8x1xf32>
    %256 = tpu.reciprocal %255 {approx = true} : vector<8x1xf32> -> vector<8x1xf32>
    %257 = vector.broadcast %256 : vector<8x1xf32> to vector<8x24xf32>
    %258 = arith.mulf %253, %257 : vector<8x24xf32>
    %cst_99 = arith.constant dense<0.000000e+00> : vector<8x16xf32>
    %259 = tpu.matmul %258, %247, %cst_99 {dimension_numbers = #tpu.dot_dimension_numbers<[1], [0], [0], [1], [0, 0, 1, 1], [], []>} : vector<8x24xf32>, vector<24x16xf32>, vector<8x16xf32> -> vector<8x16xf32>
    %260 = vector.extract_strided_slice %224 {offsets = [0, 32], sizes = [8, 16], strides = [1, 1]} : vector<8x64xf32> to vector<8x16xf32>
    %261 = vector.extract_strided_slice %228 {offsets = [0, 32], sizes = [24, 16], strides = [1, 1]} : vector<24x64xf32> to vector<24x16xf32>
    %262 = vector.extract_strided_slice %229 {offsets = [0, 32], sizes = [24, 16], strides = [1, 1]} : vector<24x64xf32> to vector<24x16xf32>
    %cst_100 = arith.constant dense<0.000000e+00> : vector<8x24xf32>
    %263 = tpu.matmul %260, %261, %cst_100 {dimension_numbers = #tpu.dot_dimension_numbers<[1], [1], [0], [0], [0, 0, 1, 0], [], []>} : vector<8x16xf32>, vector<24x16xf32>, vector<8x24xf32> -> vector<8x24xf32>
    %cst_101 = arith.constant dense<0xFF800000> : vector<8xf32>
    %264 = vector.multi_reduction <maximumf>, %263, %cst_101 [1] : vector<8x24xf32> to vector<8xf32>
    %265 = vector.shape_cast %264 : vector<8xf32> to vector<8x1xf32>
    %266 = vector.broadcast %265 : vector<8x1xf32> to vector<8x24xf32>
    %267 = arith.subf %263, %266 : vector<8x24xf32>
    %268 = math.exp %267 : vector<8x24xf32>
    %cst_102 = arith.constant dense<0.000000e+00> : vector<8xf32>
    %269 = vector.multi_reduction <add>, %268, %cst_102 [1] : vector<8x24xf32> to vector<8xf32>
    %270 = vector.shape_cast %269 : vector<8xf32> to vector<8x1xf32>
    %271 = tpu.reciprocal %270 {approx = true} : vector<8x1xf32> -> vector<8x1xf32>
    %272 = vector.broadcast %271 : vector<8x1xf32> to vector<8x24xf32>
    %273 = arith.mulf %268, %272 : vector<8x24xf32>
    %cst_103 = arith.constant dense<0.000000e+00> : vector<8x16xf32>
    %274 = tpu.matmul %273, %262, %cst_103 {dimension_numbers = #tpu.dot_dimension_numbers<[1], [0], [0], [1], [0, 0, 1, 1], [], []>} : vector<8x24xf32>, vector<24x16xf32>, vector<8x16xf32> -> vector<8x16xf32>
    %275 = vector.extract_strided_slice %224 {offsets = [0, 48], sizes = [8, 16], strides = [1, 1]} : vector<8x64xf32> to vector<8x16xf32>
    %276 = vector.extract_strided_slice %228 {offsets = [0, 48], sizes = [24, 16], strides = [1, 1]} : vector<24x64xf32> to vector<24x16xf32>
    %277 = vector.extract_strided_slice %229 {offsets = [0, 48], sizes = [24, 16], strides = [1, 1]} : vector<24x64xf32> to vector<24x16xf32>
    %cst_104 = arith.constant dense<0.000000e+00> : vector<8x24xf32>
    %278 = tpu.matmul %275, %276, %cst_104 {dimension_numbers = #tpu.dot_dimension_numbers<[1], [1], [0], [0], [0, 0, 1, 0], [], []>} : vector<8x16xf32>, vector<24x16xf32>, vector<8x24xf32> -> vector<8x24xf32>
    %cst_105 = arith.constant dense<0xFF800000> : vector<8xf32>
    %279 = vector.multi_reduction <maximumf>, %278, %cst_105 [1] : vector<8x24xf32> to vector<8xf32>
    %280 = vector.shape_cast %279 : vector<8xf32> to vector<8x1xf32>
    %281 = vector.broadcast %280 : vector<8x1xf32> to vector<8x24xf32>
    %282 = arith.subf %278, %281 : vector<8x24xf32>
    %283 = math.exp %282 : vector<8x24xf32>
    %cst_106 = arith.constant dense<0.000000e+00> : vector<8xf32>
    %284 = vector.multi_reduction <add>, %283, %cst_106 [1] : vector<8x24xf32> to vector<8xf32>
    %285 = vector.shape_cast %284 : vector<8xf32> to vector<8x1xf32>
    %286 = tpu.reciprocal %285 {approx = true} : vector<8x1xf32> -> vector<8x1xf32>
    %287 = vector.broadcast %286 : vector<8x1xf32> to vector<8x24xf32>
    %288 = arith.mulf %283, %287 : vector<8x24xf32>
    %cst_107 = arith.constant dense<0.000000e+00> : vector<8x16xf32>
    %289 = tpu.matmul %288, %277, %cst_107 {dimension_numbers = #tpu.dot_dimension_numbers<[1], [0], [0], [1], [0, 0, 1, 1], [], []>} : vector<8x24xf32>, vector<24x16xf32>, vector<8x16xf32> -> vector<8x16xf32>
    %290 = tpu.concatenate %244, %259, %274, %289 in 1 : vector<8x16xf32>, vector<8x16xf32>, vector<8x16xf32>, vector<8x16xf32> -> vector<8x64xf32>
    %c1_108 = arith.constant 1 : index
    %c0_109 = arith.constant 0 : index
    %c0_110 = arith.constant 0 : index
    %291 = vector.load %arg7[%c1_108, %c0_109, %c0_110] : memref<2x64x64xf32, #tpu.memory_space<vmem>>, vector<1x64x64xf32>
    %292 = vector.shape_cast %291 : vector<1x64x64xf32> to vector<64x64xf32>
    %cst_111 = arith.constant dense<0.000000e+00> : vector<8x64xf32>
    %293 = tpu.matmul %290, %292, %cst_111 {dimension_numbers = #tpu.dot_dimension_numbers<[1], [0], [0], [1], [0, 0, 1, 1], [], []>} : vector<8x64xf32>, vector<64x64xf32>, vector<8x64xf32> -> vector<8x64xf32>
    %294 = arith.addf %293, %170 : vector<8x64xf32>
    %cst_112 = arith.constant dense<0.000000e+00> : vector<8xf32>
    %295 = vector.multi_reduction <add>, %294, %cst_112 [1] : vector<8x64xf32> to vector<8xf32>
    %296 = vector.shape_cast %295 : vector<8xf32> to vector<8x1xf32>
    %cst_113 = arith.constant 6.400000e+01 : f32
    %297 = vector.broadcast %cst_113 : f32 to vector<8x1xf32>
    %298 = arith.divf %296, %297 : vector<8x1xf32>
    %299 = vector.broadcast %298 : vector<8x1xf32> to vector<8x64xf32>
    %300 = arith.subf %294, %299 : vector<8x64xf32>
    %301 = arith.mulf %300, %300 : vector<8x64xf32>
    %cst_114 = arith.constant dense<0.000000e+00> : vector<8xf32>
    %302 = vector.multi_reduction <add>, %301, %cst_114 [1] : vector<8x64xf32> to vector<8xf32>
    %303 = vector.shape_cast %302 : vector<8xf32> to vector<8x1xf32>
    %cst_115 = arith.constant 6.400000e+01 : f32
    %304 = vector.broadcast %cst_115 : f32 to vector<8x1xf32>
    %305 = arith.divf %303, %304 : vector<8x1xf32>
    %306 = vector.broadcast %298 : vector<8x1xf32> to vector<8x64xf32>
    %307 = arith.subf %294, %306 : vector<8x64xf32>
    %cst_116 = arith.constant 9.99999974E-6 : f32
    %308 = vector.broadcast %cst_116 : f32 to vector<8x1xf32>
    %309 = arith.addf %305, %308 : vector<8x1xf32>
    %310 = math.rsqrt %309 : vector<8x1xf32>
    %311 = vector.broadcast %310 : vector<8x1xf32> to vector<8x64xf32>
    %312 = arith.mulf %307, %311 : vector<8x64xf32>
    %313 = vector.broadcast %175 : vector<1x64xf32> to vector<8x64xf32>
    %314 = arith.mulf %312, %313 : vector<8x64xf32>
    %315 = vector.broadcast %176 : vector<1x64xf32> to vector<8x64xf32>
    %316 = arith.addf %314, %315 : vector<8x64xf32>
    %c1_117 = arith.constant 1 : index
    %c0_118 = arith.constant 0 : index
    %c0_119 = arith.constant 0 : index
    %317 = vector.load %arg8[%c1_117, %c0_118, %c0_119] : memref<2x64x128xf32, #tpu.memory_space<vmem>>, vector<1x64x128xf32>
    %318 = vector.shape_cast %317 : vector<1x64x128xf32> to vector<64x128xf32>
    %cst_120 = arith.constant dense<0.000000e+00> : vector<8x128xf32>
    %319 = tpu.matmul %316, %318, %cst_120 {dimension_numbers = #tpu.dot_dimension_numbers<[1], [0], [0], [1], [0, 0, 1, 1], [], []>} : vector<8x64xf32>, vector<64x128xf32>, vector<8x128xf32> -> vector<8x128xf32>
    %cst_121 = arith.constant 5.000000e-01 : f32
    %320 = vector.broadcast %cst_121 : f32 to vector<8x128xf32>
    %321 = arith.mulf %320, %319 : vector<8x128xf32>
    %cst_122 = arith.constant 2.000000e+00 : f32
    %322 = math.sqrt %cst_122 : f32
    %323 = vector.broadcast %322 : f32 to vector<8x128xf32>
    %324 = arith.divf %319, %323 : vector<8x128xf32>
    %325 = math.erf %324 : vector<8x128xf32>
    %cst_123 = arith.constant 1.000000e+00 : f32
    %326 = vector.broadcast %cst_123 : f32 to vector<8x128xf32>
    %327 = arith.addf %326, %325 : vector<8x128xf32>
    %328 = arith.mulf %321, %327 : vector<8x128xf32>
    %c1_124 = arith.constant 1 : index
    %c0_125 = arith.constant 0 : index
    %c0_126 = arith.constant 0 : index
    %329 = vector.load %arg9[%c1_124, %c0_125, %c0_126] : memref<2x128x64xf32, #tpu.memory_space<vmem>>, vector<1x128x64xf32>
    %330 = vector.shape_cast %329 : vector<1x128x64xf32> to vector<128x64xf32>
    %cst_127 = arith.constant dense<0.000000e+00> : vector<8x64xf32>
    %331 = tpu.matmul %328, %330, %cst_127 {dimension_numbers = #tpu.dot_dimension_numbers<[1], [0], [0], [1], [0, 0, 1, 1], [], []>} : vector<8x128xf32>, vector<128x64xf32>, vector<8x64xf32> -> vector<8x64xf32>
    %332 = arith.addf %331, %294 : vector<8x64xf32>
    %c1_128 = arith.constant 1 : index
    %c0_129 = arith.constant 0 : index
    %333 = vector.load %arg4[%c1_128, %c0_129] : memref<16x64xf32, #tpu.memory_space<vmem>>, vector<1x64xf32>
    %c2 = arith.constant 2 : index
    %c0_130 = arith.constant 0 : index
    %334 = vector.load %arg4[%c2, %c0_130] : memref<16x64xf32, #tpu.memory_space<vmem>>, vector<1x64xf32>
    %c3 = arith.constant 3 : index
    %c0_131 = arith.constant 0 : index
    %335 = vector.load %arg4[%c3, %c0_131] : memref<16x64xf32, #tpu.memory_space<vmem>>, vector<1x64xf32>
    %c0_132 = arith.constant 0 : index
    %c0_133 = arith.constant 0 : index
    %336 = vector.load %arg10[%c0_132, %c0_133] : memref<64x64xf32, #tpu.memory_space<vmem>>, vector<64x64xf32>
    %cst_134 = arith.constant dense<0.000000e+00> : vector<8x64xf32>
    %337 = tpu.matmul %332, %336, %cst_134 {dimension_numbers = #tpu.dot_dimension_numbers<[1], [0], [0], [1], [0, 0, 1, 1], [], []>} : vector<8x64xf32>, vector<64x64xf32>, vector<8x64xf32> -> vector<8x64xf32>
    %338 = vector.broadcast %333 : vector<1x64xf32> to vector<8x64xf32>
    %339 = arith.addf %337, %338 : vector<8x64xf32>
    %cst_135 = arith.constant dense<0.000000e+00> : vector<8xf32>
    %340 = vector.multi_reduction <add>, %339, %cst_135 [1] : vector<8x64xf32> to vector<8xf32>
    %341 = vector.shape_cast %340 : vector<8xf32> to vector<8x1xf32>
    %cst_136 = arith.constant 6.400000e+01 : f32
    %342 = vector.broadcast %cst_136 : f32 to vector<8x1xf32>
    %343 = arith.divf %341, %342 : vector<8x1xf32>
    %344 = vector.broadcast %343 : vector<8x1xf32> to vector<8x64xf32>
    %345 = arith.subf %339, %344 : vector<8x64xf32>
    %346 = arith.mulf %345, %345 : vector<8x64xf32>
    %cst_137 = arith.constant dense<0.000000e+00> : vector<8xf32>
    %347 = vector.multi_reduction <add>, %346, %cst_137 [1] : vector<8x64xf32> to vector<8xf32>
    %348 = vector.shape_cast %347 : vector<8xf32> to vector<8x1xf32>
    %cst_138 = arith.constant 6.400000e+01 : f32
    %349 = vector.broadcast %cst_138 : f32 to vector<8x1xf32>
    %350 = arith.divf %348, %349 : vector<8x1xf32>
    %351 = vector.broadcast %343 : vector<8x1xf32> to vector<8x64xf32>
    %352 = arith.subf %339, %351 : vector<8x64xf32>
    %cst_139 = arith.constant 9.99999974E-6 : f32
    %353 = vector.broadcast %cst_139 : f32 to vector<8x1xf32>
    %354 = arith.addf %350, %353 : vector<8x1xf32>
    %355 = math.rsqrt %354 : vector<8x1xf32>
    %356 = vector.broadcast %355 : vector<8x1xf32> to vector<8x64xf32>
    %357 = arith.mulf %352, %356 : vector<8x64xf32>
    %358 = vector.broadcast %334 : vector<1x64xf32> to vector<8x64xf32>
    %359 = arith.mulf %357, %358 : vector<8x64xf32>
    %360 = vector.broadcast %335 : vector<1x64xf32> to vector<8x64xf32>
    %361 = arith.addf %359, %360 : vector<8x64xf32>
    %c0_140 = arith.constant 0 : index
    %c0_141 = arith.constant 0 : index
    %c0_142 = arith.constant 0 : index
    %362 = vector.load %arg11[%c0_140, %c0_141, %c0_142] : memref<1x8x64xf32, #tpu.memory_space<vmem>>, vector<1x8x64xf32>
    %363 = vector.shape_cast %362 : vector<1x8x64xf32> to vector<8x64xf32>
    %364 = vector.shape_cast %361 : vector<8x64xf32> to vector<1x8x64xf32>
    tpu.vector_store %arg11[%c0_140, %c0_141, %c0_142], %364 {strides = array<i32>} : memref<1x8x64xf32, #tpu.memory_space<vmem>>, vector<1x8x64xf32>,
    return
  }
  func.func @transform_0(%arg0: i32) -> (i32, i32, i32) {
    %c0_i32 = arith.constant 0 : i32
    %c0_i32_0 = arith.constant 0 : i32
    %c0_i32_1 = arith.constant 0 : i32
    return %arg0, %c0_i32, %c0_i32_0 : i32, i32, i32
  }
  func.func @transform_1(%arg0: i32) -> (i32, i32, i32) {
    %c0_i32 = arith.constant 0 : i32
    %c0_i32_0 = arith.constant 0 : i32
    %c0_i32_1 = arith.constant 0 : i32
    %c0_i32_2 = arith.constant 0 : i32
    return %c0_i32, %c0_i32_0, %c0_i32_1 : i32, i32, i32
  }
  func.func @transform_2(%arg0: i32) -> (i32, i32) {
    %c0_i32 = arith.constant 0 : i32
    %c0_i32_0 = arith.constant 0 : i32
    %c0_i32_1 = arith.constant 0 : i32
    return %c0_i32, %c0_i32_0 : i32, i32
  }
  func.func @transform_3(%arg0: i32) -> (i32, i32) {
    %c0_i32 = arith.constant 0 : i32
    %c0_i32_0 = arith.constant 0 : i32
    %c0_i32_1 = arith.constant 0 : i32
    return %c0_i32, %c0_i32_0 : i32, i32
  }
  func.func @transform_4(%arg0: i32) -> (i32, i32, i32) {
    %c0_i32 = arith.constant 0 : i32
    %c0_i32_0 = arith.constant 0 : i32
    %c0_i32_1 = arith.constant 0 : i32
    %c0_i32_2 = arith.constant 0 : i32
    return %c0_i32, %c0_i32_0, %c0_i32_1 : i32, i32, i32
  }
  func.func @transform_5(%arg0: i32) -> (i32, i32, i32) {
    %c0_i32 = arith.constant 0 : i32
    %c0_i32_0 = arith.constant 0 : i32
    %c0_i32_1 = arith.constant 0 : i32
    %c0_i32_2 = arith.constant 0 : i32
    return %c0_i32, %c0_i32_0, %c0_i32_1 : i32, i32, i32
  }
  func.func @transform_6(%arg0: i32) -> (i32, i32, i32) {
    %c0_i32 = arith.constant 0 : i32
    %c0_i32_0 = arith.constant 0 : i32
    %c0_i32_1 = arith.constant 0 : i32
    %c0_i32_2 = arith.constant 0 : i32
    return %c0_i32, %c0_i32_0, %c0_i32_1 : i32, i32, i32
  }
  func.func @transform_7(%arg0: i32) -> (i32, i32, i32) {
    %c0_i32 = arith.constant 0 : i32
    %c0_i32_0 = arith.constant 0 : i32
    %c0_i32_1 = arith.constant 0 : i32
    %c0_i32_2 = arith.constant 0 : i32
    return %c0_i32, %c0_i32_0, %c0_i32_1 : i32, i32, i32
  }
  func.func @transform_8(%arg0: i32) -> (i32, i32, i32) {
    %c0_i32 = arith.constant 0 : i32
    %c0_i32_0 = arith.constant 0 : i32
    %c0_i32_1 = arith.constant 0 : i32
    %c0_i32_2 = arith.constant 0 : i32
    return %c0_i32, %c0_i32_0, %c0_i32_1 : i32, i32, i32
  }
  func.func @transform_9(%arg0: i32) -> (i32, i32) {
    %c0_i32 = arith.constant 0 : i32
    %c0_i32_0 = arith.constant 0 : i32
    %c0_i32_1 = arith.constant 0 : i32
    return %c0_i32, %c0_i32_0 : i32, i32
  }
  func.func @transform_10(%arg0: i32) -> (i32, i32, i32) {
    %c0_i32 = arith.constant 0 : i32
    %c0_i32_0 = arith.constant 0 : i32
    %c0_i32_1 = arith.constant 0 : i32
    return %arg0, %c0_i32, %c0_i32_0 : i32, i32, i32
  }
}

</mosaic_0001>

<llo_original>
// kernel: tpu_custom_call.1
$region0: #{tpu_custom_call.1}
  #allocation0 [shape = 'u32[]', space=smem, size = 0x4, offset = 0x4, fixed_abs, tag = 'smem constant byte address 0x4 - core index']
  #allocation1 [shape = 'u32[144,128]{1,0:T(1,128)}', space=vmem, size = 0x12000, scoped, tag = 'internal scratch']
  %s0 = inlined_call_operand.hbm [shape: f32[2,16,32], index: 0, kind: input, shape index: {}]
  %s1 = inlined_call_operand.hbm [shape: f32[1,8,64], index: 1, kind: input, shape index: {}]
  %s2 = inlined_call_operand.hbm [shape: f32[32,64], index: 2, kind: input, shape index: {}]
  %s3 = inlined_call_operand.hbm [shape: f32[16,64], index: 3, kind: input, shape index: {}]
  %s4 = inlined_call_operand.vmem [shape: f32[2,64,64], index: 4, kind: input, shape index: {}]
  %s5 = inlined_call_operand.vmem [shape: f32[2,64,128], index: 5, kind: input, shape index: {}]
  %s6 = inlined_call_operand.vmem [shape: f32[2,64,64], index: 6, kind: input, shape index: {}]
  %s7 = inlined_call_operand.hbm [shape: f32[2,64,128], index: 7, kind: input, shape index: {}]
  %s8 = inlined_call_operand.vmem [shape: f32[2,128,64], index: 8, kind: input, shape index: {}]
  %s9 = inlined_call_operand.hbm [shape: f32[64,64], index: 9, kind: input, shape index: {}]
  %s10 = inlined_call_operand.hbm [shape: f32[2,8,64], index: 10, kind: output, shape index: {}]
  %s11 = sld [smem:[#allocation0]]
  $region97: #{tpu_custom_call.1} parent=0
    _
  %s13 = ssub.s32 1, %s11
  %s14 = scalar_select 0, %s13, %s11
  $region1: #{tpu_custom_call.1} parent=0
    #allocation2 [shape = 'u8[16384]{0}', space=vmem, size = 0x4000, scoped, tag = 'input window, operand 0']
    #allocation3 [shape = 's32[2]{0}', space=sflag, size = 0x8, scoped, tag = 'scoped memory for tpu_custom_call.1']
    #allocation4 [shape = 's32[2]{0}', space=sflag, size = 0x8, scoped, tag = 'scoped memory for tpu_custom_call.1']
    #allocation5 [shape = 'u8[4096]{0}', space=vmem, size = 0x1000, scoped, tag = 'input window, operand 1, single buffered']
    #allocation6 [shape = 's32[1]{0}', space=sflag, size = 0x4, scoped, tag = 'scoped memory for tpu_custom_call.1']
    #allocation7 [shape = 'u8[16384]{0}', space=vmem, size = 0x4000, scoped, tag = 'input window, operand 2, single buffered']
    #allocation8 [shape = 'u8[8192]{0}', space=vmem, size = 0x2000, scoped, tag = 'input window, operand 3, single buffered']
    #allocation9 [shape = 's32[1]{0}', space=sflag, size = 0x4, scoped, tag = 'scoped memory for tpu_custom_call.1']
    #allocation10 [shape = 'u8[65536]{0}', space=vmem, size = 0x10000, scoped, tag = 'input window, operand 7, single buffered']
    #allocation11 [shape = 'u8[32768]{0}', space=vmem, size = 0x8000, scoped, tag = 'input window, operand 9, single buffered']
    #allocation12 [shape = 's32[1]{0}', space=sflag, size = 0x4, scoped, tag = 'scoped memory for tpu_custom_call.1']
    #allocation13 [shape = 'u8[8192]{0}', space=vmem, size = 0x2000, scoped, tag = 'output window, operand 0']
    %15 = vsyncpa [#allocation3], 0
    %s16 = scalar_lea.sflag [#allocation3], 1
    %17 = vsyncpa %s16, 0
    %18 = vsyncpa [#allocation6], 0
    %19 = vsyncpa [#allocation9], 0
    %20 = vsyncpa [#allocation12], 0
    %21 = vsyncpa [#allocation4], 0
    %s22 = scalar_lea.sflag [#allocation4], 1
    %23 = vsyncpa %s22, 0
    loop: start=0, step=1, limit=4
    $region2: #{tpu_custom_call.1} parent=1 // loop_pre_header
      _
    $region3: #{tpu_custom_call.1} parent=1 // loop_header
      %s25 = sphi 0, %s29
      %p26 = scmp.ge.s32.totalorder %s25, 4
      %s35 = sphi 0, %s37
      %s38 = sphi 0, %s35
      %s39 = sphi 0, %s38
      %s55 = sphi 0, %s39
      %s59 = sphi 0, %s59
      %s61 = sphi 0, %s59
      %s62 = sphi 0, %s61
      %s76 = sphi 0, %s62
      %s80 = sphi 0, %s80
      %s82 = sphi 0, %s80
      %s83 = sphi 0, %s82
      %s97 = sphi 0, %s83
      %s101 = sphi 0, %s101
      %s103 = sphi 0, %s101
      %s104 = sphi 0, %s103
      %s118 = sphi 0, %s104
      %s122 = sphi 0, %s122
      %s124 = sphi 0, %s122
      %s125 = sphi 0, %s124
      %s139 = sphi 0, %s125
      %s143 = sphi 0, %s143
      %s145 = sphi 0, %s143
      %s146 = sphi 0, %s145
      %s160 = sphi 0, %s146
      %s164 = sphi 0, %s164
      %s166 = sphi 0, %s164
      %s167 = sphi 0, %s166
      %s181 = sphi 0, %s167
      %s185 = sphi 0, %s185
      %s187 = sphi 0, %s185
      %s188 = sphi 0, %s187
      %s202 = sphi 0, %s188
      %s206 = sphi 0, %s206
      %s208 = sphi 0, %s206
      %s209 = sphi 0, %s208
      %s223 = sphi 0, %s209
      %s227 = sphi 0, %s227
      %s229 = sphi 0, %s227
      %s230 = sphi 0, %s229
      %s244 = sphi 0, %s230
      %s250 = sphi 0, %s252
      %s253 = sphi 0, %s250
      %s254 = sphi 0, %s253
      %s270 = sphi 0, %s254
    $region4: #{tpu_custom_call.1} parent=1 // loop_header_branch
      %28 = sbr.rel (%p26) target = $region8
    $region5: #{tpu_custom_call.1} parent=1 // loop_body
      %s30 = ssub.s32 %s25, 1
      %s31 = ssub.s32 %s25, 2
      %s32 = sadd.s32 %s25, 1
      %s33 = ssub.s32 %s25, %s32
      %p34 = scmp.eq.s32.totalorder %s33, 0
      %s36 = sadd.s32 %s35, 1
      %s37 = scalar_select %p34, %s35, %s36
      %p40 = pneg %p34
      %p41 = scmp.eq.s32.totalorder %s25, 1
      %p42 = por %p40, %p41
      %p43 = scmp.ne.s32.totalorder %s35, %s38
      %p44 = scmp.eq.s32.totalorder %s25, 0
      %p45 = por %p43, %p44
      %p46 = scmp.ne.s32.totalorder %s35, %s38
      %p47 = scmp.eq.s32.totalorder %s30, 1
      %p48 = por %p46, %p47
      %p49 = scmp.ne.s32.totalorder %s38, %s39
      %p50 = scmp.eq.s32.totalorder %s30, 0
      %p51 = por %p49, %p50
      %p52 = scmp.ne.s32.totalorder %s38, %s39
      %p53 = scmp.eq.s32.totalorder %s31, 1
      %p54 = por %p52, %p53
      %p56 = scmp.ne.s32.totalorder %s39, %s55
      %p57 = scmp.eq.s32.totalorder %s31, 0
      %p58 = por %p56, %p57
      %s60 = sadd.s32 %s59, 1
      %p63 = scmp.eq.s32.totalorder %s25, 1
      %p64 = scmp.ne.s32.totalorder %s59, %s61
      %p65 = scmp.eq.s32.totalorder %s25, 0
      %p66 = por %p64, %p65
      %p67 = scmp.ne.s32.totalorder %s59, %s61
      %p68 = scmp.eq.s32.totalorder %s30, 1
      %p69 = por %p67, %p68
      %p70 = scmp.ne.s32.totalorder %s61, %s62
      %p71 = scmp.eq.s32.totalorder %s30, 0
      %p72 = por %p70, %p71
      %p73 = scmp.ne.s32.totalorder %s61, %s62
      %p74 = scmp.eq.s32.totalorder %s31, 1
      %p75 = por %p73, %p74
      %p77 = scmp.ne.s32.totalorder %s62, %s76
      %p78 = scmp.eq.s32.totalorder %s31, 0
      %p79 = por %p77, %p78
      %s81 = sadd.s32 %s80, 1
      %p84 = scmp.eq.s32.totalorder %s25, 1
      %p85 = scmp.ne.s32.totalorder %s80, %s82
      %p86 = scmp.eq.s32.totalorder %s25, 0
      %p87 = por %p85, %p86
      %p88 = scmp.ne.s32.totalorder %s80, %s82
      %p89 = scmp.eq.s32.totalorder %s30, 1
      %p90 = por %p88, %p89
      %p91 = scmp.ne.s32.totalorder %s82, %s83
      %p92 = scmp.eq.s32.totalorder %s30, 0
      %p93 = por %p91, %p92
      %p94 = scmp.ne.s32.totalorder %s82, %s83
      %p95 = scmp.eq.s32.totalorder %s31, 1
      %p96 = por %p94, %p95
      %p98 = scmp.ne.s32.totalorder %s83, %s97
      %p99 = scmp.eq.s32.totalorder %s31, 0
      %p100 = por %p98, %p99
      %s102 = sadd.s32 %s101, 1
      %p105 = scmp.eq.s32.totalorder %s25, 1
      %p106 = scmp.ne.s32.totalorder %s101, %s103
      %p107 = scmp.eq.s32.totalorder %s25, 0
      %p108 = por %p106, %p107
      %p109 = scmp.ne.s32.totalorder %s101, %s103
      %p110 = scmp.eq.s32.totalorder %s30, 1
      %p111 = por %p109, %p110
      %p112 = scmp.ne.s32.totalorder %s103, %s104
      %p113 = scmp.eq.s32.totalorder %s30, 0
      %p114 = por %p112, %p113
      %p115 = scmp.ne.s32.totalorder %s103, %s104
      %p116 = scmp.eq.s32.totalorder %s31, 1
      %p117 = por %p115, %p116
      %p119 = scmp.ne.s32.totalorder %s104, %s118
      %p120 = scmp.eq.s32.totalorder %s31, 0
      %p121 = por %p119, %p120
      %s123 = sadd.s32 %s122, 1
      %p126 = scmp.eq.s32.totalorder %s25, 1
      %p127 = scmp.ne.s32.totalorder %s122, %s124
      %p128 = scmp.eq.s32.totalorder %s25, 0
      %p129 = por %p127, %p128
      %p130 = scmp.ne.s32.totalorder %s122, %s124
      %p131 = scmp.eq.s32.totalorder %s30, 1
      %p132 = por %p130, %p131
      %p133 = scmp.ne.s32.totalorder %s124, %s125
      %p134 = scmp.eq.s32.totalorder %s30, 0
      %p135 = por %p133, %p134
      %p136 = scmp.ne.s32.totalorder %s124, %s125
      %p137 = scmp.eq.s32.totalorder %s31, 1
      %p138 = por %p136, %p137
      %p140 = scmp.ne.s32.totalorder %s125, %s139
      %p141 = scmp.eq.s32.totalorder %s31, 0
      %p142 = por %p140, %p141
      %s144 = sadd.s32 %s143, 1
      %p147 = scmp.eq.s32.totalorder %s25, 1
      %p148 = scmp.ne.s32.totalorder %s143, %s145
      %p149 = scmp.eq.s32.totalorder %s25, 0
      %p150 = por %p148, %p149
      %p151 = scmp.ne.s32.totalorder %s143, %s145
      %p152 = scmp.eq.s32.totalorder %s30, 1
      %p153 = por %p151, %p152
      %p154 = scmp.ne.s32.totalorder %s145, %s146
      %p155 = scmp.eq.s32.totalorder %s30, 0
      %p156 = por %p154, %p155
      %p157 = scmp.ne.s32.totalorder %s145, %s146
      %p158 = scmp.eq.s32.totalorder %s31, 1
      %p159 = por %p157, %p158
      %p161 = scmp.ne.s32.totalorder %s146, %s160
      %p162 = scmp.eq.s32.totalorder %s31, 0
      %p163 = por %p161, %p162
      %s165 = sadd.s32 %s164, 1
      %p168 = scmp.eq.s32.totalorder %s25, 1
      %p169 = scmp.ne.s32.totalorder %s164, %s166
      %p170 = scmp.eq.s32.totalorder %s25, 0
      %p171 = por %p169, %p170
      %p172 = scmp.ne.s32.totalorder %s164, %s166
      %p173 = scmp.eq.s32.totalorder %s30, 1
      %p174 = por %p172, %p173
      %p175 = scmp.ne.s32.totalorder %s166, %s167
      %p176 = scmp.eq.s32.totalorder %s30, 0
      %p177 = por %p175, %p176
      %p178 = scmp.ne.s32.totalorder %s166, %s167
      %p179 = scmp.eq.s32.totalorder %s31, 1
      %p180 = por %p178, %p179
      %p182 = scmp.ne.s32.totalorder %s167, %s181
      %p183 = scmp.eq.s32.totalorder %s31, 0
      %p184 = por %p182, %p183
      %s186 = sadd.s32 %s185, 1
      %p189 = scmp.eq.s32.totalorder %s25, 1
      %p190 = scmp.ne.s32.totalorder %s185, %s187
      %p191 = scmp.eq.s32.totalorder %s25, 0
      %p192 = por %p190, %p191
      %p193 = scmp.ne.s32.totalorder %s185, %s187
      %p194 = scmp.eq.s32.totalorder %s30, 1
      %p195 = por %p193, %p194
      %p196 = scmp.ne.s32.totalorder %s187, %s188
      %p197 = scmp.eq.s32.totalorder %s30, 0
      %p198 = por %p196, %p197
      %p199 = scmp.ne.s32.totalorder %s187, %s188
      %p200 = scmp.eq.s32.totalorder %s31, 1
      %p201 = por %p199, %p200
      %p203 = scmp.ne.s32.totalorder %s188, %s202
      %p204 = scmp.eq.s32.totalorder %s31, 0
      %p205 = por %p203, %p204
      %s207 = sadd.s32 %s206, 1
      %p210 = scmp.eq.s32.totalorder %s25, 1
      %p211 = scmp.ne.s32.totalorder %s206, %s208
      %p212 = scmp.eq.s32.totalorder %s25, 0
      %p213 = por %p211, %p212
      %p214 = scmp.ne.s32.totalorder %s206, %s208
      %p215 = scmp.eq.s32.totalorder %s30, 1
      %p216 = por %p214, %p215
      %p217 = scmp.ne.s32.totalorder %s208, %s209
      %p218 = scmp.eq.s32.totalorder %s30, 0
      %p219 = por %p217, %p218
      %p220 = scmp.ne.s32.totalorder %s208, %s209
      %p221 = scmp.eq.s32.totalorder %s31, 1
      %p222 = por %p220, %p221
      %p224 = scmp.ne.s32.totalorder %s209, %s223
      %p225 = scmp.eq.s32.totalorder %s31, 0
      %p226 = por %p224, %p225
      %s228 = sadd.s32 %s227, 1
      %p231 = scmp.eq.s32.totalorder %s25, 1
      %p232 = scmp.ne.s32.totalorder %s227, %s229
      %p233 = scmp.eq.s32.totalorder %s25, 0
      %p234 = por %p232, %p233
      %p235 = scmp.ne.s32.totalorder %s227, %s229
      %p236 = scmp.eq.s32.totalorder %s30, 1
      %p237 = por %p235, %p236
      %p238 = scmp.ne.s32.totalorder %s229, %s230
      %p239 = scmp.eq.s32.totalorder %s30, 0
      %p240 = por %p238, %p239
      %p241 = scmp.ne.s32.totalorder %s229, %s230
      %p242 = scmp.eq.s32.totalorder %s31, 1
      %p243 = por %p241, %p242
      %p245 = scmp.ne.s32.totalorder %s230, %s244
      %p246 = scmp.eq.s32.totalorder %s31, 0
      %p247 = por %p245, %p246
      %s248 = ssub.s32 %s25, %s32
      %p249 = scmp.eq.s32.totalorder %s248, 0
      %s251 = sadd.s32 %s250, 1
      %s252 = scalar_select %p249, %s250, %s251
      %p255 = pneg %p249
      %p256 = scmp.eq.s32.totalorder %s25, 1
      %p257 = por %p255, %p256
      %p258 = scmp.ne.s32.totalorder %s250, %s253
      %p259 = scmp.eq.s32.totalorder %s25, 0
      %p260 = por %p258, %p259
      %p261 = scmp.ne.s32.totalorder %s250, %s253
      %p262 = scmp.eq.s32.totalorder %s30, 1
      %p263 = por %p261, %p262
      %p264 = scmp.ne.s32.totalorder %s253, %s254
      %p265 = scmp.eq.s32.totalorder %s30, 0
      %p266 = por %p264, %p265
      %p267 = scmp.ne.s32.totalorder %s253, %s254
      %p268 = scmp.eq.s32.totalorder %s31, 1
      %p269 = por %p267, %p268
      %p271 = scmp.ne.s32.totalorder %s254, %s270
      %p272 = scmp.eq.s32.totalorder %s31, 0
      %p273 = por %p271, %p272
      %p274 = scmp.le.s32.totalorder 1, %s25
      %p275 = scmp.lt.s32.totalorder %s25, 3
      %p276 = pnand %p274, %p275
      %p277 = pneg %p276
      // Predicated region
      $region9: #{tpu_custom_call.1} parent=5 // pred_check
        _
      $region10: #{tpu_custom_call.1} parent=5 // pred_check_branch
        %279 = sbr.rel (%p276) target = $region12
      $region11: #{tpu_custom_call.1} parent=5 // pred_region
        %s280 = ssub.s32 %s25, 1
        // Predicated region
        $region13: #{tpu_custom_call.1} parent=11 // pred_check
          %p281 = pneg %p72
        $region14: #{tpu_custom_call.1} parent=11 // pred_check_branch
          %283 = sbr.rel (%p281) target = $region16
        $region15: #{tpu_custom_call.1} parent=11 // pred_region
          %s285 = ssub.s32 128, 128
          %286 = vsyncadd [#allocation6], %s285
          %s288 = sshll.u32 [#allocation5], 4
          %s289 = int_to_ptr.vmem [resolvable:$true] %s288
          %291 = dma.hbm_to_vmem [thread:$0]  %s1, 128, %s289, [#allocation6]
        $region16: #{tpu_custom_call.1} parent=11 // pred_fallthru
          _
        // Predicated region
        $region17: #{tpu_custom_call.1} parent=11 // pred_check
          %p292 = pneg %p93
        $region18: #{tpu_custom_call.1} parent=11 // pred_check_branch
          %294 = sbr.rel (%p292) target = $region20
        $region19: #{tpu_custom_call.1} parent=11 // pred_region
          %s296 = ssub.s32 512, 512
          %297 = vsyncadd [#allocation6], %s296
          %s298 = sshll.u32 [#allocation7], 4
          %s299 = int_to_ptr.vmem [resolvable:$true] %s298
          %304 = dma.hbm_to_vmem [thread:$0]  %s2, 512, %s299, [#allocation6], 128, 128, 8
        $region20: #{tpu_custom_call.1} parent=11 // pred_fallthru
          _
        // Predicated region
        $region21: #{tpu_custom_call.1} parent=11 // pred_check
          %p305 = pneg %p114
        $region22: #{tpu_custom_call.1} parent=11 // pred_check_branch
          %307 = sbr.rel (%p305) target = $region24
        $region23: #{tpu_custom_call.1} parent=11 // pred_region
          %s309 = ssub.s32 256, 256
          %310 = vsyncadd [#allocation9], %s309
          %s311 = sshll.u32 [#allocation8], 4
          %s312 = int_to_ptr.vmem [resolvable:$true] %s311
          %317 = dma.hbm_to_vmem [thread:$0]  %s3, 256, %s312, [#allocation9], 128, 128, 8
        $region24: #{tpu_custom_call.1} parent=11 // pred_fallthru
          _
        // Predicated region
        $region25: #{tpu_custom_call.1} parent=11 // pred_check
          %p318 = pneg %p135
        $region26: #{tpu_custom_call.1} parent=11 // pred_check_branch
          %320 = sbr.rel (%p318) target = $region28
        $region27: #{tpu_custom_call.1} parent=11 // pred_region
          _
        $region28: #{tpu_custom_call.1} parent=11 // pred_fallthru
          _
        // Predicated region
        $region29: #{tpu_custom_call.1} parent=11 // pred_check
          %p321 = pneg %p156
        $region30: #{tpu_custom_call.1} parent=11 // pred_check_branch
          %323 = sbr.rel (%p321) target = $region32
        $region31: #{tpu_custom_call.1} parent=11 // pred_region
          _
        $region32: #{tpu_custom_call.1} parent=11 // pred_fallthru
          _
        // Predicated region
        $region33: #{tpu_custom_call.1} parent=11 // pred_check
          %p324 = pneg %p177
        $region34: #{tpu_custom_call.1} parent=11 // pred_check_branch
          %326 = sbr.rel (%p324) target = $region36
        $region35: #{tpu_custom_call.1} parent=11 // pred_region
          _
        $region36: #{tpu_custom_call.1} parent=11 // pred_fallthru
          _
        // Predicated region
        $region37: #{tpu_custom_call.1} parent=11 // pred_check
          %p327 = pneg %p198
        $region38: #{tpu_custom_call.1} parent=11 // pred_check_branch
          %329 = sbr.rel (%p327) target = $region40
        $region39: #{tpu_custom_call.1} parent=11 // pred_region
          %s331 = ssub.s32 2048, 2048
          %332 = vsyncadd [#allocation9], %s331
          %s333 = sshll.u32 [#allocation10], 4
          %s334 = int_to_ptr.vmem [resolvable:$true] %s333
          %339 = dma.hbm_to_vmem [thread:$0]  %s7, 2048, %s334, [#allocation9], 128, 128, 8
        $region40: #{tpu_custom_call.1} parent=11 // pred_fallthru
          _
        // Predicated region
        $region41: #{tpu_custom_call.1} parent=11 // pred_check
          %p340 = pneg %p219
        $region42: #{tpu_custom_call.1} parent=11 // pred_check_branch
          %342 = sbr.rel (%p340) target = $region44
        $region43: #{tpu_custom_call.1} parent=11 // pred_region
          _
        $region44: #{tpu_custom_call.1} parent=11 // pred_fallthru
          _
        // Predicated region
        $region45: #{tpu_custom_call.1} parent=11 // pred_check
          %p343 = pneg %p240
        $region46: #{tpu_custom_call.1} parent=11 // pred_check_branch
          %345 = sbr.rel (%p343) target = $region48
        $region47: #{tpu_custom_call.1} parent=11 // pred_region
          %s347 = ssub.s32 1024, 1024
          %348 = vsyncadd [#allocation12], %s347
          %s349 = sshll.u32 [#allocation11], 4
          %s350 = int_to_ptr.vmem [resolvable:$true] %s349
          %355 = dma.hbm_to_vmem [thread:$0]  %s9, 1024, %s350, [#allocation12], 128, 128, 8
        $region48: #{tpu_custom_call.1} parent=11 // pred_fallthru
          _
      $region12: #{tpu_custom_call.1} parent=5 // pred_fallthru
        _
      %p356 = scmp.lt.s32.totalorder %s25, 2
      // Predicated region
      $region49: #{tpu_custom_call.1} parent=5 // pred_check
        %p357 = pneg %p356
      $region50: #{tpu_custom_call.1} parent=5 // pred_check_branch
        %359 = sbr.rel (%p357) target = $region52
      $region51: #{tpu_custom_call.1} parent=5 // pred_region
        // Predicated region
        $region53: #{tpu_custom_call.1} parent=51 // pred_check
          %p360 = pneg %p45
        $region54: #{tpu_custom_call.1} parent=51 // pred_check_branch
          %362 = sbr.rel (%p360) target = $region56
        $region55: #{tpu_custom_call.1} parent=51 // pred_region
          %s363 = sand.u32 %s35, 1
          %s364 = scalar_lea.sflag [#allocation3], %s363
          %s365 = sand.u32 %s35, 1
          %s366 = smul.addr %s365, 16
          %s367 = scalar_lea.vmem [#allocation2], %s366
          %s369 = ssub.s32 256, 256
          %370 = vsyncadd %s364, %s369
          %s371 = smul.addr %s25, 2
          %s372 = smul.addr %s371, 128
          %s373 = scalar_lea.hbm %s0, %s372
          %s374 = sshll.u32 %s367, 4
          %s375 = int_to_ptr.vmem [resolvable:$true] %s374
          %380 = dma.hbm_to_vmem [thread:$0]  %s373, 256, %s375, %s364, 128, 128, 8
        $region56: #{tpu_custom_call.1} parent=51 // pred_fallthru
          _
      $region52: #{tpu_custom_call.1} parent=5 // pred_fallthru
        _
      %p381 = scmp.le.s32.totalorder 1, %s25
      %p382 = scmp.lt.s32.totalorder %s25, 3
      %p383 = pnand %p381, %p382
      %p384 = pneg %p383
      // Predicated region
      $region57: #{tpu_custom_call.1} parent=5 // pred_check
        _
      $region58: #{tpu_custom_call.1} parent=5 // pred_check_branch
        %386 = sbr.rel (%p383) target = $region60
      $region59: #{tpu_custom_call.1} parent=5 // pred_region
        %s387 = ssub.s32 %s25, 1
        %s388 = sand.u32 %s38, 1
        %s389 = scalar_lea.sflag [#allocation3], %s388
        %s390 = sand.u32 %s38, 1
        %s391 = smul.addr %s390, 16
        %s392 = scalar_lea.vmem [#allocation2], %s391
        // Predicated region
        $region61: #{tpu_custom_call.1} parent=59 // pred_check
          %p393 = pneg %p51
        $region62: #{tpu_custom_call.1} parent=59 // pred_check_branch
          %395 = sbr.rel (%p393) target = $region64
        $region63: #{tpu_custom_call.1} parent=59 // pred_region
          %396 = dma.done %s389, 256
        $region64: #{tpu_custom_call.1} parent=59 // pred_fallthru
          _
        // Predicated region
        $region65: #{tpu_custom_call.1} parent=59 // pred_check
          %p397 = pneg %p72
        $region66: #{tpu_custom_call.1} parent=59 // pred_check_branch
          %399 = sbr.rel (%p397) target = $region68
        $region67: #{tpu_custom_call.1} parent=59 // pred_region
          %400 = dma.done [#allocation6], 128
        $region68: #{tpu_custom_call.1} parent=59 // pred_fallthru
          _
        // Predicated region
        $region69: #{tpu_custom_call.1} parent=59 // pred_check
          %p401 = pneg %p93
        $region70: #{tpu_custom_call.1} parent=59 // pred_check_branch
          %403 = sbr.rel (%p401) target = $region72
        $region71: #{tpu_custom_call.1} parent=59 // pred_region
          %404 = dma.done [#allocation6], 512
        $region72: #{tpu_custom_call.1} parent=59 // pred_fallthru
          _
        // Predicated region
        $region73: #{tpu_custom_call.1} parent=59 // pred_check
          %p405 = pneg %p114
        $region74: #{tpu_custom_call.1} parent=59 // pred_check_branch
          %407 = sbr.rel (%p405) target = $region76
        $region75: #{tpu_custom_call.1} parent=59 // pred_region
          %408 = dma.done [#allocation9], 256
        $region76: #{tpu_custom_call.1} parent=59 // pred_fallthru
          _
        // Predicated region
        $region77: #{tpu_custom_call.1} parent=59 // pred_check
          %p409 = pneg %p198
        $region78: #{tpu_custom_call.1} parent=59 // pred_check_branch
          %411 = sbr.rel (%p409) target = $region80
        $region79: #{tpu_custom_call.1} parent=59 // pred_region
          %412 = dma.done [#allocation9], 2048
        $region80: #{tpu_custom_call.1} parent=59 // pred_fallthru
          _
        // Predicated region
        $region81: #{tpu_custom_call.1} parent=59 // pred_check
          %p413 = pneg %p240
        $region82: #{tpu_custom_call.1} parent=59 // pred_check_branch
          %415 = sbr.rel (%p413) target = $region84
        $region83: #{tpu_custom_call.1} parent=59 // pred_region
          %416 = dma.done [#allocation12], 1024
        $region84: #{tpu_custom_call.1} parent=59 // pred_fallthru
          _
        %s417 = sand.u32 %s38, 1
        %s418 = scalar_lea.sflag [#allocation3], %s417
        %s419 = sand.u32 %s38, 1
        %s420 = smul.addr %s419, 16
        %s421 = scalar_lea.vmem [#allocation2], %s420
        %p422 = pneg %p51
        %p423 = pneg %p48
        %p424 = pneg %p72
        %p425 = pneg %p69
        %p426 = pneg %p93
        %p427 = pneg %p90
        %p428 = pneg %p114
        %p429 = pneg %p111
        %p430 = pneg %p135
        %p431 = pneg %p132
        %p432 = pneg %p156
        %p433 = pneg %p153
        %p434 = pneg %p177
        %p435 = pneg %p174
        %p436 = pneg %p198
        %p437 = pneg %p195
        %p438 = pneg %p219
        %p439 = pneg %p216
        %p440 = pneg %p240
        %p441 = pneg %p237
        %p442 = pneg %p266
        %p443 = pneg %p263
        %s444 = sand.u32 %s253, 1
        %s445 = scalar_lea.sflag [#allocation4], %s444
        %s446 = sand.u32 %s253, 1
        %s447 = smul.addr %s446, 8
        %s448 = scalar_lea.vmem [#allocation13], %s447
        %v449 = vld [vmem:[%s392] sm:$0xff]
        %v450 = vld [vmem:[%s392 + $0x8] sm:$0xff]
        %v451 = vld [vmem:[#allocation5] sm:$0xff]
        %v452 = vld [vmem:[#allocation8] sm:$0x1]
        %v453 = vld [vmem:[#allocation7] sm:$0xff]
        %v454 = vld [vmem:[#allocation7 + $0x8] sm:$0xff]
        %v455 = vld [vmem:[#allocation7 + $0x10] sm:$0xff]
        %v456 = vld [vmem:[#allocation7 + $0x18] sm:$0xff]
        %v457 = vlaneseq
        %v458 = vshrl.u32 %v457, 7
        %v459 = vsub.s32 0, %v458
        %v460 = vrot.slane %v452, %v459
        %vm461 = vcmask 261120
        %v463 = vsel %vm461, %v449, 0
        %v466 = vsel %vm461, %v450, 0
        %468 = vmatprep.subr.mxu0 0.0
        %469 = vmatpush1.msra.mxu0 %v453
        %470 = vmatprep.subr.mxu0 0.0
        %471 = vmatpush1.msra.mxu0 %v454
        %472 = vmatprep.subr.mxu0 0.0
        %473 = vmatpush1.msra.mxu0 %v455
        %474 = vmatprep.subr.mxu0 0.0
        %475 = vmatpush1.msra.mxu0 %v456
        %476 = vmatprep.subr.mxu0 0.0
        %477 = vmatpush1.msra.mxu0 0.0
        %478 = vmatprep.subr.mxu0 0.0
        %479 = vmatpush1.msra.mxu0 0.0
        %480 = vmatprep.subr.mxu0 0.0
        %481 = vmatpush1.msra.mxu0 0.0
        %482 = vmatprep.subr.mxu0 0.0
        %483 = vmatpush1.msra.mxu0 0.0
        %484 = vmatprep.subr.mxu0 0.0
        %485 = vmatpush1.msra.mxu0 0.0
        %486 = vmatprep.subr.mxu0 0.0
        %487 = vmatpush1.msra.mxu0 0.0
        %488 = vmatprep.subr.mxu0 0.0
        %489 = vmatpush1.msra.mxu0 0.0
        %490 = vmatprep.subr.mxu0 0.0
        %491 = vmatpush1.msra.mxu0 0.0
        %492 = vmatprep.subr.mxu0 0.0
        %493 = vmatpush1.msra.mxu0 0.0
        %494 = vmatprep.subr.mxu0 0.0
        %495 = vmatpush1.msra.mxu0 0.0
        %496 = vmatprep.subr.mxu0 0.0
        %497 = vmatpush1.msra.mxu0 0.0
        %498 = vmatprep.subr.mxu0 0.0
        %499 = vmatpush1.msra.mxu0 0.0
        %500 = vmatprep.subr.mxu0 0.0
        %501 = vmatpush1.msra.mxu0 0.0
        %502 = vmatprep.subr.mxu0 0.0
        %503 = vmatpush1.msra.mxu0 0.0
        %504 = vmatprep.subr.mxu0 0.0
        %505 = vmatpush1.msra.mxu0 0.0
        %506 = vmatprep.subr.mxu0 0.0
        %507 = vmatpush1.msra.mxu0 0.0
        %508 = vmatprep.subr.mxu0 0.0
        %509 = vmatpush1.msra.mxu0 0.0
        %510 = vmatprep.subr.mxu0 0.0
        %511 = vmatpush1.msra.mxu0 0.0
        %512 = vmatprep.subr.mxu0 0.0
        %513 = vmatpush1.msra.mxu0 0.0
        %514 = vmatprep.subr.mxu0 0.0
        %515 = vmatpush1.msra.mxu0 0.0
        %516 = vmatprep.subr.mxu0 0.0
        %517 = vmatpush1.msra.mxu0 0.0
        %518 = vmatprep.subr.mxu0 0.0
        %519 = vmatpush1.msra.mxu0 0.0
        %520 = vmatprep.subr.mxu0 0.0
        %521 = vmatpush1.msra.mxu0 0.0
        %522 = vmatprep.subr.mxu0 0.0
        %523 = vmatpush1.msra.mxu0 0.0
        %524 = vmatprep.subr.mxu0 0.0
        %525 = vmatpush1.msra.mxu0 0.0
        %526 = vmatprep.subr.mxu0 0.0
        %527 = vmatpush1.msra.mxu0 0.0
        %528 = vmatprep.subr.mxu0 0.0
        %529 = vmatpush1.msra.mxu0 0.0
        %530 = vmatprep.subr.mxu0 0.0
        %531 = vmatpush1.msra.mxu0 0.0
        %532 = vmatprep.mubr.f32.mxu0 0.0
        %533 = vmatmul.mubr.f32.gmra.mrb[0].mxu0 %v463
        %v534 = vpop.f32.mrb[0].mxu0
        %v535 = vadd.f32 %v460, %v534
        %v536 = vpop.f32.mrb[0].mxu0
        %537 = vmatprep.mubr.f32.mxu0 0.0
        %538 = vmatmul.mubr.f32.gmra.mrb[0].mxu0 %v466
        %v539 = vpop.f32.mrb[0].mxu0
        %v540 = vadd.f32 %v460, %v539
        %v541 = vpop.f32.mrb[0].mxu0
        %542 = vdwg.mxu0
        %v543 = vld [vmem:[#allocation8 + $0x4] sm:$0x1]
        %v544 = vld [vmem:[#allocation8 + $0x5] sm:$0x1]
        %v545 = vld [vmem:[#allocation8 + $0x6] sm:$0x1]
        %v546 = vld [vmem:[#allocation8 + $0x7] sm:$0x1]
        %v547 = vld [vmem:[#allocation8 + $0x8] sm:$0x1]
        %v548 = vld [vmem:[#allocation8 + $0x9] sm:$0x1]
        %vm549 = vcmask 523264
        %v550 = vsel %vm549, %v535, 0.0
        %551 = vadd.xlane.f32.xlu0 %v550
        %v552 = vpop.xlane.xlu0 %551
        %v553 = vsel %vm549, %v540, 0.0
        %554 = vadd.xlane.f32.xlu0 %v553
        %v555 = vpop.xlane.xlu0 %554
        %v556 = vrcp.pop 64.0
        %v557 = vmul.f32 %v552, %v556
        %v558 = vmul.f32 %v555, %v556
        %v559 = vsub.f32 %v535, %v557
        %v560 = vsub.f32 %v540, %v558
        %v561 = vmul.f32 %v559, %v559
        %v562 = vmul.f32 %v560, %v560
        %v563 = vsel %vm549, %v561, 0.0
        %564 = vadd.xlane.f32.xlu0 %v563
        %v565 = vpop.xlane.xlu0 %564
        %v566 = vsel %vm549, %v562, 0.0
        %567 = vadd.xlane.f32.xlu0 %v566
        %v568 = vpop.xlane.xlu0 %567
        %v569 = vmul.f32 %v565, %v556
        %v570 = vmul.f32 %v568, %v556
        %v571 = vadd.f32 %v569, 1e-05
        %v572 = vadd.f32 %v570, 1e-05
        %v573 = vrsqrt.pop %v571
        %v574 = vrsqrt.pop %v572
        %v575 = vmul.f32 %v559, %v573
        %v576 = vmul.f32 %v560, %v574
        %v577 = vlaneseq
        %v578 = vshrl.u32 %v577, 7
        %v579 = vsub.s32 0, %v578
        %v580 = vrot.slane %v543, %v579
        %v581 = vmul.f32 %v575, %v580
        %v582 = vmul.f32 %v576, %v580
        %v583 = vlaneseq
        %v584 = vshrl.u32 %v583, 7
        %v585 = vsub.s32 0, %v584
        %v586 = vrot.slane %v544, %v585
        %v587 = vadd.f32 %v581, %v586
        %v588 = vadd.f32 %v582, %v586
        %v589 = vsel %vm549, %v451, 0.0
        %590 = vadd.xlane.f32.xlu0 %v589
        %v591 = vpop.xlane.xlu0 %590
        %v592 = vmul.f32 %v591, %v556
        %v593 = vsub.f32 %v451, %v592
        %v594 = vmul.f32 %v593, %v593
        %v595 = vsel %vm549, %v594, 0.0
        %596 = vadd.xlane.f32.xlu0 %v595
        %v597 = vpop.xlane.xlu0 %596
        %v598 = vmul.f32 %v597, %v556
        %v599 = vadd.f32 %v598, 1e-05
        %v600 = vrsqrt.pop %v599
        %v601 = vmul.f32 %v593, %v600
        %v602 = vlaneseq
        %v603 = vshrl.u32 %v602, 7
        %v604 = vsub.s32 0, %v603
        %v605 = vrot.slane %v545, %v604
        %v606 = vmul.f32 %v601, %v605
        %v607 = vlaneseq
        %v608 = vshrl.u32 %v607, 7
        %v609 = vsub.s32 0, %v608
        %v610 = vrot.slane %v546, %v609
        %v611 = vadd.f32 %v606, %v610
        %v612 = vld [vmem:[%s4] sm:$0xff]
        %v613 = vld [vmem:[%s4 + $0x8] sm:$0xff]
        %v614 = vld [vmem:[%s4 + $0x10] sm:$0xff]
        %v615 = vld [vmem:[%s4 + $0x18] sm:$0xff]
        %v616 = vld [vmem:[%s4 + $0x20] sm:$0xff]
        %v617 = vld [vmem:[%s4 + $0x28] sm:$0xff]
        %v618 = vld [vmem:[%s4 + $0x30] sm:$0xff]
        %v619 = vld [vmem:[%s4 + $0x38] sm:$0xff]
        %v621 = vsel %vm549, %v611, 0
        %623 = vmatprep.subr.mxu0 0.0
        %624 = vmatpush1.msra.mxu0 %v612
        %625 = vmatprep.subr.mxu0 0.0
        %626 = vmatpush1.msra.mxu0 %v613
        %627 = vmatprep.subr.mxu0 0.0
        %628 = vmatpush1.msra.mxu0 %v614
        %629 = vmatprep.subr.mxu0 0.0
        %630 = vmatpush1.msra.mxu0 %v615
        %631 = vmatprep.subr.mxu0 0.0
        %632 = vmatpush1.msra.mxu0 %v616
        %633 = vmatprep.subr.mxu0 0.0
        %634 = vmatpush1.msra.mxu0 %v617
        %635 = vmatprep.subr.mxu0 0.0
        %636 = vmatpush1.msra.mxu0 %v618
        %637 = vmatprep.subr.mxu0 0.0
        %638 = vmatpush1.msra.mxu0 %v619
        %639 = vmatprep.subr.mxu0 0.0
        %640 = vmatpush1.msra.mxu0 0.0
        %641 = vmatprep.subr.mxu0 0.0
        %642 = vmatpush1.msra.mxu0 0.0
        %643 = vmatprep.subr.mxu0 0.0
        %644 = vmatpush1.msra.mxu0 0.0
        %645 = vmatprep.subr.mxu0 0.0
        %646 = vmatpush1.msra.mxu0 0.0
        %647 = vmatprep.subr.mxu0 0.0
        %648 = vmatpush1.msra.mxu0 0.0
        %649 = vmatprep.subr.mxu0 0.0
        %650 = vmatpush1.msra.mxu0 0.0
        %651 = vmatprep.subr.mxu0 0.0
        %652 = vmatpush1.msra.mxu0 0.0
        %653 = vmatprep.subr.mxu0 0.0
        %654 = vmatpush1.msra.mxu0 0.0
        %655 = vmatprep.subr.mxu0 0.0
        %656 = vmatpush1.msra.mxu0 0.0
        %657 = vmatprep.subr.mxu0 0.0
        %658 = vmatpush1.msra.mxu0 0.0
        %659 = vmatprep.subr.mxu0 0.0
        %660 = vmatpush1.msra.mxu0 0.0
        %661 = vmatprep.subr.mxu0 0.0
        %662 = vmatpush1.msra.mxu0 0.0
        %663 = vmatprep.subr.mxu0 0.0
        %664 = vmatpush1.msra.mxu0 0.0
        %665 = vmatprep.subr.mxu0 0.0
        %666 = vmatpush1.msra.mxu0 0.0
        %667 = vmatprep.subr.mxu0 0.0
        %668 = vmatpush1.msra.mxu0 0.0
        %669 = vmatprep.subr.mxu0 0.0
        %670 = vmatpush1.msra.mxu0 0.0
        %671 = vmatprep.subr.mxu0 0.0
        %672 = vmatpush1.msra.mxu0 0.0
        %673 = vmatprep.subr.mxu0 0.0
        %674 = vmatpush1.msra.mxu0 0.0
        %675 = vmatprep.subr.mxu0 0.0
        %676 = vmatpush1.msra.mxu0 0.0
        %677 = vmatprep.subr.mxu0 0.0
        %678 = vmatpush1.msra.mxu0 0.0
        %679 = vmatprep.subr.mxu0 0.0
        %680 = vmatpush1.msra.mxu0 0.0
        %681 = vmatprep.subr.mxu0 0.0
        %682 = vmatpush1.msra.mxu0 0.0
        %683 = vmatprep.subr.mxu0 0.0
        %684 = vmatpush1.msra.mxu0 0.0
        %685 = vmatprep.subr.mxu0 0.0
        %686 = vmatpush1.msra.mxu0 0.0
        %687 = vmatprep.mubr.f32.mxu0 0.0
        %688 = vmatmul.mubr.f32.gmra.mrb[0].mxu0 %v621
        %v689 = vpop.f32.mrb[0].mxu0
        %v690 = vadd.f32 0.0, %v689
        %v691 = vpop.f32.mrb[0].mxu0
        %692 = vdwg.mxu0
        %v693 = vld [vmem:[%s5] sm:$0xff]
        %v694 = vld [vmem:[%s5 + $0x8] sm:$0xff]
        %v695 = vld [vmem:[%s5 + $0x10] sm:$0xff]
        %v696 = vld [vmem:[%s5 + $0x18] sm:$0xff]
        %v697 = vld [vmem:[%s5 + $0x20] sm:$0xff]
        %v698 = vld [vmem:[%s5 + $0x28] sm:$0xff]
        %v699 = vld [vmem:[%s5 + $0x30] sm:$0xff]
        %v700 = vld [vmem:[%s5 + $0x38] sm:$0xff]
        %v702 = vsel %vm549, %v587, 0
        %v705 = vsel %vm549, %v588, 0
        %707 = vmatprep.subr.mxu0 0.0
        %708 = vmatpush1.msra.mxu0 %v693
        %709 = vmatprep.subr.mxu0 0.0
        %710 = vmatpush1.msra.mxu0 %v694
        %711 = vmatprep.subr.mxu0 0.0
        %712 = vmatpush1.msra.mxu0 %v695
        %713 = vmatprep.subr.mxu0 0.0
        %714 = vmatpush1.msra.mxu0 %v696
        %715 = vmatprep.subr.mxu0 0.0
        %716 = vmatpush1.msra.mxu0 %v697
        %717 = vmatprep.subr.mxu0 0.0
        %718 = vmatpush1.msra.mxu0 %v698
        %719 = vmatprep.subr.mxu0 0.0
        %720 = vmatpush1.msra.mxu0 %v699
        %721 = vmatprep.subr.mxu0 0.0
        %722 = vmatpush1.msra.mxu0 %v700
        %723 = vmatprep.subr.mxu0 0.0
        %724 = vmatpush1.msra.mxu0 0.0
        %725 = vmatprep.subr.mxu0 0.0
        %726 = vmatpush1.msra.mxu0 0.0
        %727 = vmatprep.subr.mxu0 0.0
        %728 = vmatpush1.msra.mxu0 0.0
        %729 = vmatprep.subr.mxu0 0.0
        %730 = vmatpush1.msra.mxu0 0.0
        %731 = vmatprep.subr.mxu0 0.0
        %732 = vmatpush1.msra.mxu0 0.0
        %733 = vmatprep.subr.mxu0 0.0
        %734 = vmatpush1.msra.mxu0 0.0
        %735 = vmatprep.subr.mxu0 0.0
        %736 = vmatpush1.msra.mxu0 0.0
        %737 = vmatprep.subr.mxu0 0.0
        %738 = vmatpush1.msra.mxu0 0.0
        %739 = vmatprep.subr.mxu0 0.0
        %740 = vmatpush1.msra.mxu0 0.0
        %741 = vmatprep.subr.mxu0 0.0
        %742 = vmatpush1.msra.mxu0 0.0
        %743 = vmatprep.subr.mxu0 0.0
        %744 = vmatpush1.msra.mxu0 0.0
        %745 = vmatprep.subr.mxu0 0.0
        %746 = vmatpush1.msra.mxu0 0.0
        %747 = vmatprep.subr.mxu0 0.0
        %748 = vmatpush1.msra.mxu0 0.0
        %749 = vmatprep.subr.mxu0 0.0
        %750 = vmatpush1.msra.mxu0 0.0
        %751 = vmatprep.subr.mxu0 0.0
        %752 = vmatpush1.msra.mxu0 0.0
        %753 = vmatprep.subr.mxu0 0.0
        %754 = vmatpush1.msra.mxu0 0.0
        %755 = vmatprep.subr.mxu0 0.0
        %756 = vmatpush1.msra.mxu0 0.0
        %757 = vmatprep.subr.mxu0 0.0
        %758 = vmatpush1.msra.mxu0 0.0
        %759 = vmatprep.subr.mxu0 0.0
        %760 = vmatpush1.msra.mxu0 0.0
        %761 = vmatprep.subr.mxu0 0.0
        %762 = vmatpush1.msra.mxu0 0.0
        %763 = vmatprep.subr.mxu0 0.0
        %764 = vmatpush1.msra.mxu0 0.0
        %765 = vmatprep.subr.mxu0 0.0
        %766 = vmatpush1.msra.mxu0 0.0
        %767 = vmatprep.subr.mxu0 0.0
        %768 = vmatpush1.msra.mxu0 0.0
        %769 = vmatprep.subr.mxu0 0.0
        %770 = vmatpush1.msra.mxu0 0.0
        %771 = vmatprep.mubr.f32.mxu0 0.0
        %772 = vmatmul.mubr.f32.gmra.mrb[0].mxu0 %v702
        %v773 = vpop.f32.mrb[0].mxu0
        %v774 = vadd.f32 0.0, %v773
        %v775 = vpop.f32.mrb[0].mxu0
        %776 = vmatprep.mubr.f32.mxu0 0.0
        %777 = vmatmul.mubr.f32.gmra.mrb[0].mxu0 %v705
        %v778 = vpop.f32.mrb[0].mxu0
        %v779 = vadd.f32 0.0, %v778
        %v780 = vpop.f32.mrb[0].mxu0
        %781 = vmatprep.mubr.f32.mxu0 0.0
        %782 = vmatmul.mubr.f32.gmra.mrb[0].mxu0 %v621
        %v783 = vpop.f32.mrb[0].mxu0
        %v784 = vadd.f32 0.0, %v783
        %v785 = vpop.f32.mrb[0].mxu0
        %786 = vdwg.mxu0
        %vm787 = vcmask 130048
        %v789 = vsel %vm787, %v690, 0
        %v792 = vsel %vm787, %v774, 0
        %v795 = vsel %vm787, %v779, 0
        %v798 = vsel %vm787, %v784, 0
        %800 = vmatprep.subr.mxu0 0.0
        %801 = vmatpush1.xpose.msra.mxu0 %v792
        %802 = vmatprep.subr.mxu0 0.0
        %803 = vmatpush1.xpose.msra.mxu0 %v795
        %804 = vmatprep.subr.mxu0 0.0
        %805 = vmatpush1.xpose.msra.mxu0 %v798
        %806 = vmatprep.subr.mxu0 0.0
        %807 = vmatpush1.xpose.msra.mxu0 0.0
        %808 = vmatprep.subr.mxu0 0.0
        %809 = vmatpush1.xpose.msra.mxu0 0.0
        %810 = vmatprep.subr.mxu0 0.0
        %811 = vmatpush1.xpose.msra.mxu0 0.0
        %812 = vmatprep.subr.mxu0 0.0
        %813 = vmatpush1.xpose.msra.mxu0 0.0
        %814 = vmatprep.subr.mxu0 0.0
        %815 = vmatpush1.xpose.msra.mxu0 0.0
        %816 = vmatprep.subr.mxu0 0.0
        %817 = vmatpush1.xpose.msra.mxu0 0.0
        %818 = vmatprep.subr.mxu0 0.0
        %819 = vmatpush1.xpose.msra.mxu0 0.0
        %820 = vmatprep.subr.mxu0 0.0
        %821 = vmatpush1.xpose.msra.mxu0 0.0
        %822 = vmatprep.subr.mxu0 0.0
        %823 = vmatpush1.xpose.msra.mxu0 0.0
        %824 = vmatprep.subr.mxu0 0.0
        %825 = vmatpush1.xpose.msra.mxu0 0.0
        %826 = vmatprep.subr.mxu0 0.0
        %827 = vmatpush1.xpose.msra.mxu0 0.0
        %828 = vmatprep.subr.mxu0 0.0
        %829 = vmatpush1.xpose.msra.mxu0 0.0
        %830 = vmatprep.subr.mxu0 0.0
        %831 = vmatpush1.xpose.msra.mxu0 0.0
        %832 = vmatprep.subr.mxu0 0.0
        %833 = vmatpush1.xpose.msra.mxu0 0.0
        %834 = vmatprep.subr.mxu0 0.0
        %835 = vmatpush1.xpose.msra.mxu0 0.0
        %836 = vmatprep.subr.mxu0 0.0
        %837 = vmatpush1.xpose.msra.mxu0 0.0
        %838 = vmatprep.subr.mxu0 0.0
        %839 = vmatpush1.xpose.msra.mxu0 0.0
        %840 = vmatprep.subr.mxu0 0.0
        %841 = vmatpush1.xpose.msra.mxu0 0.0
        %842 = vmatprep.subr.mxu0 0.0
        %843 = vmatpush1.xpose.msra.mxu0 0.0
        %844 = vmatprep.subr.mxu0 0.0
        %845 = vmatpush1.xpose.msra.mxu0 0.0
        %846 = vmatprep.subr.mxu0 0.0
        %847 = vmatpush1.xpose.msra.mxu0 0.0
        %848 = vmatprep.subr.mxu0 0.0
        %849 = vmatpush1.xpose.msra.mxu0 0.0
        %850 = vmatprep.subr.mxu0 0.0
        %851 = vmatpush1.xpose.msra.mxu0 0.0
        %852 = vmatprep.subr.mxu0 0.0
        %853 = vmatpush1.xpose.msra.mxu0 0.0
        %854 = vmatprep.subr.mxu0 0.0
        %855 = vmatpush1.xpose.msra.mxu0 0.0
        %856 = vmatprep.subr.mxu0 0.0
        %857 = vmatpush1.xpose.msra.mxu0 0.0
        %858 = vmatprep.subr.mxu0 0.0
        %859 = vmatpush1.xpose.msra.mxu0 0.0
        %860 = vmatprep.subr.mxu0 0.0
        %861 = vmatpush1.xpose.msra.mxu0 0.0
        %862 = vmatprep.subr.mxu0 0.0
        %863 = vmatpush1.xpose.msra.mxu0 0.0
        %864 = vmatprep.mubr.f32.mxu0 0.0
        %865 = vmatmul.mubr.f32.gmra.mrb[0].mxu0 %v789
        %v866 = vpop.f32.mrb[0].mxu0
        %v867 = vadd.f32 0.0, %v866
        %v868 = vpop.f32.mrb[0].mxu0
        %869 = vdwg.mxu0
        %vm870 = vcmask 195584
        %v871 = vsel %vm870, %v867, -inf
        %872 = vmax.xlane.f32.xlu0 %v871
        %v873 = vpop.xlane.xlu0 %872
        %v874 = vsub.f32 %v867, %v873
        %v875 = vmul.f32 %v874, 1.442695
        %v876 = vpow.pop %v875
        %v877 = vsel %vm870, %v876, 0.0
        %878 = vadd.xlane.f32.xlu0 %v877
        %v879 = vpop.xlane.xlu0 %878
        %v880 = vrcp.pop %v879
        %v881 = vmul.f32 %v876, %v880
        %882 = vrot.lane.b32.xlu0 %v774, 64
        %v883 = vpop.permute.xlu0 %882
        %884 = vrot.lane.b32.xlu0 %v779, 64
        %v885 = vpop.permute.xlu0 %884
        %886 = vrot.lane.b32.xlu0 %v784, 64
        %v887 = vpop.permute.xlu0 %886
        %v892 = vsel %vm870, %v881, 0
        %894 = vmatprep.subr.mxu0 0.0
        %895 = vmatpush1.msra.mxu0 %v883
        %896 = vmatprep.subr.mxu0 0.0
        %897 = vmatpush1.msra.mxu0 %v885
        %898 = vmatprep.subr.mxu0 0.0
        %899 = vmatpush1.msra.mxu0 %v887
        %900 = vmatprep.subr.mxu0 0.0
        %901 = vmatpush1.msra.mxu0 0.0
        %902 = vmatprep.subr.mxu0 0.0
        %903 = vmatpush1.msra.mxu0 0.0
        %904 = vmatprep.subr.mxu0 0.0
        %905 = vmatpush1.msra.mxu0 0.0
        %906 = vmatprep.subr.mxu0 0.0
        %907 = vmatpush1.msra.mxu0 0.0
        %908 = vmatprep.subr.mxu0 0.0
        %909 = vmatpush1.msra.mxu0 0.0
        %910 = vmatprep.subr.mxu0 0.0
        %911 = vmatpush1.msra.mxu0 0.0
        %912 = vmatprep.subr.mxu0 0.0
        %913 = vmatpush1.msra.mxu0 0.0
        %914 = vmatprep.subr.mxu0 0.0
        %915 = vmatpush1.msra.mxu0 0.0
        %916 = vmatprep.subr.mxu0 0.0
        %917 = vmatpush1.msra.mxu0 0.0
        %918 = vmatprep.subr.mxu0 0.0
        %919 = vmatpush1.msra.mxu0 0.0
        %920 = vmatprep.subr.mxu0 0.0
        %921 = vmatpush1.msra.mxu0 0.0
        %922 = vmatprep.subr.mxu0 0.0
        %923 = vmatpush1.msra.mxu0 0.0
        %924 = vmatprep.subr.mxu0 0.0
        %925 = vmatpush1.msra.mxu0 0.0
        %926 = vmatprep.subr.mxu0 0.0
        %927 = vmatpush1.msra.mxu0 0.0
        %928 = vmatprep.subr.mxu0 0.0
        %929 = vmatpush1.msra.mxu0 0.0
        %930 = vmatprep.subr.mxu0 0.0
        %931 = vmatpush1.msra.mxu0 0.0
        %932 = vmatprep.subr.mxu0 0.0
        %933 = vmatpush1.msra.mxu0 0.0
        %934 = vmatprep.subr.mxu0 0.0
        %935 = vmatpush1.msra.mxu0 0.0
        %936 = vmatprep.subr.mxu0 0.0
        %937 = vmatpush1.msra.mxu0 0.0
        %938 = vmatprep.subr.mxu0 0.0
        %939 = vmatpush1.msra.mxu0 0.0
        %940 = vmatprep.subr.mxu0 0.0
        %941 = vmatpush1.msra.mxu0 0.0
        %942 = vmatprep.subr.mxu0 0.0
        %943 = vmatpush1.msra.mxu0 0.0
        %944 = vmatprep.subr.mxu0 0.0
        %945 = vmatpush1.msra.mxu0 0.0
        %946 = vmatprep.subr.mxu0 0.0
        %947 = vmatpush1.msra.mxu0 0.0
        %948 = vmatprep.subr.mxu0 0.0
        %949 = vmatpush1.msra.mxu0 0.0
        %950 = vmatprep.subr.mxu0 0.0
        %951 = vmatpush1.msra.mxu0 0.0
        %952 = vmatprep.subr.mxu0 0.0
        %953 = vmatpush1.msra.mxu0 0.0
        %954 = vmatprep.subr.mxu0 0.0
        %955 = vmatpush1.msra.mxu0 0.0
        %956 = vmatprep.subr.mxu0 0.0
        %957 = vmatpush1.msra.mxu0 0.0
        %958 = vmatprep.mubr.f32.mxu0 0.0
        %959 = vmatmul.mubr.f32.gmra.mrb[0].mxu0 %v892
        %v960 = vpop.f32.mrb[0].mxu0
        %v961 = vadd.f32 0.0, %v960
        %v962 = vpop.f32.mrb[0].mxu0
        %963 = vdwg.mxu0
        %964 = vrot.lane.b32.xlu0 %v690, 112
        %v965 = vpop.permute.xlu0 %964
        %966 = vrot.lane.b32.xlu0 %v774, 112
        %v967 = vpop.permute.xlu0 %966
        %968 = vrot.lane.b32.xlu0 %v779, 112
        %v969 = vpop.permute.xlu0 %968
        %970 = vrot.lane.b32.xlu0 %v784, 112
        %v971 = vpop.permute.xlu0 %970
        %v972 = vsel %vm787, %v965, 0
        %v974 = vsel %vm787, %v967, 0
        %v976 = vsel %vm787, %v969, 0
        %v978 = vsel %vm787, %v971, 0
        %980 = vmatprep.subr.mxu0 0.0
        %981 = vmatpush1.xpose.msra.mxu0 %v974
        %982 = vmatprep.subr.mxu0 0.0
        %983 = vmatpush1.xpose.msra.mxu0 %v976
        %984 = vmatprep.subr.mxu0 0.0
        %985 = vmatpush1.xpose.msra.mxu0 %v978
        %986 = vmatprep.subr.mxu0 0.0
        %987 = vmatpush1.xpose.msra.mxu0 0.0
        %988 = vmatprep.subr.mxu0 0.0
        %989 = vmatpush1.xpose.msra.mxu0 0.0
        %990 = vmatprep.subr.mxu0 0.0
        %991 = vmatpush1.xpose.msra.mxu0 0.0
        %992 = vmatprep.subr.mxu0 0.0
        %993 = vmatpush1.xpose.msra.mxu0 0.0
        %994 = vmatprep.subr.mxu0 0.0
        %995 = vmatpush1.xpose.msra.mxu0 0.0
        %996 = vmatprep.subr.mxu0 0.0
        %997 = vmatpush1.xpose.msra.mxu0 0.0
        %998 = vmatprep.subr.mxu0 0.0
        %999 = vmatpush1.xpose.msra.mxu0 0.0
        %1000 = vmatprep.subr.mxu0 0.0
        %1001 = vmatpush1.xpose.msra.mxu0 0.0
        %1002 = vmatprep.subr.mxu0 0.0
        %1003 = vmatpush1.xpose.msra.mxu0 0.0
        %1004 = vmatprep.subr.mxu0 0.0
        %1005 = vmatpush1.xpose.msra.mxu0 0.0
        %1006 = vmatprep.subr.mxu0 0.0
        %1007 = vmatpush1.xpose.msra.mxu0 0.0
        %1008 = vmatprep.subr.mxu0 0.0
        %1009 = vmatpush1.xpose.msra.mxu0 0.0
        %1010 = vmatprep.subr.mxu0 0.0
        %1011 = vmatpush1.xpose.msra.mxu0 0.0
        %1012 = vmatprep.subr.mxu0 0.0
        %1013 = vmatpush1.xpose.msra.mxu0 0.0
        %1014 = vmatprep.subr.mxu0 0.0
        %1015 = vmatpush1.xpose.msra.mxu0 0.0
        %1016 = vmatprep.subr.mxu0 0.0
        %1017 = vmatpush1.xpose.msra.mxu0 0.0
        %1018 = vmatprep.subr.mxu0 0.0
        %1019 = vmatpush1.xpose.msra.mxu0 0.0
        %1020 = vmatprep.subr.mxu0 0.0
        %1021 = vmatpush1.xpose.msra.mxu0 0.0
        %1022 = vmatprep.subr.mxu0 0.0
        %1023 = vmatpush1.xpose.msra.mxu0 0.0
        %1024 = vmatprep.subr.mxu0 0.0
        %1025 = vmatpush1.xpose.msra.mxu0 0.0
        %1026 = vmatprep.subr.mxu0 0.0
        %1027 = vmatpush1.xpose.msra.mxu0 0.0
        %1028 = vmatprep.subr.mxu0 0.0
        %1029 = vmatpush1.xpose.msra.mxu0 0.0
        %1030 = vmatprep.subr.mxu0 0.0
        %1031 = vmatpush1.xpose.msra.mxu0 0.0
        %1032 = vmatprep.subr.mxu0 0.0
        %1033 = vmatpush1.xpose.msra.mxu0 0.0
        %1034 = vmatprep.subr.mxu0 0.0
        %1035 = vmatpush1.xpose.msra.mxu0 0.0
        %1036 = vmatprep.subr.mxu0 0.0
        %1037 = vmatpush1.xpose.msra.mxu0 0.0
        %1038 = vmatprep.subr.mxu0 0.0
        %1039 = vmatpush1.xpose.msra.mxu0 0.0
        %1040 = vmatprep.subr.mxu0 0.0
        %1041 = vmatpush1.xpose.msra.mxu0 0.0
        %1042 = vmatprep.subr.mxu0 0.0
        %1043 = vmatpush1.xpose.msra.mxu0 0.0
        %1044 = vmatprep.mubr.f32.mxu0 0.0
        %1045 = vmatmul.mubr.f32.gmra.mrb[0].mxu0 %v972
        %v1046 = vpop.f32.mrb[0].mxu0
        %v1047 = vadd.f32 0.0, %v1046
        %v1048 = vpop.f32.mrb[0].mxu0
        %1049 = vdwg.mxu0
        %v1050 = vsel %vm870, %v1047, -inf
        %1051 = vmax.xlane.f32.xlu0 %v1050
        %v1052 = vpop.xlane.xlu0 %1051
        %v1053 = vsub.f32 %v1047, %v1052
        %v1054 = vmul.f32 %v1053, 1.442695
        %v1055 = vpow.pop %v1054
        %v1056 = vsel %vm870, %v1055, 0.0
        %1057 = vadd.xlane.f32.xlu0 %v1056
        %v1058 = vpop.xlane.xlu0 %1057
        %v1059 = vrcp.pop %v1058
        %v1060 = vmul.f32 %v1055, %v1059
        %1061 = vrot.lane.b32.xlu0 %v774, 48
        %v1062 = vpop.permute.xlu0 %1061
        %1063 = vrot.lane.b32.xlu0 %v779, 48
        %v1064 = vpop.permute.xlu0 %1063
        %1065 = vrot.lane.b32.xlu0 %v784, 48
        %v1066 = vpop.permute.xlu0 %1065
        %v1071 = vsel %vm870, %v1060, 0
        %1073 = vmatprep.subr.mxu0 0.0
        %1074 = vmatpush1.msra.mxu0 %v1062
        %1075 = vmatprep.subr.mxu0 0.0
        %1076 = vmatpush1.msra.mxu0 %v1064
        %1077 = vmatprep.subr.mxu0 0.0
        %1078 = vmatpush1.msra.mxu0 %v1066
        %1079 = vmatprep.subr.mxu0 0.0
        %1080 = vmatpush1.msra.mxu0 0.0
        %1081 = vmatprep.subr.mxu0 0.0
        %1082 = vmatpush1.msra.mxu0 0.0
        %1083 = vmatprep.subr.mxu0 0.0
        %1084 = vmatpush1.msra.mxu0 0.0
        %1085 = vmatprep.subr.mxu0 0.0
        %1086 = vmatpush1.msra.mxu0 0.0
        %1087 = vmatprep.subr.mxu0 0.0
        %1088 = vmatpush1.msra.mxu0 0.0
        %1089 = vmatprep.subr.mxu0 0.0
        %1090 = vmatpush1.msra.mxu0 0.0
        %1091 = vmatprep.subr.mxu0 0.0
        %1092 = vmatpush1.msra.mxu0 0.0
        %1093 = vmatprep.subr.mxu0 0.0
        %1094 = vmatpush1.msra.mxu0 0.0
        %1095 = vmatprep.subr.mxu0 0.0
        %1096 = vmatpush1.msra.mxu0 0.0
        %1097 = vmatprep.subr.mxu0 0.0
        %1098 = vmatpush1.msra.mxu0 0.0
        %1099 = vmatprep.subr.mxu0 0.0
        %1100 = vmatpush1.msra.mxu0 0.0
        %1101 = vmatprep.subr.mxu0 0.0
        %1102 = vmatpush1.msra.mxu0 0.0
        %1103 = vmatprep.subr.mxu0 0.0
        %1104 = vmatpush1.msra.mxu0 0.0
        %1105 = vmatprep.subr.mxu0 0.0
        %1106 = vmatpush1.msra.mxu0 0.0
        %1107 = vmatprep.subr.mxu0 0.0
        %1108 = vmatpush1.msra.mxu0 0.0
        %1109 = vmatprep.subr.mxu0 0.0
        %1110 = vmatpush1.msra.mxu0 0.0
        %1111 = vmatprep.subr.mxu0 0.0
        %1112 = vmatpush1.msra.mxu0 0.0
        %1113 = vmatprep.subr.mxu0 0.0
        %1114 = vmatpush1.msra.mxu0 0.0
        %1115 = vmatprep.subr.mxu0 0.0
        %1116 = vmatpush1.msra.mxu0 0.0
        %1117 = vmatprep.subr.mxu0 0.0
        %1118 = vmatpush1.msra.mxu0 0.0
        %1119 = vmatprep.subr.mxu0 0.0
        %1120 = vmatpush1.msra.mxu0 0.0
        %1121 = vmatprep.subr.mxu0 0.0
        %1122 = vmatpush1.msra.mxu0 0.0
        %1123 = vmatprep.subr.mxu0 0.0
        %1124 = vmatpush1.msra.mxu0 0.0
        %1125 = vmatprep.subr.mxu0 0.0
        %1126 = vmatpush1.msra.mxu0 0.0
        %1127 = vmatprep.subr.mxu0 0.0
        %1128 = vmatpush1.msra.mxu0 0.0
        %1129 = vmatprep.subr.mxu0 0.0
        %1130 = vmatpush1.msra.mxu0 0.0
        %1131 = vmatprep.subr.mxu0 0.0
        %1132 = vmatpush1.msra.mxu0 0.0
        %1133 = vmatprep.subr.mxu0 0.0
        %1134 = vmatpush1.msra.mxu0 0.0
        %1135 = vmatprep.subr.mxu0 0.0
        %1136 = vmatpush1.msra.mxu0 0.0
        %1137 = vmatprep.mubr.f32.mxu0 0.0
        %1138 = vmatmul.mubr.f32.gmra.mrb[0].mxu0 %v1071
        %v1139 = vpop.f32.mrb[0].mxu0
        %v1140 = vadd.f32 0.0, %v1139
        %v1141 = vpop.f32.mrb[0].mxu0
        %1142 = vdwg.mxu0
        %1143 = vrot.lane.b32.xlu0 %v690, 96
        %v1144 = vpop.permute.xlu0 %1143
        %1145 = vrot.lane.b32.xlu0 %v774, 96
        %v1146 = vpop.permute.xlu0 %1145
        %1147 = vrot.lane.b32.xlu0 %v779, 96
        %v1148 = vpop.permute.xlu0 %1147
        %1149 = vrot.lane.b32.xlu0 %v784, 96
        %v1150 = vpop.permute.xlu0 %1149
        %v1151 = vsel %vm787, %v1144, 0
        %v1153 = vsel %vm787, %v1146, 0
        %v1155 = vsel %vm787, %v1148, 0
        %v1157 = vsel %vm787, %v1150, 0
        %1159 = vmatprep.subr.mxu0 0.0
        %1160 = vmatpush1.xpose.msra.mxu0 %v1153
        %1161 = vmatprep.subr.mxu0 0.0
        %1162 = vmatpush1.xpose.msra.mxu0 %v1155
        %1163 = vmatprep.subr.mxu0 0.0
        %1164 = vmatpush1.xpose.msra.mxu0 %v1157
        %1165 = vmatprep.subr.mxu0 0.0
        %1166 = vmatpush1.xpose.msra.mxu0 0.0
        %1167 = vmatprep.subr.mxu0 0.0
        %1168 = vmatpush1.xpose.msra.mxu0 0.0
        %1169 = vmatprep.subr.mxu0 0.0
        %1170 = vmatpush1.xpose.msra.mxu0 0.0
        %1171 = vmatprep.subr.mxu0 0.0
        %1172 = vmatpush1.xpose.msra.mxu0 0.0
        %1173 = vmatprep.subr.mxu0 0.0
        %1174 = vmatpush1.xpose.msra.mxu0 0.0
        %1175 = vmatprep.subr.mxu0 0.0
        %1176 = vmatpush1.xpose.msra.mxu0 0.0
        %1177 = vmatprep.subr.mxu0 0.0
        %1178 = vmatpush1.xpose.msra.mxu0 0.0
        %1179 = vmatprep.subr.mxu0 0.0
        %1180 = vmatpush1.xpose.msra.mxu0 0.0
        %1181 = vmatprep.subr.mxu0 0.0
        %1182 = vmatpush1.xpose.msra.mxu0 0.0
        %1183 = vmatprep.subr.mxu0 0.0
        %1184 = vmatpush1.xpose.msra.mxu0 0.0
        %1185 = vmatprep.subr.mxu0 0.0
        %1186 = vmatpush1.xpose.msra.mxu0 0.0
        %1187 = vmatprep.subr.mxu0 0.0
        %1188 = vmatpush1.xpose.msra.mxu0 0.0
        %1189 = vmatprep.subr.mxu0 0.0
        %1190 = vmatpush1.xpose.msra.mxu0 0.0
        %1191 = vmatprep.subr.mxu0 0.0
        %1192 = vmatpush1.xpose.msra.mxu0 0.0
        %1193 = vmatprep.subr.mxu0 0.0
        %1194 = vmatpush1.xpose.msra.mxu0 0.0
        %1195 = vmatprep.subr.mxu0 0.0
        %1196 = vmatpush1.xpose.msra.mxu0 0.0
        %1197 = vmatprep.subr.mxu0 0.0
        %1198 = vmatpush1.xpose.msra.mxu0 0.0
        %1199 = vmatprep.subr.mxu0 0.0
        %1200 = vmatpush1.xpose.msra.mxu0 0.0
        %1201 = vmatprep.subr.mxu0 0.0
        %1202 = vmatpush1.xpose.msra.mxu0 0.0
        %1203 = vmatprep.subr.mxu0 0.0
        %1204 = vmatpush1.xpose.msra.mxu0 0.0
        %1205 = vmatprep.subr.mxu0 0.0
        %1206 = vmatpush1.xpose.msra.mxu0 0.0
        %1207 = vmatprep.subr.mxu0 0.0
        %1208 = vmatpush1.xpose.msra.mxu0 0.0
        %1209 = vmatprep.subr.mxu0 0.0
        %1210 = vmatpush1.xpose.msra.mxu0 0.0
        %1211 = vmatprep.subr.mxu0 0.0
        %1212 = vmatpush1.xpose.msra.mxu0 0.0
        %1213 = vmatprep.subr.mxu0 0.0
        %1214 = vmatpush1.xpose.msra.mxu0 0.0
        %1215 = vmatprep.subr.mxu0 0.0
        %1216 = vmatpush1.xpose.msra.mxu0 0.0
        %1217 = vmatprep.subr.mxu0 0.0
        %1218 = vmatpush1.xpose.msra.mxu0 0.0
        %1219 = vmatprep.subr.mxu0 0.0
        %1220 = vmatpush1.xpose.msra.mxu0 0.0
        %1221 = vmatprep.subr.mxu0 0.0
        %1222 = vmatpush1.xpose.msra.mxu0 0.0
        %1223 = vmatprep.mubr.f32.mxu0 0.0
        %1224 = vmatmul.mubr.f32.gmra.mrb[0].mxu0 %v1151
        %v1225 = vpop.f32.mrb[0].mxu0
        %v1226 = vadd.f32 0.0, %v1225
        %v1227 = vpop.f32.mrb[0].mxu0
        %1228 = vdwg.mxu0
        %v1229 = vsel %vm870, %v1226, -inf
        %1230 = vmax.xlane.f32.xlu0 %v1229
        %v1231 = vpop.xlane.xlu0 %1230
        %v1232 = vsub.f32 %v1226, %v1231
        %v1233 = vmul.f32 %v1232, 1.442695
        %v1234 = vpow.pop %v1233
        %v1235 = vsel %vm870, %v1234, 0.0
        %1236 = vadd.xlane.f32.xlu0 %v1235
        %v1237 = vpop.xlane.xlu0 %1236
        %v1238 = vrcp.pop %v1237
        %v1239 = vmul.f32 %v1234, %v1238
        %1240 = vrot.lane.b32.xlu0 %v774, 32
        %v1241 = vpop.permute.xlu0 %1240
        %1242 = vrot.lane.b32.xlu0 %v779, 32
        %v1243 = vpop.permute.xlu0 %1242
        %1244 = vrot.lane.b32.xlu0 %v784, 32
        %v1245 = vpop.permute.xlu0 %1244
        %v1250 = vsel %vm870, %v1239, 0
        %1252 = vmatprep.subr.mxu0 0.0
        %1253 = vmatpush1.msra.mxu0 %v1241
        %1254 = vmatprep.subr.mxu0 0.0
        %1255 = vmatpush1.msra.mxu0 %v1243
        %1256 = vmatprep.subr.mxu0 0.0
        %1257 = vmatpush1.msra.mxu0 %v1245
        %1258 = vmatprep.subr.mxu0 0.0
        %1259 = vmatpush1.msra.mxu0 0.0
        %1260 = vmatprep.subr.mxu0 0.0
        %1261 = vmatpush1.msra.mxu0 0.0
        %1262 = vmatprep.subr.mxu0 0.0
        %1263 = vmatpush1.msra.mxu0 0.0
        %1264 = vmatprep.subr.mxu0 0.0
        %1265 = vmatpush1.msra.mxu0 0.0
        %1266 = vmatprep.subr.mxu0 0.0
        %1267 = vmatpush1.msra.mxu0 0.0
        %1268 = vmatprep.subr.mxu0 0.0
        %1269 = vmatpush1.msra.mxu0 0.0
        %1270 = vmatprep.subr.mxu0 0.0
        %1271 = vmatpush1.msra.mxu0 0.0
        %1272 = vmatprep.subr.mxu0 0.0
        %1273 = vmatpush1.msra.mxu0 0.0
        %1274 = vmatprep.subr.mxu0 0.0
        %1275 = vmatpush1.msra.mxu0 0.0
        %1276 = vmatprep.subr.mxu0 0.0
        %1277 = vmatpush1.msra.mxu0 0.0
        %1278 = vmatprep.subr.mxu0 0.0
        %1279 = vmatpush1.msra.mxu0 0.0
        %1280 = vmatprep.subr.mxu0 0.0
        %1281 = vmatpush1.msra.mxu0 0.0
        %1282 = vmatprep.subr.mxu0 0.0
        %1283 = vmatpush1.msra.mxu0 0.0
        %1284 = vmatprep.subr.mxu0 0.0
        %1285 = vmatpush1.msra.mxu0 0.0
        %1286 = vmatprep.subr.mxu0 0.0
        %1287 = vmatpush1.msra.mxu0 0.0
        %1288 = vmatprep.subr.mxu0 0.0
        %1289 = vmatpush1.msra.mxu0 0.0
        %1290 = vmatprep.subr.mxu0 0.0
        %1291 = vmatpush1.msra.mxu0 0.0
        %1292 = vmatprep.subr.mxu0 0.0
        %1293 = vmatpush1.msra.mxu0 0.0
        %1294 = vmatprep.subr.mxu0 0.0
        %1295 = vmatpush1.msra.mxu0 0.0
        %1296 = vmatprep.subr.mxu0 0.0
        %1297 = vmatpush1.msra.mxu0 0.0
        %1298 = vmatprep.subr.mxu0 0.0
        %1299 = vmatpush1.msra.mxu0 0.0
        %1300 = vmatprep.subr.mxu0 0.0
        %1301 = vmatpush1.msra.mxu0 0.0
        %1302 = vmatprep.subr.mxu0 0.0
        %1303 = vmatpush1.msra.mxu0 0.0
        %1304 = vmatprep.subr.mxu0 0.0
        %1305 = vmatpush1.msra.mxu0 0.0
        %1306 = vmatprep.subr.mxu0 0.0
        %1307 = vmatpush1.msra.mxu0 0.0
        %1308 = vmatprep.subr.mxu0 0.0
        %1309 = vmatpush1.msra.mxu0 0.0
        %1310 = vmatprep.subr.mxu0 0.0
        %1311 = vmatpush1.msra.mxu0 0.0
        %1312 = vmatprep.subr.mxu0 0.0
        %1313 = vmatpush1.msra.mxu0 0.0
        %1314 = vmatprep.subr.mxu0 0.0
        %1315 = vmatpush1.msra.mxu0 0.0
        %1316 = vmatprep.mubr.f32.mxu0 0.0
        %1317 = vmatmul.mubr.f32.gmra.mrb[0].mxu0 %v1250
        %v1318 = vpop.f32.mrb[0].mxu0
        %v1319 = vadd.f32 0.0, %v1318
        %v1320 = vpop.f32.mrb[0].mxu0
        %1321 = vdwg.mxu0
        %1322 = vrot.lane.b32.xlu0 %v690, 80
        %v1323 = vpop.permute.xlu0 %1322
        %1324 = vrot.lane.b32.xlu0 %v774, 80
        %v1325 = vpop.permute.xlu0 %1324
        %1326 = vrot.lane.b32.xlu0 %v779, 80
        %v1327 = vpop.permute.xlu0 %1326
        %1328 = vrot.lane.b32.xlu0 %v784, 80
        %v1329 = vpop.permute.xlu0 %1328
        %v1330 = vsel %vm787, %v1323, 0
        %v1332 = vsel %vm787, %v1325, 0
        %v1334 = vsel %vm787, %v1327, 0
        %v1336 = vsel %vm787, %v1329, 0
        %1338 = vmatprep.subr.mxu0 0.0
        %1339 = vmatpush1.xpose.msra.mxu0 %v1332
        %1340 = vmatprep.subr.mxu0 0.0
        %1341 = vmatpush1.xpose.msra.mxu0 %v1334
        %1342 = vmatprep.subr.mxu0 0.0
        %1343 = vmatpush1.xpose.msra.mxu0 %v1336
        %1344 = vmatprep.subr.mxu0 0.0
        %1345 = vmatpush1.xpose.msra.mxu0 0.0
        %1346 = vmatprep.subr.mxu0 0.0
        %1347 = vmatpush1.xpose.msra.mxu0 0.0
        %1348 = vmatprep.subr.mxu0 0.0
        %1349 = vmatpush1.xpose.msra.mxu0 0.0
        %1350 = vmatprep.subr.mxu0 0.0
        %1351 = vmatpush1.xpose.msra.mxu0 0.0
        %1352 = vmatprep.subr.mxu0 0.0
        %1353 = vmatpush1.xpose.msra.mxu0 0.0
        %1354 = vmatprep.subr.mxu0 0.0
        %1355 = vmatpush1.xpose.msra.mxu0 0.0
        %1356 = vmatprep.subr.mxu0 0.0
        %1357 = vmatpush1.xpose.msra.mxu0 0.0
        %1358 = vmatprep.subr.mxu0 0.0
        %1359 = vmatpush1.xpose.msra.mxu0 0.0
        %1360 = vmatprep.subr.mxu0 0.0
        %1361 = vmatpush1.xpose.msra.mxu0 0.0
        %1362 = vmatprep.subr.mxu0 0.0
        %1363 = vmatpush1.xpose.msra.mxu0 0.0
        %1364 = vmatprep.subr.mxu0 0.0
        %1365 = vmatpush1.xpose.msra.mxu0 0.0
        %1366 = vmatprep.subr.mxu0 0.0
        %1367 = vmatpush1.xpose.msra.mxu0 0.0
        %1368 = vmatprep.subr.mxu0 0.0
        %1369 = vmatpush1.xpose.msra.mxu0 0.0
        %1370 = vmatprep.subr.mxu0 0.0
        %1371 = vmatpush1.xpose.msra.mxu0 0.0
        %1372 = vmatprep.subr.mxu0 0.0
        %1373 = vmatpush1.xpose.msra.mxu0 0.0
        %1374 = vmatprep.subr.mxu0 0.0
        %1375 = vmatpush1.xpose.msra.mxu0 0.0
        %1376 = vmatprep.subr.mxu0 0.0
        %1377 = vmatpush1.xpose.msra.mxu0 0.0
        %1378 = vmatprep.subr.mxu0 0.0
        %1379 = vmatpush1.xpose.msra.mxu0 0.0
        %1380 = vmatprep.subr.mxu0 0.0
        %1381 = vmatpush1.xpose.msra.mxu0 0.0
        %1382 = vmatprep.subr.mxu0 0.0
        %1383 = vmatpush1.xpose.msra.mxu0 0.0
        %1384 = vmatprep.subr.mxu0 0.0
        %1385 = vmatpush1.xpose.msra.mxu0 0.0
        %1386 = vmatprep.subr.mxu0 0.0
        %1387 = vmatpush1.xpose.msra.mxu0 0.0
        %1388 = vmatprep.subr.mxu0 0.0
        %1389 = vmatpush1.xpose.msra.mxu0 0.0
        %1390 = vmatprep.subr.mxu0 0.0
        %1391 = vmatpush1.xpose.msra.mxu0 0.0
        %1392 = vmatprep.subr.mxu0 0.0
        %1393 = vmatpush1.xpose.msra.mxu0 0.0
        %1394 = vmatprep.subr.mxu0 0.0
        %1395 = vmatpush1.xpose.msra.mxu0 0.0
        %1396 = vmatprep.subr.mxu0 0.0
        %1397 = vmatpush1.xpose.msra.mxu0 0.0
        %1398 = vmatprep.subr.mxu0 0.0
        %1399 = vmatpush1.xpose.msra.mxu0 0.0
        %1400 = vmatprep.subr.mxu0 0.0
        %1401 = vmatpush1.xpose.msra.mxu0 0.0
        %1402 = vmatprep.mubr.f32.mxu0 0.0
        %1403 = vmatmul.mubr.f32.gmra.mrb[0].mxu0 %v1330
        %v1404 = vpop.f32.mrb[0].mxu0
        %v1405 = vadd.f32 0.0, %v1404
        %v1406 = vpop.f32.mrb[0].mxu0
        %1407 = vdwg.mxu0
        %v1408 = vsel %vm870, %v1405, -inf
        %1409 = vmax.xlane.f32.xlu0 %v1408
        %v1410 = vpop.xlane.xlu0 %1409
        %v1411 = vsub.f32 %v1405, %v1410
        %v1412 = vmul.f32 %v1411, 1.442695
        %v1413 = vpow.pop %v1412
        %v1414 = vsel %vm870, %v1413, 0.0
        %1415 = vadd.xlane.f32.xlu0 %v1414
        %v1416 = vpop.xlane.xlu0 %1415
        %v1417 = vrcp.pop %v1416
        %v1418 = vmul.f32 %v1413, %v1417
        %1419 = vrot.lane.b32.xlu0 %v774, 16
        %v1420 = vpop.permute.xlu0 %1419
        %1421 = vrot.lane.b32.xlu0 %v779, 16
        %v1422 = vpop.permute.xlu0 %1421
        %1423 = vrot.lane.b32.xlu0 %v784, 16
        %v1424 = vpop.permute.xlu0 %1423
        %v1429 = vsel %vm870, %v1418, 0
        %1431 = vmatprep.subr.mxu0 0.0
        %1432 = vmatpush1.msra.mxu0 %v1420
        %1433 = vmatprep.subr.mxu0 0.0
        %1434 = vmatpush1.msra.mxu0 %v1422
        %1435 = vmatprep.subr.mxu0 0.0
        %1436 = vmatpush1.msra.mxu0 %v1424
        %1437 = vmatprep.subr.mxu0 0.0
        %1438 = vmatpush1.msra.mxu0 0.0
        %1439 = vmatprep.subr.mxu0 0.0
        %1440 = vmatpush1.msra.mxu0 0.0
        %1441 = vmatprep.subr.mxu0 0.0
        %1442 = vmatpush1.msra.mxu0 0.0
        %1443 = vmatprep.subr.mxu0 0.0
        %1444 = vmatpush1.msra.mxu0 0.0
        %1445 = vmatprep.subr.mxu0 0.0
        %1446 = vmatpush1.msra.mxu0 0.0
        %1447 = vmatprep.subr.mxu0 0.0
        %1448 = vmatpush1.msra.mxu0 0.0
        %1449 = vmatprep.subr.mxu0 0.0
        %1450 = vmatpush1.msra.mxu0 0.0
        %1451 = vmatprep.subr.mxu0 0.0
        %1452 = vmatpush1.msra.mxu0 0.0
        %1453 = vmatprep.subr.mxu0 0.0
        %1454 = vmatpush1.msra.mxu0 0.0
        %1455 = vmatprep.subr.mxu0 0.0
        %1456 = vmatpush1.msra.mxu0 0.0
        %1457 = vmatprep.subr.mxu0 0.0
        %1458 = vmatpush1.msra.mxu0 0.0
        %1459 = vmatprep.subr.mxu0 0.0
        %1460 = vmatpush1.msra.mxu0 0.0
        %1461 = vmatprep.subr.mxu0 0.0
        %1462 = vmatpush1.msra.mxu0 0.0
        %1463 = vmatprep.subr.mxu0 0.0
        %1464 = vmatpush1.msra.mxu0 0.0
        %1465 = vmatprep.subr.mxu0 0.0
        %1466 = vmatpush1.msra.mxu0 0.0
        %1467 = vmatprep.subr.mxu0 0.0
        %1468 = vmatpush1.msra.mxu0 0.0
        %1469 = vmatprep.subr.mxu0 0.0
        %1470 = vmatpush1.msra.mxu0 0.0
        %1471 = vmatprep.subr.mxu0 0.0
        %1472 = vmatpush1.msra.mxu0 0.0
        %1473 = vmatprep.subr.mxu0 0.0
        %1474 = vmatpush1.msra.mxu0 0.0
        %1475 = vmatprep.subr.mxu0 0.0
        %1476 = vmatpush1.msra.mxu0 0.0
        %1477 = vmatprep.subr.mxu0 0.0
        %1478 = vmatpush1.msra.mxu0 0.0
        %1479 = vmatprep.subr.mxu0 0.0
        %1480 = vmatpush1.msra.mxu0 0.0
        %1481 = vmatprep.subr.mxu0 0.0
        %1482 = vmatpush1.msra.mxu0 0.0
        %1483 = vmatprep.subr.mxu0 0.0
        %1484 = vmatpush1.msra.mxu0 0.0
        %1485 = vmatprep.subr.mxu0 0.0
        %1486 = vmatpush1.msra.mxu0 0.0
        %1487 = vmatprep.subr.mxu0 0.0
        %1488 = vmatpush1.msra.mxu0 0.0
        %1489 = vmatprep.subr.mxu0 0.0
        %1490 = vmatpush1.msra.mxu0 0.0
        %1491 = vmatprep.subr.mxu0 0.0
        %1492 = vmatpush1.msra.mxu0 0.0
        %1493 = vmatprep.subr.mxu0 0.0
        %1494 = vmatpush1.msra.mxu0 0.0
        %1495 = vmatprep.mubr.f32.mxu0 0.0
        %1496 = vmatmul.mubr.f32.gmra.mrb[0].mxu0 %v1429
        %v1497 = vpop.f32.mrb[0].mxu0
        %v1498 = vadd.f32 0.0, %v1497
        %v1499 = vpop.f32.mrb[0].mxu0
        %1500 = vdwg.mxu0
        %1502 = vrot.lane.b32.xlu0 %v1140, 16
        %v1503 = vpop.permute.xlu0 %1502
        %1506 = vrot.lane.b32.xlu0 %v1319, 32
        %v1507 = vpop.permute.xlu0 %1506
        %1510 = vrot.lane.b32.xlu0 %v1498, 48
        %v1511 = vpop.permute.xlu0 %1510
        %v1513 = vsel %vm787, %v961, %v1503
        %v1514 = vsel %vm461, %v1513, %v1507
        %vm1515 = vcmask 392192
        %v1516 = vsel %vm1515, %v1514, %v1511
        %v1517 = vld [vmem:[%s6] sm:$0xff]
        %v1518 = vld [vmem:[%s6 + $0x8] sm:$0xff]
        %v1519 = vld [vmem:[%s6 + $0x10] sm:$0xff]
        %v1520 = vld [vmem:[%s6 + $0x18] sm:$0xff]
        %v1521 = vld [vmem:[%s6 + $0x20] sm:$0xff]
        %v1522 = vld [vmem:[%s6 + $0x28] sm:$0xff]
        %v1523 = vld [vmem:[%s6 + $0x30] sm:$0xff]
        %v1524 = vld [vmem:[%s6 + $0x38] sm:$0xff]
        %v1526 = vsel %vm549, %v1516, 0
        %1528 = vmatprep.subr.mxu0 0.0
        %1529 = vmatpush1.msra.mxu0 %v1517
        %1530 = vmatprep.subr.mxu0 0.0
        %1531 = vmatpush1.msra.mxu0 %v1518
        %1532 = vmatprep.subr.mxu0 0.0
        %1533 = vmatpush1.msra.mxu0 %v1519
        %1534 = vmatprep.subr.mxu0 0.0
        %1535 = vmatpush1.msra.mxu0 %v1520
        %1536 = vmatprep.subr.mxu0 0.0
        %1537 = vmatpush1.msra.mxu0 %v1521
        %1538 = vmatprep.subr.mxu0 0.0
        %1539 = vmatpush1.msra.mxu0 %v1522
        %1540 = vmatprep.subr.mxu0 0.0
        %1541 = vmatpush1.msra.mxu0 %v1523
        %1542 = vmatprep.subr.mxu0 0.0
        %1543 = vmatpush1.msra.mxu0 %v1524
        %1544 = vmatprep.subr.mxu0 0.0
        %1545 = vmatpush1.msra.mxu0 0.0
        %1546 = vmatprep.subr.mxu0 0.0
        %1547 = vmatpush1.msra.mxu0 0.0
        %1548 = vmatprep.subr.mxu0 0.0
        %1549 = vmatpush1.msra.mxu0 0.0
        %1550 = vmatprep.subr.mxu0 0.0
        %1551 = vmatpush1.msra.mxu0 0.0
        %1552 = vmatprep.subr.mxu0 0.0
        %1553 = vmatpush1.msra.mxu0 0.0
        %1554 = vmatprep.subr.mxu0 0.0
        %1555 = vmatpush1.msra.mxu0 0.0
        %1556 = vmatprep.subr.mxu0 0.0
        %1557 = vmatpush1.msra.mxu0 0.0
        %1558 = vmatprep.subr.mxu0 0.0
        %1559 = vmatpush1.msra.mxu0 0.0
        %1560 = vmatprep.subr.mxu0 0.0
        %1561 = vmatpush1.msra.mxu0 0.0
        %1562 = vmatprep.subr.mxu0 0.0
        %1563 = vmatpush1.msra.mxu0 0.0
        %1564 = vmatprep.subr.mxu0 0.0
        %1565 = vmatpush1.msra.mxu0 0.0
        %1566 = vmatprep.subr.mxu0 0.0
        %1567 = vmatpush1.msra.mxu0 0.0
        %1568 = vmatprep.subr.mxu0 0.0
        %1569 = vmatpush1.msra.mxu0 0.0
        %1570 = vmatprep.subr.mxu0 0.0
        %1571 = vmatpush1.msra.mxu0 0.0
        %1572 = vmatprep.subr.mxu0 0.0
        %1573 = vmatpush1.msra.mxu0 0.0
        %1574 = vmatprep.subr.mxu0 0.0
        %1575 = vmatpush1.msra.mxu0 0.0
        %1576 = vmatprep.subr.mxu0 0.0
        %1577 = vmatpush1.msra.mxu0 0.0
        %1578 = vmatprep.subr.mxu0 0.0
        %1579 = vmatpush1.msra.mxu0 0.0
        %1580 = vmatprep.subr.mxu0 0.0
        %1581 = vmatpush1.msra.mxu0 0.0
        %1582 = vmatprep.subr.mxu0 0.0
        %1583 = vmatpush1.msra.mxu0 0.0
        %1584 = vmatprep.subr.mxu0 0.0
        %1585 = vmatpush1.msra.mxu0 0.0
        %1586 = vmatprep.subr.mxu0 0.0
        %1587 = vmatpush1.msra.mxu0 0.0
        %1588 = vmatprep.subr.mxu0 0.0
        %1589 = vmatpush1.msra.mxu0 0.0
        %1590 = vmatprep.subr.mxu0 0.0
        %1591 = vmatpush1.msra.mxu0 0.0
        %1592 = vmatprep.mubr.f32.mxu0 0.0
        %1593 = vmatmul.mubr.f32.gmra.mrb[0].mxu0 %v1526
        %v1594 = vpop.f32.mrb[0].mxu0
        %v1595 = vadd.f32 %v451, %v1594
        %v1596 = vpop.f32.mrb[0].mxu0
        %1597 = vdwg.mxu0
        %v1598 = vsel %vm549, %v1595, 0.0
        %1599 = vadd.xlane.f32.xlu0 %v1598
        %v1600 = vpop.xlane.xlu0 %1599
        %v1601 = vmul.f32 %v1600, %v556
        %v1602 = vsub.f32 %v1595, %v1601
        %v1603 = vmul.f32 %v1602, %v1602
        %v1604 = vsel %vm549, %v1603, 0.0
        %1605 = vadd.xlane.f32.xlu0 %v1604
        %v1606 = vpop.xlane.xlu0 %1605
        %v1607 = vmul.f32 %v1606, %v556
        %v1608 = vadd.f32 %v1607, 1e-05
        %v1609 = vrsqrt.pop %v1608
        %v1610 = vmul.f32 %v1602, %v1609
        %v1611 = vlaneseq
        %v1612 = vshrl.u32 %v1611, 7
        %v1613 = vsub.s32 0, %v1612
        %v1614 = vrot.slane %v547, %v1613
        %v1615 = vmul.f32 %v1610, %v1614
        %v1616 = vlaneseq
        %v1617 = vshrl.u32 %v1616, 7
        %v1618 = vsub.s32 0, %v1617
        %v1619 = vrot.slane %v548, %v1618
        %v1620 = vadd.f32 %v1615, %v1619
        %v1621 = vld [vmem:[#allocation10] sm:$0xff]
        %v1622 = vld [vmem:[#allocation10 + $0x8] sm:$0xff]
        %v1623 = vld [vmem:[#allocation10 + $0x10] sm:$0xff]
        %v1624 = vld [vmem:[#allocation10 + $0x18] sm:$0xff]
        %v1625 = vld [vmem:[#allocation10 + $0x20] sm:$0xff]
        %v1626 = vld [vmem:[#allocation10 + $0x28] sm:$0xff]
        %v1627 = vld [vmem:[#allocation10 + $0x30] sm:$0xff]
        %v1628 = vld [vmem:[#allocation10 + $0x38] sm:$0xff]
        %v1630 = vsel %vm549, %v1620, 0
        %1632 = vmatprep.subr.mxu0 0.0
        %1633 = vmatpush1.msra.mxu0 %v1621
        %1634 = vmatprep.subr.mxu0 0.0
        %1635 = vmatpush1.msra.mxu0 %v1622
        %1636 = vmatprep.subr.mxu0 0.0
        %1637 = vmatpush1.msra.mxu0 %v1623
        %1638 = vmatprep.subr.mxu0 0.0
        %1639 = vmatpush1.msra.mxu0 %v1624
        %1640 = vmatprep.subr.mxu0 0.0
        %1641 = vmatpush1.msra.mxu0 %v1625
        %1642 = vmatprep.subr.mxu0 0.0
        %1643 = vmatpush1.msra.mxu0 %v1626
        %1644 = vmatprep.subr.mxu0 0.0
        %1645 = vmatpush1.msra.mxu0 %v1627
        %1646 = vmatprep.subr.mxu0 0.0
        %1647 = vmatpush1.msra.mxu0 %v1628
        %1648 = vmatprep.subr.mxu0 0.0
        %1649 = vmatpush1.msra.mxu0 0.0
        %1650 = vmatprep.subr.mxu0 0.0
        %1651 = vmatpush1.msra.mxu0 0.0
        %1652 = vmatprep.subr.mxu0 0.0
        %1653 = vmatpush1.msra.mxu0 0.0
        %1654 = vmatprep.subr.mxu0 0.0
        %1655 = vmatpush1.msra.mxu0 0.0
        %1656 = vmatprep.subr.mxu0 0.0
        %1657 = vmatpush1.msra.mxu0 0.0
        %1658 = vmatprep.subr.mxu0 0.0
        %1659 = vmatpush1.msra.mxu0 0.0
        %1660 = vmatprep.subr.mxu0 0.0
        %1661 = vmatpush1.msra.mxu0 0.0
        %1662 = vmatprep.subr.mxu0 0.0
        %1663 = vmatpush1.msra.mxu0 0.0
        %1664 = vmatprep.subr.mxu0 0.0
        %1665 = vmatpush1.msra.mxu0 0.0
        %1666 = vmatprep.subr.mxu0 0.0
        %1667 = vmatpush1.msra.mxu0 0.0
        %1668 = vmatprep.subr.mxu0 0.0
        %1669 = vmatpush1.msra.mxu0 0.0
        %1670 = vmatprep.subr.mxu0 0.0
        %1671 = vmatpush1.msra.mxu0 0.0
        %1672 = vmatprep.subr.mxu0 0.0
        %1673 = vmatpush1.msra.mxu0 0.0
        %1674 = vmatprep.subr.mxu0 0.0
        %1675 = vmatpush1.msra.mxu0 0.0
        %1676 = vmatprep.subr.mxu0 0.0
        %1677 = vmatpush1.msra.mxu0 0.0
        %1678 = vmatprep.subr.mxu0 0.0
        %1679 = vmatpush1.msra.mxu0 0.0
        %1680 = vmatprep.subr.mxu0 0.0
        %1681 = vmatpush1.msra.mxu0 0.0
        %1682 = vmatprep.subr.mxu0 0.0
        %1683 = vmatpush1.msra.mxu0 0.0
        %1684 = vmatprep.subr.mxu0 0.0
        %1685 = vmatpush1.msra.mxu0 0.0
        %1686 = vmatprep.subr.mxu0 0.0
        %1687 = vmatpush1.msra.mxu0 0.0
        %1688 = vmatprep.subr.mxu0 0.0
        %1689 = vmatpush1.msra.mxu0 0.0
        %1690 = vmatprep.subr.mxu0 0.0
        %1691 = vmatpush1.msra.mxu0 0.0
        %1692 = vmatprep.subr.mxu0 0.0
        %1693 = vmatpush1.msra.mxu0 0.0
        %1694 = vmatprep.subr.mxu0 0.0
        %1695 = vmatpush1.msra.mxu0 0.0
        %1696 = vmatprep.mubr.f32.mxu0 0.0
        %1697 = vmatmul.mubr.f32.gmra.mrb[0].mxu0 %v1630
        %v1698 = vpop.f32.mrb[0].mxu0
        %v1699 = vadd.f32 0.0, %v1698
        %v1700 = vpop.f32.mrb[0].mxu0
        %1701 = vdwg.mxu0
        %v1702 = vmul.f32 %v1699, 0.5
        %v1703 = vrcp.pop 1.4142135
        %v1704 = vmul.f32 %v1699, %v1703
        %v1705 = verf.f32.pop %v1704
        %v1706 = vadd.f32 %v1705, 1.0
        %v1707 = vmul.f32 %v1702, %v1706
        %v1708 = vld [vmem:[%s8] sm:$0xff]
        %v1709 = vld [vmem:[%s8 + $0x8] sm:$0xff]
        %v1710 = vld [vmem:[%s8 + $0x10] sm:$0xff]
        %v1711 = vld [vmem:[%s8 + $0x18] sm:$0xff]
        %v1712 = vld [vmem:[%s8 + $0x20] sm:$0xff]
        %v1713 = vld [vmem:[%s8 + $0x28] sm:$0xff]
        %v1714 = vld [vmem:[%s8 + $0x30] sm:$0xff]
        %v1715 = vld [vmem:[%s8 + $0x38] sm:$0xff]
        %v1716 = vld [vmem:[%s8 + $0x40] sm:$0xff]
        %v1717 = vld [vmem:[%s8 + $0x48] sm:$0xff]
        %v1718 = vld [vmem:[%s8 + $0x50] sm:$0xff]
        %v1719 = vld [vmem:[%s8 + $0x58] sm:$0xff]
        %v1720 = vld [vmem:[%s8 + $0x60] sm:$0xff]
        %v1721 = vld [vmem:[%s8 + $0x68] sm:$0xff]
        %v1722 = vld [vmem:[%s8 + $0x70] sm:$0xff]
        %v1723 = vld [vmem:[%s8 + $0x78] sm:$0xff]
        %1724 = vmatprep.subr.mxu0 0.0
        %1725 = vmatpush1.msra.mxu0 %v1708
        %1726 = vmatprep.subr.mxu0 0.0
        %1727 = vmatpush1.msra.mxu0 %v1709
        %1728 = vmatprep.subr.mxu0 0.0
        %1729 = vmatpush1.msra.mxu0 %v1710
        %1730 = vmatprep.subr.mxu0 0.0
        %1731 = vmatpush1.msra.mxu0 %v1711
        %1732 = vmatprep.subr.mxu0 0.0
        %1733 = vmatpush1.msra.mxu0 %v1712
        %1734 = vmatprep.subr.mxu0 0.0
        %1735 = vmatpush1.msra.mxu0 %v1713
        %1736 = vmatprep.subr.mxu0 0.0
        %1737 = vmatpush1.msra.mxu0 %v1714
        %1738 = vmatprep.subr.mxu0 0.0
        %1739 = vmatpush1.msra.mxu0 %v1715
        %1740 = vmatprep.subr.mxu0 0.0
        %1741 = vmatpush1.msra.mxu0 %v1716
        %1742 = vmatprep.subr.mxu0 0.0
        %1743 = vmatpush1.msra.mxu0 %v1717
        %1744 = vmatprep.subr.mxu0 0.0
        %1745 = vmatpush1.msra.mxu0 %v1718
        %1746 = vmatprep.subr.mxu0 0.0
        %1747 = vmatpush1.msra.mxu0 %v1719
        %1748 = vmatprep.subr.mxu0 0.0
        %1749 = vmatpush1.msra.mxu0 %v1720
        %1750 = vmatprep.subr.mxu0 0.0
        %1751 = vmatpush1.msra.mxu0 %v1721
        %1752 = vmatprep.subr.mxu0 0.0
        %1753 = vmatpush1.msra.mxu0 %v1722
        %1754 = vmatprep.subr.mxu0 0.0
        %1755 = vmatpush1.msra.mxu0 %v1723
        %1756 = vmatprep.subr.mxu0 0.0
        %1757 = vmatpush1.msra.mxu0 0.0
        %1758 = vmatprep.subr.mxu0 0.0
        %1759 = vmatpush1.msra.mxu0 0.0
        %1760 = vmatprep.subr.mxu0 0.0
        %1761 = vmatpush1.msra.mxu0 0.0
        %1762 = vmatprep.subr.mxu0 0.0
        %1763 = vmatpush1.msra.mxu0 0.0
        %1764 = vmatprep.subr.mxu0 0.0
        %1765 = vmatpush1.msra.mxu0 0.0
        %1766 = vmatprep.subr.mxu0 0.0
        %1767 = vmatpush1.msra.mxu0 0.0
        %1768 = vmatprep.subr.mxu0 0.0
        %1769 = vmatpush1.msra.mxu0 0.0
        %1770 = vmatprep.subr.mxu0 0.0
        %1771 = vmatpush1.msra.mxu0 0.0
        %1772 = vmatprep.subr.mxu0 0.0
        %1773 = vmatpush1.msra.mxu0 0.0
        %1774 = vmatprep.subr.mxu0 0.0
        %1775 = vmatpush1.msra.mxu0 0.0
        %1776 = vmatprep.subr.mxu0 0.0
        %1777 = vmatpush1.msra.mxu0 0.0
        %1778 = vmatprep.subr.mxu0 0.0
        %1779 = vmatpush1.msra.mxu0 0.0
        %1780 = vmatprep.subr.mxu0 0.0
        %1781 = vmatpush1.msra.mxu0 0.0
        %1782 = vmatprep.subr.mxu0 0.0
        %1783 = vmatpush1.msra.mxu0 0.0
        %1784 = vmatprep.subr.mxu0 0.0
        %1785 = vmatpush1.msra.mxu0 0.0
        %1786 = vmatprep.subr.mxu0 0.0
        %1787 = vmatpush1.msra.mxu0 0.0
        %1788 = vmatprep.mubr.f32.mxu0 0.0
        %1789 = vmatmul.mubr.f32.gmra.mrb[0].mxu0 %v1707
        %v1790 = vpop.f32.mrb[0].mxu0
        %v1791 = vadd.f32 %v1595, %v1790
        %v1792 = vpop.f32.mrb[0].mxu0
        %1793 = vdwg.mxu0
        %v1794 = vld [vmem:[#allocation8 + $0xa] sm:$0x1]
        %v1795 = vld [vmem:[#allocation8 + $0xb] sm:$0x1]
        %v1796 = vld [vmem:[#allocation8 + $0xc] sm:$0x1]
        %v1797 = vld [vmem:[#allocation8 + $0xd] sm:$0x1]
        %v1798 = vld [vmem:[#allocation8 + $0xe] sm:$0x1]
        %v1799 = vld [vmem:[#allocation8 + $0xf] sm:$0x1]
        %v1800 = vlaneseq
        %v1801 = vshrl.u32 %v1800, 7
        %v1802 = vsub.s32 0, %v1801
        %v1803 = vrot.slane %v1794, %v1802
        %v1804 = vmul.f32 %v575, %v1803
        %v1805 = vmul.f32 %v576, %v1803
        %v1806 = vlaneseq
        %v1807 = vshrl.u32 %v1806, 7
        %v1808 = vsub.s32 0, %v1807
        %v1809 = vrot.slane %v1795, %v1808
        %v1810 = vadd.f32 %v1804, %v1809
        %v1811 = vadd.f32 %v1805, %v1809
        %v1812 = vsel %vm549, %v1791, 0.0
        %1813 = vadd.xlane.f32.xlu0 %v1812
        %v1814 = vpop.xlane.xlu0 %1813
        %v1815 = vmul.f32 %v1814, %v556
        %v1816 = vsub.f32 %v1791, %v1815
        %v1817 = vmul.f32 %v1816, %v1816
        %v1818 = vsel %vm549, %v1817, 0.0
        %1819 = vadd.xlane.f32.xlu0 %v1818
        %v1820 = vpop.xlane.xlu0 %1819
        %v1821 = vmul.f32 %v1820, %v556
        %v1822 = vadd.f32 %v1821, 1e-05
        %v1823 = vrsqrt.pop %v1822
        %v1824 = vmul.f32 %v1816, %v1823
        %v1825 = vlaneseq
        %v1826 = vshrl.u32 %v1825, 7
        %v1827 = vsub.s32 0, %v1826
        %v1828 = vrot.slane %v1796, %v1827
        %v1829 = vmul.f32 %v1824, %v1828
        %v1830 = vlaneseq
        %v1831 = vshrl.u32 %v1830, 7
        %v1832 = vsub.s32 0, %v1831
        %v1833 = vrot.slane %v1797, %v1832
        %v1834 = vadd.f32 %v1829, %v1833
        %s1835 = scalar_lea.vmem %s4, 64
        %v1836 = vld [vmem:[%s1835] sm:$0xff]
        %v1837 = vld [vmem:[%s1835 + $0x8] sm:$0xff]
        %v1838 = vld [vmem:[%s1835 + $0x10] sm:$0xff]
        %v1839 = vld [vmem:[%s1835 + $0x18] sm:$0xff]
        %v1840 = vld [vmem:[%s1835 + $0x20] sm:$0xff]
        %v1841 = vld [vmem:[%s1835 + $0x28] sm:$0xff]
        %v1842 = vld [vmem:[%s1835 + $0x30] sm:$0xff]
        %v1843 = vld [vmem:[%s1835 + $0x38] sm:$0xff]
        %v1845 = vsel %vm549, %v1834, 0
        %1847 = vmatprep.subr.mxu0 0.0
        %1848 = vmatpush1.msra.mxu0 %v1836
        %1849 = vmatprep.subr.mxu0 0.0
        %1850 = vmatpush1.msra.mxu0 %v1837
        %1851 = vmatprep.subr.mxu0 0.0
        %1852 = vmatpush1.msra.mxu0 %v1838
        %1853 = vmatprep.subr.mxu0 0.0
        %1854 = vmatpush1.msra.mxu0 %v1839
        %1855 = vmatprep.subr.mxu0 0.0
        %1856 = vmatpush1.msra.mxu0 %v1840
        %1857 = vmatprep.subr.mxu0 0.0
        %1858 = vmatpush1.msra.mxu0 %v1841
        %1859 = vmatprep.subr.mxu0 0.0
        %1860 = vmatpush1.msra.mxu0 %v1842
        %1861 = vmatprep.subr.mxu0 0.0
        %1862 = vmatpush1.msra.mxu0 %v1843
        %1863 = vmatprep.subr.mxu0 0.0
        %1864 = vmatpush1.msra.mxu0 0.0
        %1865 = vmatprep.subr.mxu0 0.0
        %1866 = vmatpush1.msra.mxu0 0.0
        %1867 = vmatprep.subr.mxu0 0.0
        %1868 = vmatpush1.msra.mxu0 0.0
        %1869 = vmatprep.subr.mxu0 0.0
        %1870 = vmatpush1.msra.mxu0 0.0
        %1871 = vmatprep.subr.mxu0 0.0
        %1872 = vmatpush1.msra.mxu0 0.0
        %1873 = vmatprep.subr.mxu0 0.0
        %1874 = vmatpush1.msra.mxu0 0.0
        %1875 = vmatprep.subr.mxu0 0.0
        %1876 = vmatpush1.msra.mxu0 0.0
        %1877 = vmatprep.subr.mxu0 0.0
        %1878 = vmatpush1.msra.mxu0 0.0
        %1879 = vmatprep.subr.mxu0 0.0
        %1880 = vmatpush1.msra.mxu0 0.0
        %1881 = vmatprep.subr.mxu0 0.0
        %1882 = vmatpush1.msra.mxu0 0.0
        %1883 = vmatprep.subr.mxu0 0.0
        %1884 = vmatpush1.msra.mxu0 0.0
        %1885 = vmatprep.subr.mxu0 0.0
        %1886 = vmatpush1.msra.mxu0 0.0
        %1887 = vmatprep.subr.mxu0 0.0
        %1888 = vmatpush1.msra.mxu0 0.0
        %1889 = vmatprep.subr.mxu0 0.0
        %1890 = vmatpush1.msra.mxu0 0.0
        %1891 = vmatprep.subr.mxu0 0.0
        %1892 = vmatpush1.msra.mxu0 0.0
        %1893 = vmatprep.subr.mxu0 0.0
        %1894 = vmatpush1.msra.mxu0 0.0
        %1895 = vmatprep.subr.mxu0 0.0
        %1896 = vmatpush1.msra.mxu0 0.0
        %1897 = vmatprep.subr.mxu0 0.0
        %1898 = vmatpush1.msra.mxu0 0.0
        %1899 = vmatprep.subr.mxu0 0.0
        %1900 = vmatpush1.msra.mxu0 0.0
        %1901 = vmatprep.subr.mxu0 0.0
        %1902 = vmatpush1.msra.mxu0 0.0
        %1903 = vmatprep.subr.mxu0 0.0
        %1904 = vmatpush1.msra.mxu0 0.0
        %1905 = vmatprep.subr.mxu0 0.0
        %1906 = vmatpush1.msra.mxu0 0.0
        %1907 = vmatprep.subr.mxu0 0.0
        %1908 = vmatpush1.msra.mxu0 0.0
        %1909 = vmatprep.subr.mxu0 0.0
        %1910 = vmatpush1.msra.mxu0 0.0
        %1911 = vmatprep.mubr.f32.mxu0 0.0
        %1912 = vmatmul.mubr.f32.gmra.mrb[0].mxu0 %v1845
        %v1913 = vpop.f32.mrb[0].mxu0
        %v1914 = vadd.f32 0.0, %v1913
        %v1915 = vpop.f32.mrb[0].mxu0
        %1916 = vdwg.mxu0
        %s1917 = scalar_lea.vmem %s5, 64
        %v1918 = vld [vmem:[%s1917] sm:$0xff]
        %v1919 = vld [vmem:[%s1917 + $0x8] sm:$0xff]
        %v1920 = vld [vmem:[%s1917 + $0x10] sm:$0xff]
        %v1921 = vld [vmem:[%s1917 + $0x18] sm:$0xff]
        %v1922 = vld [vmem:[%s1917 + $0x20] sm:$0xff]
        %v1923 = vld [vmem:[%s1917 + $0x28] sm:$0xff]
        %v1924 = vld [vmem:[%s1917 + $0x30] sm:$0xff]
        %v1925 = vld [vmem:[%s1917 + $0x38] sm:$0xff]
        %v1927 = vsel %vm549, %v1810, 0
        %v1930 = vsel %vm549, %v1811, 0
        %1932 = vmatprep.subr.mxu0 0.0
        %1933 = vmatpush1.msra.mxu0 %v1918
        %1934 = vmatprep.subr.mxu0 0.0
        %1935 = vmatpush1.msra.mxu0 %v1919
        %1936 = vmatprep.subr.mxu0 0.0
        %1937 = vmatpush1.msra.mxu0 %v1920
        %1938 = vmatprep.subr.mxu0 0.0
        %1939 = vmatpush1.msra.mxu0 %v1921
        %1940 = vmatprep.subr.mxu0 0.0
        %1941 = vmatpush1.msra.mxu0 %v1922
        %1942 = vmatprep.subr.mxu0 0.0
        %1943 = vmatpush1.msra.mxu0 %v1923
        %1944 = vmatprep.subr.mxu0 0.0
        %1945 = vmatpush1.msra.mxu0 %v1924
        %1946 = vmatprep.subr.mxu0 0.0
        %1947 = vmatpush1.msra.mxu0 %v1925
        %1948 = vmatprep.subr.mxu0 0.0
        %1949 = vmatpush1.msra.mxu0 0.0
        %1950 = vmatprep.subr.mxu0 0.0
        %1951 = vmatpush1.msra.mxu0 0.0
        %1952 = vmatprep.subr.mxu0 0.0
        %1953 = vmatpush1.msra.mxu0 0.0
        %1954 = vmatprep.subr.mxu0 0.0
        %1955 = vmatpush1.msra.mxu0 0.0
        %1956 = vmatprep.subr.mxu0 0.0
        %1957 = vmatpush1.msra.mxu0 0.0
        %1958 = vmatprep.subr.mxu0 0.0
        %1959 = vmatpush1.msra.mxu0 0.0
        %1960 = vmatprep.subr.mxu0 0.0
        %1961 = vmatpush1.msra.mxu0 0.0
        %1962 = vmatprep.subr.mxu0 0.0
        %1963 = vmatpush1.msra.mxu0 0.0
        %1964 = vmatprep.subr.mxu0 0.0
        %1965 = vmatpush1.msra.mxu0 0.0
        %1966 = vmatprep.subr.mxu0 0.0
        %1967 = vmatpush1.msra.mxu0 0.0
        %1968 = vmatprep.subr.mxu0 0.0
        %1969 = vmatpush1.msra.mxu0 0.0
        %1970 = vmatprep.subr.mxu0 0.0
        %1971 = vmatpush1.msra.mxu0 0.0
        %1972 = vmatprep.subr.mxu0 0.0
        %1973 = vmatpush1.msra.mxu0 0.0
        %1974 = vmatprep.subr.mxu0 0.0
        %1975 = vmatpush1.msra.mxu0 0.0
        %1976 = vmatprep.subr.mxu0 0.0
        %1977 = vmatpush1.msra.mxu0 0.0
        %1978 = vmatprep.subr.mxu0 0.0
        %1979 = vmatpush1.msra.mxu0 0.0
        %1980 = vmatprep.subr.mxu0 0.0
        %1981 = vmatpush1.msra.mxu0 0.0
        %1982 = vmatprep.subr.mxu0 0.0
        %1983 = vmatpush1.msra.mxu0 0.0
        %1984 = vmatprep.subr.mxu0 0.0
        %1985 = vmatpush1.msra.mxu0 0.0
        %1986 = vmatprep.subr.mxu0 0.0
        %1987 = vmatpush1.msra.mxu0 0.0
        %1988 = vmatprep.subr.mxu0 0.0
        %1989 = vmatpush1.msra.mxu0 0.0
        %1990 = vmatprep.subr.mxu0 0.0
        %1991 = vmatpush1.msra.mxu0 0.0
        %1992 = vmatprep.subr.mxu0 0.0
        %1993 = vmatpush1.msra.mxu0 0.0
        %1994 = vmatprep.subr.mxu0 0.0
        %1995 = vmatpush1.msra.mxu0 0.0
        %1996 = vmatprep.mubr.f32.mxu0 0.0
        %1997 = vmatmul.mubr.f32.gmra.mrb[0].mxu0 %v1927
        %v1998 = vpop.f32.mrb[0].mxu0
        %v1999 = vadd.f32 0.0, %v1998
        %v2000 = vpop.f32.mrb[0].mxu0
        %2001 = vmatprep.mubr.f32.mxu0 0.0
        %2002 = vmatmul.mubr.f32.gmra.mrb[0].mxu0 %v1930
        %v2003 = vpop.f32.mrb[0].mxu0
        %v2004 = vadd.f32 0.0, %v2003
        %v2005 = vpop.f32.mrb[0].mxu0
        %2006 = vmatprep.mubr.f32.mxu0 0.0
        %2007 = vmatmul.mubr.f32.gmra.mrb[0].mxu0 %v1845
        %v2008 = vpop.f32.mrb[0].mxu0
        %v2009 = vadd.f32 0.0, %v2008
        %v2010 = vpop.f32.mrb[0].mxu0
        %2011 = vdwg.mxu0
        %v2013 = vsel %vm787, %v1914, 0
        %v2016 = vsel %vm787, %v1999, 0
        %v2019 = vsel %vm787, %v2004, 0
        %v2022 = vsel %vm787, %v2009, 0
        %2024 = vmatprep.subr.mxu0 0.0
        %2025 = vmatpush1.xpose.msra.mxu0 %v2016
        %2026 = vmatprep.subr.mxu0 0.0
        %2027 = vmatpush1.xpose.msra.mxu0 %v2019
        %2028 = vmatprep.subr.mxu0 0.0
        %2029 = vmatpush1.xpose.msra.mxu0 %v2022
        %2030 = vmatprep.subr.mxu0 0.0
        %2031 = vmatpush1.xpose.msra.mxu0 0.0
        %2032 = vmatprep.subr.mxu0 0.0
        %2033 = vmatpush1.xpose.msra.mxu0 0.0
        %2034 = vmatprep.subr.mxu0 0.0
        %2035 = vmatpush1.xpose.msra.mxu0 0.0
        %2036 = vmatprep.subr.mxu0 0.0
        %2037 = vmatpush1.xpose.msra.mxu0 0.0
        %2038 = vmatprep.subr.mxu0 0.0
        %2039 = vmatpush1.xpose.msra.mxu0 0.0
        %2040 = vmatprep.subr.mxu0 0.0
        %2041 = vmatpush1.xpose.msra.mxu0 0.0
        %2042 = vmatprep.subr.mxu0 0.0
        %2043 = vmatpush1.xpose.msra.mxu0 0.0
        %2044 = vmatprep.subr.mxu0 0.0
        %2045 = vmatpush1.xpose.msra.mxu0 0.0
        %2046 = vmatprep.subr.mxu0 0.0
        %2047 = vmatpush1.xpose.msra.mxu0 0.0
        %2048 = vmatprep.subr.mxu0 0.0
        %2049 = vmatpush1.xpose.msra.mxu0 0.0
        %2050 = vmatprep.subr.mxu0 0.0
        %2051 = vmatpush1.xpose.msra.mxu0 0.0
        %2052 = vmatprep.subr.mxu0 0.0
        %2053 = vmatpush1.xpose.msra.mxu0 0.0
        %2054 = vmatprep.subr.mxu0 0.0
        %2055 = vmatpush1.xpose.msra.mxu0 0.0
        %2056 = vmatprep.subr.mxu0 0.0
        %2057 = vmatpush1.xpose.msra.mxu0 0.0
        %2058 = vmatprep.subr.mxu0 0.0
        %2059 = vmatpush1.xpose.msra.mxu0 0.0
        %2060 = vmatprep.subr.mxu0 0.0
        %2061 = vmatpush1.xpose.msra.mxu0 0.0
        %2062 = vmatprep.subr.mxu0 0.0
        %2063 = vmatpush1.xpose.msra.mxu0 0.0
        %2064 = vmatprep.subr.mxu0 0.0
        %2065 = vmatpush1.xpose.msra.mxu0 0.0
        %2066 = vmatprep.subr.mxu0 0.0
        %2067 = vmatpush1.xpose.msra.mxu0 0.0
        %2068 = vmatprep.subr.mxu0 0.0
        %2069 = vmatpush1.xpose.msra.mxu0 0.0
        %2070 = vmatprep.subr.mxu0 0.0
        %2071 = vmatpush1.xpose.msra.mxu0 0.0
        %2072 = vmatprep.subr.mxu0 0.0
        %2073 = vmatpush1.xpose.msra.mxu0 0.0
        %2074 = vmatprep.subr.mxu0 0.0
        %2075 = vmatpush1.xpose.msra.mxu0 0.0
        %2076 = vmatprep.subr.mxu0 0.0
        %2077 = vmatpush1.xpose.msra.mxu0 0.0
        %2078 = vmatprep.subr.mxu0 0.0
        %2079 = vmatpush1.xpose.msra.mxu0 0.0
        %2080 = vmatprep.subr.mxu0 0.0
        %2081 = vmatpush1.xpose.msra.mxu0 0.0
        %2082 = vmatprep.subr.mxu0 0.0
        %2083 = vmatpush1.xpose.msra.mxu0 0.0
        %2084 = vmatprep.subr.mxu0 0.0
        %2085 = vmatpush1.xpose.msra.mxu0 0.0
        %2086 = vmatprep.subr.mxu0 0.0
        %2087 = vmatpush1.xpose.msra.mxu0 0.0
        %2088 = vmatprep.mubr.f32.mxu0 0.0
        %2089 = vmatmul.mubr.f32.gmra.mrb[0].mxu0 %v2013
        %v2090 = vpop.f32.mrb[0].mxu0
        %v2091 = vadd.f32 0.0, %v2090
        %v2092 = vpop.f32.mrb[0].mxu0
        %2093 = vdwg.mxu0
        %v2094 = vsel %vm870, %v2091, -inf
        %2095 = vmax.xlane.f32.xlu0 %v2094
        %v2096 = vpop.xlane.xlu0 %2095
        %v2097 = vsub.f32 %v2091, %v2096
        %v2098 = vmul.f32 %v2097, 1.442695
        %v2099 = vpow.pop %v2098
        %v2100 = vsel %vm870, %v2099, 0.0
        %2101 = vadd.xlane.f32.xlu0 %v2100
        %v2102 = vpop.xlane.xlu0 %2101
        %v2103 = vrcp.pop %v2102
        %v2104 = vmul.f32 %v2099, %v2103
        %2105 = vrot.lane.b32.xlu0 %v1999, 64
        %v2106 = vpop.permute.xlu0 %2105
        %2107 = vrot.lane.b32.xlu0 %v2004, 64
        %v2108 = vpop.permute.xlu0 %2107
        %2109 = vrot.lane.b32.xlu0 %v2009, 64
        %v2110 = vpop.permute.xlu0 %2109
        %v2115 = vsel %vm870, %v2104, 0
        %2117 = vmatprep.subr.mxu0 0.0
        %2118 = vmatpush1.msra.mxu0 %v2106
        %2119 = vmatprep.subr.mxu0 0.0
        %2120 = vmatpush1.msra.mxu0 %v2108
        %2121 = vmatprep.subr.mxu0 0.0
        %2122 = vmatpush1.msra.mxu0 %v2110
        %2123 = vmatprep.subr.mxu0 0.0
        %2124 = vmatpush1.msra.mxu0 0.0
        %2125 = vmatprep.subr.mxu0 0.0
        %2126 = vmatpush1.msra.mxu0 0.0
        %2127 = vmatprep.subr.mxu0 0.0
        %2128 = vmatpush1.msra.mxu0 0.0
        %2129 = vmatprep.subr.mxu0 0.0
        %2130 = vmatpush1.msra.mxu0 0.0
        %2131 = vmatprep.subr.mxu0 0.0
        %2132 = vmatpush1.msra.mxu0 0.0
        %2133 = vmatprep.subr.mxu0 0.0
        %2134 = vmatpush1.msra.mxu0 0.0
        %2135 = vmatprep.subr.mxu0 0.0
        %2136 = vmatpush1.msra.mxu0 0.0
        %2137 = vmatprep.subr.mxu0 0.0
        %2138 = vmatpush1.msra.mxu0 0.0
        %2139 = vmatprep.subr.mxu0 0.0
        %2140 = vmatpush1.msra.mxu0 0.0
        %2141 = vmatprep.subr.mxu0 0.0
        %2142 = vmatpush1.msra.mxu0 0.0
        %2143 = vmatprep.subr.mxu0 0.0
        %2144 = vmatpush1.msra.mxu0 0.0
        %2145 = vmatprep.subr.mxu0 0.0
        %2146 = vmatpush1.msra.mxu0 0.0
        %2147 = vmatprep.subr.mxu0 0.0
        %2148 = vmatpush1.msra.mxu0 0.0
        %2149 = vmatprep.subr.mxu0 0.0
        %2150 = vmatpush1.msra.mxu0 0.0
        %2151 = vmatprep.subr.mxu0 0.0
        %2152 = vmatpush1.msra.mxu0 0.0
        %2153 = vmatprep.subr.mxu0 0.0
        %2154 = vmatpush1.msra.mxu0 0.0
        %2155 = vmatprep.subr.mxu0 0.0
        %2156 = vmatpush1.msra.mxu0 0.0
        %2157 = vmatprep.subr.mxu0 0.0
        %2158 = vmatpush1.msra.mxu0 0.0
        %2159 = vmatprep.subr.mxu0 0.0
        %2160 = vmatpush1.msra.mxu0 0.0
        %2161 = vmatprep.subr.mxu0 0.0
        %2162 = vmatpush1.msra.mxu0 0.0
        %2163 = vmatprep.subr.mxu0 0.0
        %2164 = vmatpush1.msra.mxu0 0.0
        %2165 = vmatprep.subr.mxu0 0.0
        %2166 = vmatpush1.msra.mxu0 0.0
        %2167 = vmatprep.subr.mxu0 0.0
        %2168 = vmatpush1.msra.mxu0 0.0
        %2169 = vmatprep.subr.mxu0 0.0
        %2170 = vmatpush1.msra.mxu0 0.0
        %2171 = vmatprep.subr.mxu0 0.0
        %2172 = vmatpush1.msra.mxu0 0.0
        %2173 = vmatprep.subr.mxu0 0.0
        %2174 = vmatpush1.msra.mxu0 0.0
        %2175 = vmatprep.subr.mxu0 0.0
        %2176 = vmatpush1.msra.mxu0 0.0
        %2177 = vmatprep.subr.mxu0 0.0
        %2178 = vmatpush1.msra.mxu0 0.0
        %2179 = vmatprep.subr.mxu0 0.0
        %2180 = vmatpush1.msra.mxu0 0.0
        %2181 = vmatprep.mubr.f32.mxu0 0.0
        %2182 = vmatmul.mubr.f32.gmra.mrb[0].mxu0 %v2115
        %v2183 = vpop.f32.mrb[0].mxu0
        %v2184 = vadd.f32 0.0, %v2183
        %v2185 = vpop.f32.mrb[0].mxu0
        %2186 = vdwg.mxu0
        %2187 = vrot.lane.b32.xlu0 %v1914, 112
        %v2188 = vpop.permute.xlu0 %2187
        %2189 = vrot.lane.b32.xlu0 %v1999, 112
        %v2190 = vpop.permute.xlu0 %2189
        %2191 = vrot.lane.b32.xlu0 %v2004, 112
        %v2192 = vpop.permute.xlu0 %2191
        %2193 = vrot.lane.b32.xlu0 %v2009, 112
        %v2194 = vpop.permute.xlu0 %2193
        %v2195 = vsel %vm787, %v2188, 0
        %v2197 = vsel %vm787, %v2190, 0
        %v2199 = vsel %vm787, %v2192, 0
        %v2201 = vsel %vm787, %v2194, 0
        %2203 = vmatprep.subr.mxu0 0.0
        %2204 = vmatpush1.xpose.msra.mxu0 %v2197
        %2205 = vmatprep.subr.mxu0 0.0
        %2206 = vmatpush1.xpose.msra.mxu0 %v2199
        %2207 = vmatprep.subr.mxu0 0.0
        %2208 = vmatpush1.xpose.msra.mxu0 %v2201
        %2209 = vmatprep.subr.mxu0 0.0
        %2210 = vmatpush1.xpose.msra.mxu0 0.0
        %2211 = vmatprep.subr.mxu0 0.0
        %2212 = vmatpush1.xpose.msra.mxu0 0.0
        %2213 = vmatprep.subr.mxu0 0.0
        %2214 = vmatpush1.xpose.msra.mxu0 0.0
        %2215 = vmatprep.subr.mxu0 0.0
        %2216 = vmatpush1.xpose.msra.mxu0 0.0
        %2217 = vmatprep.subr.mxu0 0.0
        %2218 = vmatpush1.xpose.msra.mxu0 0.0
        %2219 = vmatprep.subr.mxu0 0.0
        %2220 = vmatpush1.xpose.msra.mxu0 0.0
        %2221 = vmatprep.subr.mxu0 0.0
        %2222 = vmatpush1.xpose.msra.mxu0 0.0
        %2223 = vmatprep.subr.mxu0 0.0
        %2224 = vmatpush1.xpose.msra.mxu0 0.0
        %2225 = vmatprep.subr.mxu0 0.0
        %2226 = vmatpush1.xpose.msra.mxu0 0.0
        %2227 = vmatprep.subr.mxu0 0.0
        %2228 = vmatpush1.xpose.msra.mxu0 0.0
        %2229 = vmatprep.subr.mxu0 0.0
        %2230 = vmatpush1.xpose.msra.mxu0 0.0
        %2231 = vmatprep.subr.mxu0 0.0
        %2232 = vmatpush1.xpose.msra.mxu0 0.0
        %2233 = vmatprep.subr.mxu0 0.0
        %2234 = vmatpush1.xpose.msra.mxu0 0.0
        %2235 = vmatprep.subr.mxu0 0.0
        %2236 = vmatpush1.xpose.msra.mxu0 0.0
        %2237 = vmatprep.subr.mxu0 0.0
        %2238 = vmatpush1.xpose.msra.mxu0 0.0
        %2239 = vmatprep.subr.mxu0 0.0
        %2240 = vmatpush1.xpose.msra.mxu0 0.0
        %2241 = vmatprep.subr.mxu0 0.0
        %2242 = vmatpush1.xpose.msra.mxu0 0.0
        %2243 = vmatprep.subr.mxu0 0.0
        %2244 = vmatpush1.xpose.msra.mxu0 0.0
        %2245 = vmatprep.subr.mxu0 0.0
        %2246 = vmatpush1.xpose.msra.mxu0 0.0
        %2247 = vmatprep.subr.mxu0 0.0
        %2248 = vmatpush1.xpose.msra.mxu0 0.0
        %2249 = vmatprep.subr.mxu0 0.0
        %2250 = vmatpush1.xpose.msra.mxu0 0.0
        %2251 = vmatprep.subr.mxu0 0.0
        %2252 = vmatpush1.xpose.msra.mxu0 0.0
        %2253 = vmatprep.subr.mxu0 0.0
        %2254 = vmatpush1.xpose.msra.mxu0 0.0
        %2255 = vmatprep.subr.mxu0 0.0
        %2256 = vmatpush1.xpose.msra.mxu0 0.0
        %2257 = vmatprep.subr.mxu0 0.0
        %2258 = vmatpush1.xpose.msra.mxu0 0.0
        %2259 = vmatprep.subr.mxu0 0.0
        %2260 = vmatpush1.xpose.msra.mxu0 0.0
        %2261 = vmatprep.subr.mxu0 0.0
        %2262 = vmatpush1.xpose.msra.mxu0 0.0
        %2263 = vmatprep.subr.mxu0 0.0
        %2264 = vmatpush1.xpose.msra.mxu0 0.0
        %2265 = vmatprep.subr.mxu0 0.0
        %2266 = vmatpush1.xpose.msra.mxu0 0.0
        %2267 = vmatprep.mubr.f32.mxu0 0.0
        %2268 = vmatmul.mubr.f32.gmra.mrb[0].mxu0 %v2195
        %v2269 = vpop.f32.mrb[0].mxu0
        %v2270 = vadd.f32 0.0, %v2269
        %v2271 = vpop.f32.mrb[0].mxu0
        %2272 = vdwg.mxu0
        %v2273 = vsel %vm870, %v2270, -inf
        %2274 = vmax.xlane.f32.xlu0 %v2273
        %v2275 = vpop.xlane.xlu0 %2274
        %v2276 = vsub.f32 %v2270, %v2275
        %v2277 = vmul.f32 %v2276, 1.442695
        %v2278 = vpow.pop %v2277
        %v2279 = vsel %vm870, %v2278, 0.0
        %2280 = vadd.xlane.f32.xlu0 %v2279
        %v2281 = vpop.xlane.xlu0 %2280
        %v2282 = vrcp.pop %v2281
        %v2283 = vmul.f32 %v2278, %v2282
        %2284 = vrot.lane.b32.xlu0 %v1999, 48
        %v2285 = vpop.permute.xlu0 %2284
        %2286 = vrot.lane.b32.xlu0 %v2004, 48
        %v2287 = vpop.permute.xlu0 %2286
        %2288 = vrot.lane.b32.xlu0 %v2009, 48
        %v2289 = vpop.permute.xlu0 %2288
        %v2294 = vsel %vm870, %v2283, 0
        %2296 = vmatprep.subr.mxu0 0.0
        %2297 = vmatpush1.msra.mxu0 %v2285
        %2298 = vmatprep.subr.mxu0 0.0
        %2299 = vmatpush1.msra.mxu0 %v2287
        %2300 = vmatprep.subr.mxu0 0.0
        %2301 = vmatpush1.msra.mxu0 %v2289
        %2302 = vmatprep.subr.mxu0 0.0
        %2303 = vmatpush1.msra.mxu0 0.0
        %2304 = vmatprep.subr.mxu0 0.0
        %2305 = vmatpush1.msra.mxu0 0.0
        %2306 = vmatprep.subr.mxu0 0.0
        %2307 = vmatpush1.msra.mxu0 0.0
        %2308 = vmatprep.subr.mxu0 0.0
        %2309 = vmatpush1.msra.mxu0 0.0
        %2310 = vmatprep.subr.mxu0 0.0
        %2311 = vmatpush1.msra.mxu0 0.0
        %2312 = vmatprep.subr.mxu0 0.0
        %2313 = vmatpush1.msra.mxu0 0.0
        %2314 = vmatprep.subr.mxu0 0.0
        %2315 = vmatpush1.msra.mxu0 0.0
        %2316 = vmatprep.subr.mxu0 0.0
        %2317 = vmatpush1.msra.mxu0 0.0
        %2318 = vmatprep.subr.mxu0 0.0
        %2319 = vmatpush1.msra.mxu0 0.0
        %2320 = vmatprep.subr.mxu0 0.0
        %2321 = vmatpush1.msra.mxu0 0.0
        %2322 = vmatprep.subr.mxu0 0.0
        %2323 = vmatpush1.msra.mxu0 0.0
        %2324 = vmatprep.subr.mxu0 0.0
        %2325 = vmatpush1.msra.mxu0 0.0
        %2326 = vmatprep.subr.mxu0 0.0
        %2327 = vmatpush1.msra.mxu0 0.0
        %2328 = vmatprep.subr.mxu0 0.0
        %2329 = vmatpush1.msra.mxu0 0.0
        %2330 = vmatprep.subr.mxu0 0.0
        %2331 = vmatpush1.msra.mxu0 0.0
        %2332 = vmatprep.subr.mxu0 0.0
        %2333 = vmatpush1.msra.mxu0 0.0
        %2334 = vmatprep.subr.mxu0 0.0
        %2335 = vmatpush1.msra.mxu0 0.0
        %2336 = vmatprep.subr.mxu0 0.0
        %2337 = vmatpush1.msra.mxu0 0.0
        %2338 = vmatprep.subr.mxu0 0.0
        %2339 = vmatpush1.msra.mxu0 0.0
        %2340 = vmatprep.subr.mxu0 0.0
        %2341 = vmatpush1.msra.mxu0 0.0
        %2342 = vmatprep.subr.mxu0 0.0
        %2343 = vmatpush1.msra.mxu0 0.0
        %2344 = vmatprep.subr.mxu0 0.0
        %2345 = vmatpush1.msra.mxu0 0.0
        %2346 = vmatprep.subr.mxu0 0.0
        %2347 = vmatpush1.msra.mxu0 0.0
        %2348 = vmatprep.subr.mxu0 0.0
        %2349 = vmatpush1.msra.mxu0 0.0
        %2350 = vmatprep.subr.mxu0 0.0
        %2351 = vmatpush1.msra.mxu0 0.0
        %2352 = vmatprep.subr.mxu0 0.0
        %2353 = vmatpush1.msra.mxu0 0.0
        %2354 = vmatprep.subr.mxu0 0.0
        %2355 = vmatpush1.msra.mxu0 0.0
        %2356 = vmatprep.subr.mxu0 0.0
        %2357 = vmatpush1.msra.mxu0 0.0
        %2358 = vmatprep.subr.mxu0 0.0
        %2359 = vmatpush1.msra.mxu0 0.0
        %2360 = vmatprep.mubr.f32.mxu0 0.0
        %2361 = vmatmul.mubr.f32.gmra.mrb[0].mxu0 %v2294
        %v2362 = vpop.f32.mrb[0].mxu0
        %v2363 = vadd.f32 0.0, %v2362
        %v2364 = vpop.f32.mrb[0].mxu0
        %2365 = vdwg.mxu0
        %2366 = vrot.lane.b32.xlu0 %v1914, 96
        %v2367 = vpop.permute.xlu0 %2366
        %2368 = vrot.lane.b32.xlu0 %v1999, 96
        %v2369 = vpop.permute.xlu0 %2368
        %2370 = vrot.lane.b32.xlu0 %v2004, 96
        %v2371 = vpop.permute.xlu0 %2370
        %2372 = vrot.lane.b32.xlu0 %v2009, 96
        %v2373 = vpop.permute.xlu0 %2372
        %v2374 = vsel %vm787, %v2367, 0
        %v2376 = vsel %vm787, %v2369, 0
        %v2378 = vsel %vm787, %v2371, 0
        %v2380 = vsel %vm787, %v2373, 0
        %2382 = vmatprep.subr.mxu0 0.0
        %2383 = vmatpush1.xpose.msra.mxu0 %v2376
        %2384 = vmatprep.subr.mxu0 0.0
        %2385 = vmatpush1.xpose.msra.mxu0 %v2378
        %2386 = vmatprep.subr.mxu0 0.0
        %2387 = vmatpush1.xpose.msra.mxu0 %v2380
        %2388 = vmatprep.subr.mxu0 0.0
        %2389 = vmatpush1.xpose.msra.mxu0 0.0
        %2390 = vmatprep.subr.mxu0 0.0
        %2391 = vmatpush1.xpose.msra.mxu0 0.0
        %2392 = vmatprep.subr.mxu0 0.0
        %2393 = vmatpush1.xpose.msra.mxu0 0.0
        %2394 = vmatprep.subr.mxu0 0.0
        %2395 = vmatpush1.xpose.msra.mxu0 0.0
        %2396 = vmatprep.subr.mxu0 0.0
        %2397 = vmatpush1.xpose.msra.mxu0 0.0
        %2398 = vmatprep.subr.mxu0 0.0
        %2399 = vmatpush1.xpose.msra.mxu0 0.0
        %2400 = vmatprep.subr.mxu0 0.0
        %2401 = vmatpush1.xpose.msra.mxu0 0.0
        %2402 = vmatprep.subr.mxu0 0.0
        %2403 = vmatpush1.xpose.msra.mxu0 0.0
        %2404 = vmatprep.subr.mxu0 0.0
        %2405 = vmatpush1.xpose.msra.mxu0 0.0
        %2406 = vmatprep.subr.mxu0 0.0
        %2407 = vmatpush1.xpose.msra.mxu0 0.0
        %2408 = vmatprep.subr.mxu0 0.0
        %2409 = vmatpush1.xpose.msra.mxu0 0.0
        %2410 = vmatprep.subr.mxu0 0.0
        %2411 = vmatpush1.xpose.msra.mxu0 0.0
        %2412 = vmatprep.subr.mxu0 0.0
        %2413 = vmatpush1.xpose.msra.mxu0 0.0
        %2414 = vmatprep.subr.mxu0 0.0
        %2415 = vmatpush1.xpose.msra.mxu0 0.0
        %2416 = vmatprep.subr.mxu0 0.0
        %2417 = vmatpush1.xpose.msra.mxu0 0.0
        %2418 = vmatprep.subr.mxu0 0.0
        %2419 = vmatpush1.xpose.msra.mxu0 0.0
        %2420 = vmatprep.subr.mxu0 0.0
        %2421 = vmatpush1.xpose.msra.mxu0 0.0
        %2422 = vmatprep.subr.mxu0 0.0
        %2423 = vmatpush1.xpose.msra.mxu0 0.0
        %2424 = vmatprep.subr.mxu0 0.0
        %2425 = vmatpush1.xpose.msra.mxu0 0.0
        %2426 = vmatprep.subr.mxu0 0.0
        %2427 = vmatpush1.xpose.msra.mxu0 0.0
        %2428 = vmatprep.subr.mxu0 0.0
        %2429 = vmatpush1.xpose.msra.mxu0 0.0
        %2430 = vmatprep.subr.mxu0 0.0
        %2431 = vmatpush1.xpose.msra.mxu0 0.0
        %2432 = vmatprep.subr.mxu0 0.0
        %2433 = vmatpush1.xpose.msra.mxu0 0.0
        %2434 = vmatprep.subr.mxu0 0.0
        %2435 = vmatpush1.xpose.msra.mxu0 0.0
        %2436 = vmatprep.subr.mxu0 0.0
        %2437 = vmatpush1.xpose.msra.mxu0 0.0
        %2438 = vmatprep.subr.mxu0 0.0
        %2439 = vmatpush1.xpose.msra.mxu0 0.0
        %2440 = vmatprep.subr.mxu0 0.0
        %2441 = vmatpush1.xpose.msra.mxu0 0.0
        %2442 = vmatprep.subr.mxu0 0.0
        %2443 = vmatpush1.xpose.msra.mxu0 0.0
        %2444 = vmatprep.subr.mxu0 0.0
        %2445 = vmatpush1.xpose.msra.mxu0 0.0
        %2446 = vmatprep.mubr.f32.mxu0 0.0
        %2447 = vmatmul.mubr.f32.gmra.mrb[0].mxu0 %v2374
        %v2448 = vpop.f32.mrb[0].mxu0
        %v2449 = vadd.f32 0.0, %v2448
        %v2450 = vpop.f32.mrb[0].mxu0
        %2451 = vdwg.mxu0
        %v2452 = vsel %vm870, %v2449, -inf
        %2453 = vmax.xlane.f32.xlu0 %v2452
        %v2454 = vpop.xlane.xlu0 %2453
        %v2455 = vsub.f32 %v2449, %v2454
        %v2456 = vmul.f32 %v2455, 1.442695
        %v2457 = vpow.pop %v2456
        %v2458 = vsel %vm870, %v2457, 0.0
        %2459 = vadd.xlane.f32.xlu0 %v2458
        %v2460 = vpop.xlane.xlu0 %2459
        %v2461 = vrcp.pop %v2460
        %v2462 = vmul.f32 %v2457, %v2461
        %2463 = vrot.lane.b32.xlu0 %v1999, 32
        %v2464 = vpop.permute.xlu0 %2463
        %2465 = vrot.lane.b32.xlu0 %v2004, 32
        %v2466 = vpop.permute.xlu0 %2465
        %2467 = vrot.lane.b32.xlu0 %v2009, 32
        %v2468 = vpop.permute.xlu0 %2467
        %v2473 = vsel %vm870, %v2462, 0
        %2475 = vmatprep.subr.mxu0 0.0
        %2476 = vmatpush1.msra.mxu0 %v2464
        %2477 = vmatprep.subr.mxu0 0.0
        %2478 = vmatpush1.msra.mxu0 %v2466
        %2479 = vmatprep.subr.mxu0 0.0
        %2480 = vmatpush1.msra.mxu0 %v2468
        %2481 = vmatprep.subr.mxu0 0.0
        %2482 = vmatpush1.msra.mxu0 0.0
        %2483 = vmatprep.subr.mxu0 0.0
        %2484 = vmatpush1.msra.mxu0 0.0
        %2485 = vmatprep.subr.mxu0 0.0
        %2486 = vmatpush1.msra.mxu0 0.0
        %2487 = vmatprep.subr.mxu0 0.0
        %2488 = vmatpush1.msra.mxu0 0.0
        %2489 = vmatprep.subr.mxu0 0.0
        %2490 = vmatpush1.msra.mxu0 0.0
        %2491 = vmatprep.subr.mxu0 0.0
        %2492 = vmatpush1.msra.mxu0 0.0
        %2493 = vmatprep.subr.mxu0 0.0
        %2494 = vmatpush1.msra.mxu0 0.0
        %2495 = vmatprep.subr.mxu0 0.0
        %2496 = vmatpush1.msra.mxu0 0.0
        %2497 = vmatprep.subr.mxu0 0.0
        %2498 = vmatpush1.msra.mxu0 0.0
        %2499 = vmatprep.subr.mxu0 0.0
        %2500 = vmatpush1.msra.mxu0 0.0
        %2501 = vmatprep.subr.mxu0 0.0
        %2502 = vmatpush1.msra.mxu0 0.0
        %2503 = vmatprep.subr.mxu0 0.0
        %2504 = vmatpush1.msra.mxu0 0.0
        %2505 = vmatprep.subr.mxu0 0.0
        %2506 = vmatpush1.msra.mxu0 0.0
        %2507 = vmatprep.subr.mxu0 0.0
        %2508 = vmatpush1.msra.mxu0 0.0
        %2509 = vmatprep.subr.mxu0 0.0
        %2510 = vmatpush1.msra.mxu0 0.0
        %2511 = vmatprep.subr.mxu0 0.0
        %2512 = vmatpush1.msra.mxu0 0.0
        %2513 = vmatprep.subr.mxu0 0.0
        %2514 = vmatpush1.msra.mxu0 0.0
        %2515 = vmatprep.subr.mxu0 0.0
        %2516 = vmatpush1.msra.mxu0 0.0
        %2517 = vmatprep.subr.mxu0 0.0
        %2518 = vmatpush1.msra.mxu0 0.0
        %2519 = vmatprep.subr.mxu0 0.0
        %2520 = vmatpush1.msra.mxu0 0.0
        %2521 = vmatprep.subr.mxu0 0.0
        %2522 = vmatpush1.msra.mxu0 0.0
        %2523 = vmatprep.subr.mxu0 0.0
        %2524 = vmatpush1.msra.mxu0 0.0
        %2525 = vmatprep.subr.mxu0 0.0
        %2526 = vmatpush1.msra.mxu0 0.0
        %2527 = vmatprep.subr.mxu0 0.0
        %2528 = vmatpush1.msra.mxu0 0.0
        %2529 = vmatprep.subr.mxu0 0.0
        %2530 = vmatpush1.msra.mxu0 0.0
        %2531 = vmatprep.subr.mxu0 0.0
        %2532 = vmatpush1.msra.mxu0 0.0
        %2533 = vmatprep.subr.mxu0 0.0
        %2534 = vmatpush1.msra.mxu0 0.0
        %2535 = vmatprep.subr.mxu0 0.0
        %2536 = vmatpush1.msra.mxu0 0.0
        %2537 = vmatprep.subr.mxu0 0.0
        %2538 = vmatpush1.msra.mxu0 0.0
        %2539 = vmatprep.mubr.f32.mxu0 0.0
        %2540 = vmatmul.mubr.f32.gmra.mrb[0].mxu0 %v2473
        %v2541 = vpop.f32.mrb[0].mxu0
        %v2542 = vadd.f32 0.0, %v2541
        %v2543 = vpop.f32.mrb[0].mxu0
        %2544 = vdwg.mxu0
        %2545 = vrot.lane.b32.xlu0 %v1914, 80
        %v2546 = vpop.permute.xlu0 %2545
        %2547 = vrot.lane.b32.xlu0 %v1999, 80
        %v2548 = vpop.permute.xlu0 %2547
        %2549 = vrot.lane.b32.xlu0 %v2004, 80
        %v2550 = vpop.permute.xlu0 %2549
        %2551 = vrot.lane.b32.xlu0 %v2009, 80
        %v2552 = vpop.permute.xlu0 %2551
        %v2553 = vsel %vm787, %v2546, 0
        %v2555 = vsel %vm787, %v2548, 0
        %v2557 = vsel %vm787, %v2550, 0
        %v2559 = vsel %vm787, %v2552, 0
        %2561 = vmatprep.subr.mxu0 0.0
        %2562 = vmatpush1.xpose.msra.mxu0 %v2555
        %2563 = vmatprep.subr.mxu0 0.0
        %2564 = vmatpush1.xpose.msra.mxu0 %v2557
        %2565 = vmatprep.subr.mxu0 0.0
        %2566 = vmatpush1.xpose.msra.mxu0 %v2559
        %2567 = vmatprep.subr.mxu0 0.0
        %2568 = vmatpush1.xpose.msra.mxu0 0.0
        %2569 = vmatprep.subr.mxu0 0.0
        %2570 = vmatpush1.xpose.msra.mxu0 0.0
        %2571 = vmatprep.subr.mxu0 0.0
        %2572 = vmatpush1.xpose.msra.mxu0 0.0
        %2573 = vmatprep.subr.mxu0 0.0
        %2574 = vmatpush1.xpose.msra.mxu0 0.0
        %2575 = vmatprep.subr.mxu0 0.0
        %2576 = vmatpush1.xpose.msra.mxu0 0.0
        %2577 = vmatprep.subr.mxu0 0.0
        %2578 = vmatpush1.xpose.msra.mxu0 0.0
        %2579 = vmatprep.subr.mxu0 0.0
        %2580 = vmatpush1.xpose.msra.mxu0 0.0
        %2581 = vmatprep.subr.mxu0 0.0
        %2582 = vmatpush1.xpose.msra.mxu0 0.0
        %2583 = vmatprep.subr.mxu0 0.0
        %2584 = vmatpush1.xpose.msra.mxu0 0.0
        %2585 = vmatprep.subr.mxu0 0.0
        %2586 = vmatpush1.xpose.msra.mxu0 0.0
        %2587 = vmatprep.subr.mxu0 0.0
        %2588 = vmatpush1.xpose.msra.mxu0 0.0
        %2589 = vmatprep.subr.mxu0 0.0
        %2590 = vmatpush1.xpose.msra.mxu0 0.0
        %2591 = vmatprep.subr.mxu0 0.0
        %2592 = vmatpush1.xpose.msra.mxu0 0.0
        %2593 = vmatprep.subr.mxu0 0.0
        %2594 = vmatpush1.xpose.msra.mxu0 0.0
        %2595 = vmatprep.subr.mxu0 0.0
        %2596 = vmatpush1.xpose.msra.mxu0 0.0
        %2597 = vmatprep.subr.mxu0 0.0
        %2598 = vmatpush1.xpose.msra.mxu0 0.0
        %2599 = vmatprep.subr.mxu0 0.0
        %2600 = vmatpush1.xpose.msra.mxu0 0.0
        %2601 = vmatprep.subr.mxu0 0.0
        %2602 = vmatpush1.xpose.msra.mxu0 0.0
        %2603 = vmatprep.subr.mxu0 0.0
        %2604 = vmatpush1.xpose.msra.mxu0 0.0
        %2605 = vmatprep.subr.mxu0 0.0
        %2606 = vmatpush1.xpose.msra.mxu0 0.0
        %2607 = vmatprep.subr.mxu0 0.0
        %2608 = vmatpush1.xpose.msra.mxu0 0.0
        %2609 = vmatprep.subr.mxu0 0.0
        %2610 = vmatpush1.xpose.msra.mxu0 0.0
        %2611 = vmatprep.subr.mxu0 0.0
        %2612 = vmatpush1.xpose.msra.mxu0 0.0
        %2613 = vmatprep.subr.mxu0 0.0
        %2614 = vmatpush1.xpose.msra.mxu0 0.0
        %2615 = vmatprep.subr.mxu0 0.0
        %2616 = vmatpush1.xpose.msra.mxu0 0.0
        %2617 = vmatprep.subr.mxu0 0.0
        %2618 = vmatpush1.xpose.msra.mxu0 0.0
        %2619 = vmatprep.subr.mxu0 0.0
        %2620 = vmatpush1.xpose.msra.mxu0 0.0
        %2621 = vmatprep.subr.mxu0 0.0
        %2622 = vmatpush1.xpose.msra.mxu0 0.0
        %2623 = vmatprep.subr.mxu0 0.0
        %2624 = vmatpush1.xpose.msra.mxu0 0.0
        %2625 = vmatprep.mubr.f32.mxu0 0.0
        %2626 = vmatmul.mubr.f32.gmra.mrb[0].mxu0 %v2553
        %v2627 = vpop.f32.mrb[0].mxu0
        %v2628 = vadd.f32 0.0, %v2627
        %v2629 = vpop.f32.mrb[0].mxu0
        %2630 = vdwg.mxu0
        %v2631 = vsel %vm870, %v2628, -inf
        %2632 = vmax.xlane.f32.xlu0 %v2631
        %v2633 = vpop.xlane.xlu0 %2632
        %v2634 = vsub.f32 %v2628, %v2633
        %v2635 = vmul.f32 %v2634, 1.442695
        %v2636 = vpow.pop %v2635
        %v2637 = vsel %vm870, %v2636, 0.0
        %2638 = vadd.xlane.f32.xlu0 %v2637
        %v2639 = vpop.xlane.xlu0 %2638
        %v2640 = vrcp.pop %v2639
        %v2641 = vmul.f32 %v2636, %v2640
        %2642 = vrot.lane.b32.xlu0 %v1999, 16
        %v2643 = vpop.permute.xlu0 %2642
        %2644 = vrot.lane.b32.xlu0 %v2004, 16
        %v2645 = vpop.permute.xlu0 %2644
        %2646 = vrot.lane.b32.xlu0 %v2009, 16
        %v2647 = vpop.permute.xlu0 %2646
        %v2652 = vsel %vm870, %v2641, 0
        %2654 = vmatprep.subr.mxu0 0.0
        %2655 = vmatpush1.msra.mxu0 %v2643
        %2656 = vmatprep.subr.mxu0 0.0
        %2657 = vmatpush1.msra.mxu0 %v2645
        %2658 = vmatprep.subr.mxu0 0.0
        %2659 = vmatpush1.msra.mxu0 %v2647
        %2660 = vmatprep.subr.mxu0 0.0
        %2661 = vmatpush1.msra.mxu0 0.0
        %2662 = vmatprep.subr.mxu0 0.0
        %2663 = vmatpush1.msra.mxu0 0.0
        %2664 = vmatprep.subr.mxu0 0.0
        %2665 = vmatpush1.msra.mxu0 0.0
        %2666 = vmatprep.subr.mxu0 0.0
        %2667 = vmatpush1.msra.mxu0 0.0
        %2668 = vmatprep.subr.mxu0 0.0
        %2669 = vmatpush1.msra.mxu0 0.0
        %2670 = vmatprep.subr.mxu0 0.0
        %2671 = vmatpush1.msra.mxu0 0.0
        %2672 = vmatprep.subr.mxu0 0.0
        %2673 = vmatpush1.msra.mxu0 0.0
        %2674 = vmatprep.subr.mxu0 0.0
        %2675 = vmatpush1.msra.mxu0 0.0
        %2676 = vmatprep.subr.mxu0 0.0
        %2677 = vmatpush1.msra.mxu0 0.0
        %2678 = vmatprep.subr.mxu0 0.0
        %2679 = vmatpush1.msra.mxu0 0.0
        %2680 = vmatprep.subr.mxu0 0.0
        %2681 = vmatpush1.msra.mxu0 0.0
        %2682 = vmatprep.subr.mxu0 0.0
        %2683 = vmatpush1.msra.mxu0 0.0
        %2684 = vmatprep.subr.mxu0 0.0
        %2685 = vmatpush1.msra.mxu0 0.0
        %2686 = vmatprep.subr.mxu0 0.0
        %2687 = vmatpush1.msra.mxu0 0.0
        %2688 = vmatprep.subr.mxu0 0.0
        %2689 = vmatpush1.msra.mxu0 0.0
        %2690 = vmatprep.subr.mxu0 0.0
        %2691 = vmatpush1.msra.mxu0 0.0
        %2692 = vmatprep.subr.mxu0 0.0
        %2693 = vmatpush1.msra.mxu0 0.0
        %2694 = vmatprep.subr.mxu0 0.0
        %2695 = vmatpush1.msra.mxu0 0.0
        %2696 = vmatprep.subr.mxu0 0.0
        %2697 = vmatpush1.msra.mxu0 0.0
        %2698 = vmatprep.subr.mxu0 0.0
        %2699 = vmatpush1.msra.mxu0 0.0
        %2700 = vmatprep.subr.mxu0 0.0
        %2701 = vmatpush1.msra.mxu0 0.0
        %2702 = vmatprep.subr.mxu0 0.0
        %2703 = vmatpush1.msra.mxu0 0.0
        %2704 = vmatprep.subr.mxu0 0.0
        %2705 = vmatpush1.msra.mxu0 0.0
        %2706 = vmatprep.subr.mxu0 0.0
        %2707 = vmatpush1.msra.mxu0 0.0
        %2708 = vmatprep.subr.mxu0 0.0
        %2709 = vmatpush1.msra.mxu0 0.0
        %2710 = vmatprep.subr.mxu0 0.0
        %2711 = vmatpush1.msra.mxu0 0.0
        %2712 = vmatprep.subr.mxu0 0.0
        %2713 = vmatpush1.msra.mxu0 0.0
        %2714 = vmatprep.subr.mxu0 0.0
        %2715 = vmatpush1.msra.mxu0 0.0
        %2716 = vmatprep.subr.mxu0 0.0
        %2717 = vmatpush1.msra.mxu0 0.0
        %2718 = vmatprep.mubr.f32.mxu0 0.0
        %2719 = vmatmul.mubr.f32.gmra.mrb[0].mxu0 %v2652
        %v2720 = vpop.f32.mrb[0].mxu0
        %v2721 = vadd.f32 0.0, %v2720
        %v2722 = vpop.f32.mrb[0].mxu0
        %2723 = vdwg.mxu0
        %2725 = vrot.lane.b32.xlu0 %v2363, 16
        %v2726 = vpop.permute.xlu0 %2725
        %2729 = vrot.lane.b32.xlu0 %v2542, 32
        %v2730 = vpop.permute.xlu0 %2729
        %2733 = vrot.lane.b32.xlu0 %v2721, 48
        %v2734 = vpop.permute.xlu0 %2733
        %v2736 = vsel %vm787, %v2184, %v2726
        %v2737 = vsel %vm461, %v2736, %v2730
        %v2738 = vsel %vm1515, %v2737, %v2734
        %s2739 = scalar_lea.vmem %s6, 64
        %v2740 = vld [vmem:[%s2739] sm:$0xff]
        %v2741 = vld [vmem:[%s2739 + $0x8] sm:$0xff]
        %v2742 = vld [vmem:[%s2739 + $0x10] sm:$0xff]
        %v2743 = vld [vmem:[%s2739 + $0x18] sm:$0xff]
        %v2744 = vld [vmem:[%s2739 + $0x20] sm:$0xff]
        %v2745 = vld [vmem:[%s2739 + $0x28] sm:$0xff]
        %v2746 = vld [vmem:[%s2739 + $0x30] sm:$0xff]
        %v2747 = vld [vmem:[%s2739 + $0x38] sm:$0xff]
        %v2749 = vsel %vm549, %v2738, 0
        %2751 = vmatprep.subr.mxu0 0.0
        %2752 = vmatpush1.msra.mxu0 %v2740
        %2753 = vmatprep.subr.mxu0 0.0
        %2754 = vmatpush1.msra.mxu0 %v2741
        %2755 = vmatprep.subr.mxu0 0.0
        %2756 = vmatpush1.msra.mxu0 %v2742
        %2757 = vmatprep.subr.mxu0 0.0
        %2758 = vmatpush1.msra.mxu0 %v2743
        %2759 = vmatprep.subr.mxu0 0.0
        %2760 = vmatpush1.msra.mxu0 %v2744
        %2761 = vmatprep.subr.mxu0 0.0
        %2762 = vmatpush1.msra.mxu0 %v2745
        %2763 = vmatprep.subr.mxu0 0.0
        %2764 = vmatpush1.msra.mxu0 %v2746
        %2765 = vmatprep.subr.mxu0 0.0
        %2766 = vmatpush1.msra.mxu0 %v2747
        %2767 = vmatprep.subr.mxu0 0.0
        %2768 = vmatpush1.msra.mxu0 0.0
        %2769 = vmatprep.subr.mxu0 0.0
        %2770 = vmatpush1.msra.mxu0 0.0
        %2771 = vmatprep.subr.mxu0 0.0
        %2772 = vmatpush1.msra.mxu0 0.0
        %2773 = vmatprep.subr.mxu0 0.0
        %2774 = vmatpush1.msra.mxu0 0.0
        %2775 = vmatprep.subr.mxu0 0.0
        %2776 = vmatpush1.msra.mxu0 0.0
        %2777 = vmatprep.subr.mxu0 0.0
        %2778 = vmatpush1.msra.mxu0 0.0
        %2779 = vmatprep.subr.mxu0 0.0
        %2780 = vmatpush1.msra.mxu0 0.0
        %2781 = vmatprep.subr.mxu0 0.0
        %2782 = vmatpush1.msra.mxu0 0.0
        %2783 = vmatprep.subr.mxu0 0.0
        %2784 = vmatpush1.msra.mxu0 0.0
        %2785 = vmatprep.subr.mxu0 0.0
        %2786 = vmatpush1.msra.mxu0 0.0
        %2787 = vmatprep.subr.mxu0 0.0
        %2788 = vmatpush1.msra.mxu0 0.0
        %2789 = vmatprep.subr.mxu0 0.0
        %2790 = vmatpush1.msra.mxu0 0.0
        %2791 = vmatprep.subr.mxu0 0.0
        %2792 = vmatpush1.msra.mxu0 0.0
        %2793 = vmatprep.subr.mxu0 0.0
        %2794 = vmatpush1.msra.mxu0 0.0
        %2795 = vmatprep.subr.mxu0 0.0
        %2796 = vmatpush1.msra.mxu0 0.0
        %2797 = vmatprep.subr.mxu0 0.0
        %2798 = vmatpush1.msra.mxu0 0.0
        %2799 = vmatprep.subr.mxu0 0.0
        %2800 = vmatpush1.msra.mxu0 0.0
        %2801 = vmatprep.subr.mxu0 0.0
        %2802 = vmatpush1.msra.mxu0 0.0
        %2803 = vmatprep.subr.mxu0 0.0
        %2804 = vmatpush1.msra.mxu0 0.0
        %2805 = vmatprep.subr.mxu0 0.0
        %2806 = vmatpush1.msra.mxu0 0.0
        %2807 = vmatprep.subr.mxu0 0.0
        %2808 = vmatpush1.msra.mxu0 0.0
        %2809 = vmatprep.subr.mxu0 0.0
        %2810 = vmatpush1.msra.mxu0 0.0
        %2811 = vmatprep.subr.mxu0 0.0
        %2812 = vmatpush1.msra.mxu0 0.0
        %2813 = vmatprep.subr.mxu0 0.0
        %2814 = vmatpush1.msra.mxu0 0.0
        %2815 = vmatprep.mubr.f32.mxu0 0.0
        %2816 = vmatmul.mubr.f32.gmra.mrb[0].mxu0 %v2749
        %v2817 = vpop.f32.mrb[0].mxu0
        %v2818 = vadd.f32 %v1791, %v2817
        %v2819 = vpop.f32.mrb[0].mxu0
        %2820 = vdwg.mxu0
        %v2821 = vsel %vm549, %v2818, 0.0
        %2822 = vadd.xlane.f32.xlu0 %v2821
        %v2823 = vpop.xlane.xlu0 %2822
        %v2824 = vmul.f32 %v2823, %v556
        %v2825 = vsub.f32 %v2818, %v2824
        %v2826 = vmul.f32 %v2825, %v2825
        %v2827 = vsel %vm549, %v2826, 0.0
        %2828 = vadd.xlane.f32.xlu0 %v2827
        %v2829 = vpop.xlane.xlu0 %2828
        %v2830 = vmul.f32 %v2829, %v556
        %v2831 = vadd.f32 %v2830, 1e-05
        %v2832 = vrsqrt.pop %v2831
        %v2833 = vmul.f32 %v2825, %v2832
        %v2834 = vlaneseq
        %v2835 = vshrl.u32 %v2834, 7
        %v2836 = vsub.s32 0, %v2835
        %v2837 = vrot.slane %v1798, %v2836
        %v2838 = vmul.f32 %v2833, %v2837
        %v2839 = vlaneseq
        %v2840 = vshrl.u32 %v2839, 7
        %v2841 = vsub.s32 0, %v2840
        %v2842 = vrot.slane %v1799, %v2841
        %v2843 = vadd.f32 %v2838, %v2842
        %s2844 = scalar_lea.vmem [#allocation10], 64
        %v2845 = vld [vmem:[%s2844] sm:$0xff]
        %v2846 = vld [vmem:[%s2844 + $0x8] sm:$0xff]
        %v2847 = vld [vmem:[%s2844 + $0x10] sm:$0xff]
        %v2848 = vld [vmem:[%s2844 + $0x18] sm:$0xff]
        %v2849 = vld [vmem:[%s2844 + $0x20] sm:$0xff]
        %v2850 = vld [vmem:[%s2844 + $0x28] sm:$0xff]
        %v2851 = vld [vmem:[%s2844 + $0x30] sm:$0xff]
        %v2852 = vld [vmem:[%s2844 + $0x38] sm:$0xff]
        %v2854 = vsel %vm549, %v2843, 0
        %2856 = vmatprep.subr.mxu0 0.0
        %2857 = vmatpush1.msra.mxu0 %v2845
        %2858 = vmatprep.subr.mxu0 0.0
        %2859 = vmatpush1.msra.mxu0 %v2846
        %2860 = vmatprep.subr.mxu0 0.0
        %2861 = vmatpush1.msra.mxu0 %v2847
        %2862 = vmatprep.subr.mxu0 0.0
        %2863 = vmatpush1.msra.mxu0 %v2848
        %2864 = vmatprep.subr.mxu0 0.0
        %2865 = vmatpush1.msra.mxu0 %v2849
        %2866 = vmatprep.subr.mxu0 0.0
        %2867 = vmatpush1.msra.mxu0 %v2850
        %2868 = vmatprep.subr.mxu0 0.0
        %2869 = vmatpush1.msra.mxu0 %v2851
        %2870 = vmatprep.subr.mxu0 0.0
        %2871 = vmatpush1.msra.mxu0 %v2852
        %2872 = vmatprep.subr.mxu0 0.0
        %2873 = vmatpush1.msra.mxu0 0.0
        %2874 = vmatprep.subr.mxu0 0.0
        %2875 = vmatpush1.msra.mxu0 0.0
        %2876 = vmatprep.subr.mxu0 0.0
        %2877 = vmatpush1.msra.mxu0 0.0
        %2878 = vmatprep.subr.mxu0 0.0
        %2879 = vmatpush1.msra.mxu0 0.0
        %2880 = vmatprep.subr.mxu0 0.0
        %2881 = vmatpush1.msra.mxu0 0.0
        %2882 = vmatprep.subr.mxu0 0.0
        %2883 = vmatpush1.msra.mxu0 0.0
        %2884 = vmatprep.subr.mxu0 0.0
        %2885 = vmatpush1.msra.mxu0 0.0
        %2886 = vmatprep.subr.mxu0 0.0
        %2887 = vmatpush1.msra.mxu0 0.0
        %2888 = vmatprep.subr.mxu0 0.0
        %2889 = vmatpush1.msra.mxu0 0.0
        %2890 = vmatprep.subr.mxu0 0.0
        %2891 = vmatpush1.msra.mxu0 0.0
        %2892 = vmatprep.subr.mxu0 0.0
        %2893 = vmatpush1.msra.mxu0 0.0
        %2894 = vmatprep.subr.mxu0 0.0
        %2895 = vmatpush1.msra.mxu0 0.0
        %2896 = vmatprep.subr.mxu0 0.0
        %2897 = vmatpush1.msra.mxu0 0.0
        %2898 = vmatprep.subr.mxu0 0.0
        %2899 = vmatpush1.msra.mxu0 0.0
        %2900 = vmatprep.subr.mxu0 0.0
        %2901 = vmatpush1.msra.mxu0 0.0
        %2902 = vmatprep.subr.mxu0 0.0
        %2903 = vmatpush1.msra.mxu0 0.0
        %2904 = vmatprep.subr.mxu0 0.0
        %2905 = vmatpush1.msra.mxu0 0.0
        %2906 = vmatprep.subr.mxu0 0.0
        %2907 = vmatpush1.msra.mxu0 0.0
        %2908 = vmatprep.subr.mxu0 0.0
        %2909 = vmatpush1.msra.mxu0 0.0
        %2910 = vmatprep.subr.mxu0 0.0
        %2911 = vmatpush1.msra.mxu0 0.0
        %2912 = vmatprep.subr.mxu0 0.0
        %2913 = vmatpush1.msra.mxu0 0.0
        %2914 = vmatprep.subr.mxu0 0.0
        %2915 = vmatpush1.msra.mxu0 0.0
        %2916 = vmatprep.subr.mxu0 0.0
        %2917 = vmatpush1.msra.mxu0 0.0
        %2918 = vmatprep.subr.mxu0 0.0
        %2919 = vmatpush1.msra.mxu0 0.0
        %2920 = vmatprep.mubr.f32.mxu0 0.0
        %2921 = vmatmul.mubr.f32.gmra.mrb[0].mxu0 %v2854
        %v2922 = vpop.f32.mrb[0].mxu0
        %v2923 = vadd.f32 0.0, %v2922
        %v2924 = vpop.f32.mrb[0].mxu0
        %2925 = vdwg.mxu0
        %v2926 = vmul.f32 %v2923, 0.5
        %v2927 = vmul.f32 %v2923, %v1703
        %v2928 = verf.f32.pop %v2927
        %v2929 = vadd.f32 %v2928, 1.0
        %v2930 = vmul.f32 %v2926, %v2929
        %s2931 = scalar_lea.vmem %s8, 128
        %v2932 = vld [vmem:[%s2931] sm:$0xff]
        %v2933 = vld [vmem:[%s2931 + $0x8] sm:$0xff]
        %v2934 = vld [vmem:[%s2931 + $0x10] sm:$0xff]
        %v2935 = vld [vmem:[%s2931 + $0x18] sm:$0xff]
        %v2936 = vld [vmem:[%s2931 + $0x20] sm:$0xff]
        %v2937 = vld [vmem:[%s2931 + $0x28] sm:$0xff]
        %v2938 = vld [vmem:[%s2931 + $0x30] sm:$0xff]
        %v2939 = vld [vmem:[%s2931 + $0x38] sm:$0xff]
        %v2940 = vld [vmem:[%s2931 + $0x40] sm:$0xff]
        %v2941 = vld [vmem:[%s2931 + $0x48] sm:$0xff]
        %v2942 = vld [vmem:[%s2931 + $0x50] sm:$0xff]
        %v2943 = vld [vmem:[%s2931 + $0x58] sm:$0xff]
        %v2944 = vld [vmem:[%s2931 + $0x60] sm:$0xff]
        %v2945 = vld [vmem:[%s2931 + $0x68] sm:$0xff]
        %v2946 = vld [vmem:[%s2931 + $0x70] sm:$0xff]
        %v2947 = vld [vmem:[%s2931 + $0x78] sm:$0xff]
        %2948 = vmatprep.subr.mxu0 0.0
        %2949 = vmatpush1.msra.mxu0 %v2932
        %2950 = vmatprep.subr.mxu0 0.0
        %2951 = vmatpush1.msra.mxu0 %v2933
        %2952 = vmatprep.subr.mxu0 0.0
        %2953 = vmatpush1.msra.mxu0 %v2934
        %2954 = vmatprep.subr.mxu0 0.0
        %2955 = vmatpush1.msra.mxu0 %v2935
        %2956 = vmatprep.subr.mxu0 0.0
        %2957 = vmatpush1.msra.mxu0 %v2936
        %2958 = vmatprep.subr.mxu0 0.0
        %2959 = vmatpush1.msra.mxu0 %v2937
        %2960 = vmatprep.subr.mxu0 0.0
        %2961 = vmatpush1.msra.mxu0 %v2938
        %2962 = vmatprep.subr.mxu0 0.0
        %2963 = vmatpush1.msra.mxu0 %v2939
        %2964 = vmatprep.subr.mxu0 0.0
        %2965 = vmatpush1.msra.mxu0 %v2940
        %2966 = vmatprep.subr.mxu0 0.0
        %2967 = vmatpush1.msra.mxu0 %v2941
        %2968 = vmatprep.subr.mxu0 0.0
        %2969 = vmatpush1.msra.mxu0 %v2942
        %2970 = vmatprep.subr.mxu0 0.0
        %2971 = vmatpush1.msra.mxu0 %v2943
        %2972 = vmatprep.subr.mxu0 0.0
        %2973 = vmatpush1.msra.mxu0 %v2944
        %2974 = vmatprep.subr.mxu0 0.0
        %2975 = vmatpush1.msra.mxu0 %v2945
        %2976 = vmatprep.subr.mxu0 0.0
        %2977 = vmatpush1.msra.mxu0 %v2946
        %2978 = vmatprep.subr.mxu0 0.0
        %2979 = vmatpush1.msra.mxu0 %v2947
        %2980 = vmatprep.subr.mxu0 0.0
        %2981 = vmatpush1.msra.mxu0 0.0
        %2982 = vmatprep.subr.mxu0 0.0
        %2983 = vmatpush1.msra.mxu0 0.0
        %2984 = vmatprep.subr.mxu0 0.0
        %2985 = vmatpush1.msra.mxu0 0.0
        %2986 = vmatprep.subr.mxu0 0.0
        %2987 = vmatpush1.msra.mxu0 0.0
        %2988 = vmatprep.subr.mxu0 0.0
        %2989 = vmatpush1.msra.mxu0 0.0
        %2990 = vmatprep.subr.mxu0 0.0
        %2991 = vmatpush1.msra.mxu0 0.0
        %2992 = vmatprep.subr.mxu0 0.0
        %2993 = vmatpush1.msra.mxu0 0.0
        %2994 = vmatprep.subr.mxu0 0.0
        %2995 = vmatpush1.msra.mxu0 0.0
        %2996 = vmatprep.subr.mxu0 0.0
        %2997 = vmatpush1.msra.mxu0 0.0
        %2998 = vmatprep.subr.mxu0 0.0
        %2999 = vmatpush1.msra.mxu0 0.0
        %3000 = vmatprep.subr.mxu0 0.0
        %3001 = vmatpush1.msra.mxu0 0.0
        %3002 = vmatprep.subr.mxu0 0.0
        %3003 = vmatpush1.msra.mxu0 0.0
        %3004 = vmatprep.subr.mxu0 0.0
        %3005 = vmatpush1.msra.mxu0 0.0
        %3006 = vmatprep.subr.mxu0 0.0
        %3007 = vmatpush1.msra.mxu0 0.0
        %3008 = vmatprep.subr.mxu0 0.0
        %3009 = vmatpush1.msra.mxu0 0.0
        %3010 = vmatprep.subr.mxu0 0.0
        %3011 = vmatpush1.msra.mxu0 0.0
        %3012 = vmatprep.mubr.f32.mxu0 0.0
        %3013 = vmatmul.mubr.f32.gmra.mrb[0].mxu0 %v2930
        %v3014 = vpop.f32.mrb[0].mxu0
        %v3015 = vadd.f32 %v2818, %v3014
        %v3016 = vpop.f32.mrb[0].mxu0
        %3017 = vdwg.mxu0
        %v3018 = vld [vmem:[#allocation8 + $0x1] sm:$0x1]
        %v3019 = vld [vmem:[#allocation8 + $0x2] sm:$0x1]
        %v3020 = vld [vmem:[#allocation8 + $0x3] sm:$0x1]
        %v3021 = vld [vmem:[#allocation11] sm:$0xff]
        %v3022 = vld [vmem:[#allocation11 + $0x8] sm:$0xff]
        %v3023 = vld [vmem:[#allocation11 + $0x10] sm:$0xff]
        %v3024 = vld [vmem:[#allocation11 + $0x18] sm:$0xff]
        %v3025 = vld [vmem:[#allocation11 + $0x20] sm:$0xff]
        %v3026 = vld [vmem:[#allocation11 + $0x28] sm:$0xff]
        %v3027 = vld [vmem:[#allocation11 + $0x30] sm:$0xff]
        %v3028 = vld [vmem:[#allocation11 + $0x38] sm:$0xff]
        %v3029 = vlaneseq
        %v3030 = vshrl.u32 %v3029, 7
        %v3031 = vsub.s32 0, %v3030
        %v3032 = vrot.slane %v3018, %v3031
        %v3034 = vsel %vm549, %v3015, 0
        %3036 = vmatprep.subr.mxu0 0.0
        %3037 = vmatpush1.msra.mxu0 %v3021
        %3038 = vmatprep.subr.mxu0 0.0
        %3039 = vmatpush1.msra.mxu0 %v3022
        %3040 = vmatprep.subr.mxu0 0.0
        %3041 = vmatpush1.msra.mxu0 %v3023
        %3042 = vmatprep.subr.mxu0 0.0
        %3043 = vmatpush1.msra.mxu0 %v3024
        %3044 = vmatprep.subr.mxu0 0.0
        %3045 = vmatpush1.msra.mxu0 %v3025
        %3046 = vmatprep.subr.mxu0 0.0
        %3047 = vmatpush1.msra.mxu0 %v3026
        %3048 = vmatprep.subr.mxu0 0.0
        %3049 = vmatpush1.msra.mxu0 %v3027
        %3050 = vmatprep.subr.mxu0 0.0
        %3051 = vmatpush1.msra.mxu0 %v3028
        %3052 = vmatprep.subr.mxu0 0.0
        %3053 = vmatpush1.msra.mxu0 0.0
        %3054 = vmatprep.subr.mxu0 0.0
        %3055 = vmatpush1.msra.mxu0 0.0
        %3056 = vmatprep.subr.mxu0 0.0
        %3057 = vmatpush1.msra.mxu0 0.0
        %3058 = vmatprep.subr.mxu0 0.0
        %3059 = vmatpush1.msra.mxu0 0.0
        %3060 = vmatprep.subr.mxu0 0.0
        %3061 = vmatpush1.msra.mxu0 0.0
        %3062 = vmatprep.subr.mxu0 0.0
        %3063 = vmatpush1.msra.mxu0 0.0
        %3064 = vmatprep.subr.mxu0 0.0
        %3065 = vmatpush1.msra.mxu0 0.0
        %3066 = vmatprep.subr.mxu0 0.0
        %3067 = vmatpush1.msra.mxu0 0.0
        %3068 = vmatprep.subr.mxu0 0.0
        %3069 = vmatpush1.msra.mxu0 0.0
        %3070 = vmatprep.subr.mxu0 0.0
        %3071 = vmatpush1.msra.mxu0 0.0
        %3072 = vmatprep.subr.mxu0 0.0
        %3073 = vmatpush1.msra.mxu0 0.0
        %3074 = vmatprep.subr.mxu0 0.0
        %3075 = vmatpush1.msra.mxu0 0.0
        %3076 = vmatprep.subr.mxu0 0.0
        %3077 = vmatpush1.msra.mxu0 0.0
        %3078 = vmatprep.subr.mxu0 0.0
        %3079 = vmatpush1.msra.mxu0 0.0
        %3080 = vmatprep.subr.mxu0 0.0
        %3081 = vmatpush1.msra.mxu0 0.0
        %3082 = vmatprep.subr.mxu0 0.0
        %3083 = vmatpush1.msra.mxu0 0.0
        %3084 = vmatprep.subr.mxu0 0.0
        %3085 = vmatpush1.msra.mxu0 0.0
        %3086 = vmatprep.subr.mxu0 0.0
        %3087 = vmatpush1.msra.mxu0 0.0
        %3088 = vmatprep.subr.mxu0 0.0
        %3089 = vmatpush1.msra.mxu0 0.0
        %3090 = vmatprep.subr.mxu0 0.0
        %3091 = vmatpush1.msra.mxu0 0.0
        %3092 = vmatprep.subr.mxu0 0.0
        %3093 = vmatpush1.msra.mxu0 0.0
        %3094 = vmatprep.subr.mxu0 0.0
        %3095 = vmatpush1.msra.mxu0 0.0
        %3096 = vmatprep.subr.mxu0 0.0
        %3097 = vmatpush1.msra.mxu0 0.0
        %3098 = vmatprep.subr.mxu0 0.0
        %3099 = vmatpush1.msra.mxu0 0.0
        %3100 = vmatprep.mubr.f32.mxu0 0.0
        %3101 = vmatmul.mubr.f32.gmra.mrb[0].mxu0 %v3034
        %v3102 = vpop.f32.mrb[0].mxu0
        %v3103 = vadd.f32 %v3032, %v3102
        %v3104 = vpop.f32.mrb[0].mxu0
        %3105 = vdwg.mxu0
        %v3106 = vsel %vm549, %v3103, 0.0
        %3107 = vadd.xlane.f32.xlu0 %v3106
        %v3108 = vpop.xlane.xlu0 %3107
        %v3109 = vmul.f32 %v3108, %v556
        %v3110 = vsub.f32 %v3103, %v3109
        %v3111 = vmul.f32 %v3110, %v3110
        %v3112 = vsel %vm549, %v3111, 0.0
        %3113 = vadd.xlane.f32.xlu0 %v3112
        %v3114 = vpop.xlane.xlu0 %3113
        %v3115 = vmul.f32 %v3114, %v556
        %v3116 = vadd.f32 %v3115, 1e-05
        %v3117 = vrsqrt.pop %v3116
        %v3118 = vmul.f32 %v3110, %v3117
        %v3119 = vlaneseq
        %v3120 = vshrl.u32 %v3119, 7
        %v3121 = vsub.s32 0, %v3120
        %v3122 = vrot.slane %v3019, %v3121
        %v3123 = vmul.f32 %v3118, %v3122
        %v3124 = vlaneseq
        %v3125 = vshrl.u32 %v3124, 7
        %v3126 = vsub.s32 0, %v3125
        %v3127 = vrot.slane %v3020, %v3126
        %v3128 = vadd.f32 %v3123, %v3127
        %3129 = vst.msk [vmem:[%s448] sm:$0xff] %vm549, %v3128
        %s3130 = sand.u32 %s253, 1
        %s3131 = scalar_lea.sflag [#allocation4], %s3130
        %s3132 = sand.u32 %s253, 1
        %s3133 = smul.addr %s3132, 8
        %s3134 = scalar_lea.vmem [#allocation13], %s3133
        // Predicated region
        $region85: #{tpu_custom_call.1} parent=59 // pred_check
          %p3135 = pneg %p263
        $region86: #{tpu_custom_call.1} parent=59 // pred_check_branch
          %3137 = sbr.rel (%p3135) target = $region88
        $region87: #{tpu_custom_call.1} parent=59 // pred_region
          %s3139 = ssub.s32 128, 128
          %3140 = vsyncadd %s3131, %s3139
          %s3141 = smul.addr %s30, 128
          %s3142 = scalar_lea.hbm %s10, %s3141
          %s3144 = sshll.u32 %s3134, 4
          %s3145 = int_to_ptr.vmem [resolvable:$true] %s3144
          %3147 = dma.vmem_to_hbm [thread:$0]  %s3145, 128, %s3142, %s3131
        $region88: #{tpu_custom_call.1} parent=59 // pred_fallthru
          _
      $region60: #{tpu_custom_call.1} parent=5 // pred_fallthru
        _
      %p3148 = scmp.le.s32.totalorder 2, %s25
      // Predicated region
      $region89: #{tpu_custom_call.1} parent=5 // pred_check
        %p3149 = pneg %p3148
      $region90: #{tpu_custom_call.1} parent=5 // pred_check_branch
        %3151 = sbr.rel (%p3149) target = $region92
      $region91: #{tpu_custom_call.1} parent=5 // pred_region
        %s3152 = ssub.s32 %s25, 2
        // Predicated region
        $region93: #{tpu_custom_call.1} parent=91 // pred_check
          %p3153 = pneg %p269
        $region94: #{tpu_custom_call.1} parent=91 // pred_check_branch
          %3155 = sbr.rel (%p3153) target = $region96
        $region95: #{tpu_custom_call.1} parent=91 // pred_region
          %s3156 = sand.u32 %s254, 1
          %s3157 = scalar_lea.sflag [#allocation4], %s3156
          %s3158 = sand.u32 %s254, 1
          %s3159 = smul.addr %s3158, 8
          %s3160 = scalar_lea.vmem [#allocation13], %s3159
          %3161 = dma.done %s3157, 128
        $region96: #{tpu_custom_call.1} parent=91 // pred_fallthru
          _
      $region92: #{tpu_custom_call.1} parent=5 // pred_fallthru
        _
    $region6: #{tpu_custom_call.1} parent=1 // loop_footer
      %s29 = sadd.s32 1, %s25
    $region7: #{tpu_custom_call.1} parent=1 // loop_footer_branch
      %24 = sbr.rel target = $region3
    $region8: #{tpu_custom_call.1} parent=1 // loop_exit
      _
    %3162 = vsyncpa [#allocation3], 1
    %s3163 = scalar_lea.sflag [#allocation3], 1
    %3164 = vsyncpa %s3163, 1
    %3165 = vsyncpa [#allocation6], 1
    %3166 = vsyncpa [#allocation9], 1
    %3167 = vsyncpa [#allocation12], 1
    %3168 = vsyncpa [#allocation4], 1
    %s3169 = scalar_lea.sflag [#allocation4], 1
    %3170 = vsyncpa %s3169, 1

</llo_original>
